<compile_context>
chip_gen: v7x
topology: tpu7x:2x2x1
jax: 0.10.0
libtpu: 0.0.40
codegen_flags: <defaults>
</compile_context>

<pallas_src>
import functools

import numpy as np
import jax
import jax.numpy as jnp
from jax import lax
from jax.experimental import pallas as pl
from jax.experimental.pallas import tpu as pltpu

_ROW_TILE = 256   # rows (N*H*W) per grid step -> keeps the MXU M dimension full
_LANE = 128


def _round_up(x, m):
    return ((x + m - 1) // m) * m


# ------------------------------ Pallas kernels ------------------------------

def _mm_epilogue_kernel(x_ref, w_ref, scale_ref, shift_ref, o_ref, *, epilogue):
    """o = act((x @ w) * scale + shift)  -- conv-as-matmul with folded BN/bias."""
    y = jnp.dot(x_ref[...], w_ref[...], preferred_element_type=jnp.float32)
    y = y * scale_ref[...] + shift_ref[...]
    if epilogue == "relu":
        y = jnp.maximum(y, 0.0)
    elif epilogue == "sigmoid":
        y = jax.nn.sigmoid(y)
    o_ref[...] = y.astype(o_ref.dtype)


def _pred_aug_kernel(p_ref, w_ref, b_ref, x_ref, stat_ref, aug_ref):
    """Fused conv_pred (Cout=1, +bias, sigmoid) and fea_aug = fea * (1 - stat).

    The single-output-channel conv is a lane reduction (VPU multiply + XLU sum),
    avoiding a ragged N=1 MXU matmul and an extra pass over fea.
    """
    y = jnp.sum(p_ref[...] * w_ref[...], axis=-1, keepdims=True) + b_ref[...]
    s = jax.nn.sigmoid(y)                                   # (TM, 1)
    stat_ref[...] = s.astype(stat_ref.dtype)
    aug_ref[...] = (x_ref[...] * (1.0 - s)).astype(aug_ref.dtype)


# --------------------------- pallas_call wrappers ----------------------------

def _row_tile(r):
    return _ROW_TILE if r >= _ROW_TILE else _round_up(r, 8)


def _matmul_epilogue(x, w, scale, shift, epilogue):
    """x: (R, K) f32, w: (K, Cout), scale/shift: (Cout,). Returns (R, Cout)."""
    r, k = x.shape
    cout = w.shape[1]
    tm = _row_tile(r)
    r_pad = _round_up(r, tm)
    if r_pad != r:
        x = jnp.pad(x, ((0, r_pad - r), (0, 0)))

    # Lane-dense output: pad large, ragged channel counts up to a 128 multiple.
    c_pad = cout if cout <= _LANE else _round_up(cout, _LANE)
    if c_pad != cout:
        w = jnp.pad(w, ((0, 0), (0, c_pad - cout)))
        scale = jnp.pad(scale, (0, c_pad - cout))
        shift = jnp.pad(shift, (0, c_pad - cout))
    scale2 = scale.reshape(1, c_pad).astype(jnp.float32)
    shift2 = shift.reshape(1, c_pad).astype(jnp.float32)

    out = pl.pallas_call(
        functools.partial(_mm_epilogue_kernel, epilogue=epilogue),
        out_shape=jax.ShapeDtypeStruct((r_pad, c_pad), x.dtype),
        grid_spec=pltpu.PrefetchScalarGridSpec(
            num_scalar_prefetch=0,
            grid=(r_pad // tm,),
            in_specs=[
                pl.BlockSpec((tm, k), lambda i: (i, 0)),
                pl.BlockSpec((k, c_pad), lambda i: (0, 0)),
                pl.BlockSpec((1, c_pad), lambda i: (0, 0)),
                pl.BlockSpec((1, c_pad), lambda i: (0, 0)),
            ],
            out_specs=pl.BlockSpec((tm, c_pad), lambda i: (i, 0)),
        ),
        compiler_params=pltpu.CompilerParams(
            dimension_semantics=("parallel",)),
    )(x, w, scale2, shift2)
    return out[:r, :cout]


def _pred_and_aug(p, w_row, bias, x):
    """p: (R, K) im2col patches, w_row: (1, K), bias: (1,), x: (R, Cin).

    Returns (stat (R, 1), aug (R, Cin)) with stat = sigmoid(conv_pred) and
    aug = x * (1 - stat)."""
    r, k = p.shape
    cin = x.shape[1]
    tm = _row_tile(r)
    r_pad = _round_up(r, tm)
    if r_pad != r:
        p = jnp.pad(p, ((0, r_pad - r), (0, 0)))
        x = jnp.pad(x, ((0, r_pad - r), (0, 0)))
    w2 = w_row.reshape(1, k).astype(jnp.float32)
    b2 = bias.reshape(1, 1).astype(jnp.float32)

    stat, aug = pl.pallas_call(
        _pred_aug_kernel,
        out_shape=(jax.ShapeDtypeStruct((r_pad, 1), x.dtype),
                   jax.ShapeDtypeStruct((r_pad, cin), x.dtype)),
        grid_spec=pltpu.PrefetchScalarGridSpec(
            num_scalar_prefetch=0,
            grid=(r_pad // tm,),
            in_specs=[
                pl.BlockSpec((tm, k), lambda i: (i, 0)),
                pl.BlockSpec((1, k), lambda i: (0, 0)),
                pl.BlockSpec((1, 1), lambda i: (0, 0)),
                pl.BlockSpec((tm, cin), lambda i: (i, 0)),
            ],
            out_specs=(pl.BlockSpec((tm, 1), lambda i: (i, 0)),
                       pl.BlockSpec((tm, cin), lambda i: (i, 0))),
        ),
        compiler_params=pltpu.CompilerParams(
            dimension_semantics=("parallel",)),
    )(p, w2, b2, x)
    return stat[:r], aug[:r]


# ------------------------- layout / weight utilities -------------------------

def _w1x1_to_mat(w):
    # (Cout, Cin, 1, 1) -> (Cin, Cout)
    return jnp.transpose(w[:, :, 0, 0], (1, 0))


def _w3x3_to_mat(w):
    # (Cout, Cin, 3, 3) -> (9*Cin, Cout); row order (dy, dx, cin) matches im2col.
    cout = w.shape[0]
    return jnp.transpose(w, (2, 3, 1, 0)).reshape(-1, cout)


def _im2col_3x3(x):
    # x: (N, H, W, C) -> (N, H, W, 9*C); 3x3 window, zero pad 1, stride 1.
    n, h, w, c = x.shape
    xp = jnp.pad(x, ((0, 0), (1, 1), (1, 1), (0, 0)))
    cols = [xp[:, dy:dy + h, dx:dx + w, :] for dy in range(3) for dx in range(3)]
    return jnp.concatenate(cols, axis=-1)


def _fold_bn(gamma, beta, mean, var, eps=1e-5):
    scale = gamma / jnp.sqrt(var + eps)
    return scale, beta - mean * scale


# -------------------------------- forward pass -------------------------------

def statistic_attention_forward(fea, params):
    """fea: (N, Cin, H, W) f32 NCHW.  Returns (fea_res (N, Cout, H, W),
    fea_stat (N, 1, H, W)) matching StatisticAttention.forward (eval-mode BN)."""
    n, cin, h, w = fea.shape
    r = n * h * w
    x_rows = jnp.transpose(fea, (0, 2, 3, 1)).reshape(r, cin)       # NHWC rows

    # conv_1: 1x1 conv -> BN -> ReLU
    s1, b1 = _fold_bn(*params["bn1"])
    att = _matmul_epilogue(x_rows, _w1x1_to_mat(params["w1"]), s1, b1, "relu")
    cmid = att.shape[1]

    # conv_2: 3x3 conv -> BN -> ReLU
    s2, b2 = _fold_bn(*params["bn2"])
    p2 = _im2col_3x3(att.reshape(n, h, w, cmid)).reshape(r, 9 * cmid)
    cls = _matmul_epilogue(p2, _w3x3_to_mat(params["w2"]), s2, b2, "relu")
    ncls = cls.shape[1]

    # conv_pred: 3x3 conv (+bias) -> Sigmoid, fused with fea_aug = fea*(1-stat)
    p3 = _im2col_3x3(cls.reshape(n, h, w, ncls)).reshape(r, 9 * ncls)
    w_pred_row = jnp.transpose(_w3x3_to_mat(params["w_pred"]), (1, 0))   # (1, 9*ncls)
    stat, aug = _pred_and_aug(p3, w_pred_row, params["b_pred"], x_rows)

    # conv_fuse on cat([fea, fea_aug], channel): 3x3 conv -> BN -> ReLU
    fuse_rows = jnp.concatenate([x_rows, aug], axis=-1)                  # (R, 2*Cin)
    p4 = _im2col_3x3(fuse_rows.reshape(n, h, w, 2 * cin)).reshape(r, 18 * cin)
    s4, b4 = _fold_bn(*params["bn_fuse"])
    res = _matmul_epilogue(p4, _w3x3_to_mat(params["w_fuse"]), s4, b4, "relu")
    cout = res.shape[1]

    fea_res = jnp.transpose(res.reshape(n, h, w, cout), (0, 3, 1, 2))
    fea_stat = jnp.transpose(stat.reshape(n, h, w, 1), (0, 3, 1, 2))
    return fea_res, fea_stat


# ------------------------------ pure-XLA reference ----------------------------

def _conv_ref(x, w, pad):
    return lax.conv_general_dilated(
        x, w, window_strides=(1, 1), padding=[(pad, pad), (pad, pad)],
        dimension_numbers=("NCHW", "OIHW", "NCHW"),
        precision=lax.Precision.HIGHEST)


def _bn_ref(x, p, eps=1e-5):
    g, b, m, v = p
    return (x - m[None, :, None, None]) * (
        g[None, :, None, None] / jnp.sqrt(v[None, :, None, None] + eps)
    ) + b[None, :, None, None]


def _reference_forward(fea, params):
    fea_att = jax.nn.relu(_bn_ref(_conv_ref(fea, params["w1"], 0), params["bn1"]))
    fea_cls = jax.nn.relu(_bn_ref(_conv_ref(fea_att, params["w2"], 1), params["bn2"]))
    fea_stat = jax.nn.sigmoid(_conv_ref(fea_cls, params["w_pred"], 1)
                              + params["b_pred"][None, :, None, None])
    fea_aug = fea * (1.0 - fea_stat)
    fea_fuse = jnp.concatenate([fea, fea_aug], axis=1)
    fea_res = jax.nn.relu(_bn_ref(_conv_ref(fea_fuse, params["w_fuse"], 1),
                                  params["bn_fuse"]))
    return fea_res, fea_stat


# ---------------------------------- params -----------------------------------

def _init_params(key, fea_in, fea_out, num_classes):
    cmid = fea_in // 2
    ks = jax.random.split(key, 17)

    def normal(k, shape, s=0.2):
        return (s * jax.random.normal(k, shape)).astype(jnp.float32)

    def bn(k0, k1, k2, k3, c):
        gamma = 1.0 + normal(k0, (c,), 0.1)
        beta = normal(k1, (c,), 0.1)
        mean = normal(k2, (c,), 0.1)
        var = 0.5 + jax.random.uniform(k3, (c,), dtype=jnp.float32)
        return (gamma, beta, mean, var)

    return {
        "w1": normal(ks[0], (cmid, fea_in, 1, 1)),
        "bn1": bn(ks[1], ks[2], ks[3], ks[4], cmid),
        "w2": normal(ks[5], (num_classes, cmid, 3, 3)),
        "bn2": bn(ks[6], ks[7], ks[8], ks[9], num_classes),
        "w_pred": normal(ks[10], (1, num_classes, 3, 3)),
        "b_pred": normal(ks[11], (1,), 0.1),
        "w_fuse": normal(ks[12], (fea_out, 2 * fea_in, 3, 3)),
        "bn_fuse": bn(ks[13], ks[14], ks[15], ks[16], fea_out),
    }


if __name__ == "__main__":
    key = jax.random.PRNGKey(0)
    k_in, k_par = jax.random.split(key)

    N, FEA_IN, H, W = 2, 8, 16, 16
    FEA_OUT, NUM_CLASSES = 8, 4

    fea = jax.random.normal(k_in, (N, FEA_IN, H, W), dtype=jnp.float32)
    params = _init_params(k_par, FEA_IN, FEA_OUT, NUM_CLASSES)

    fwd = jax.jit(statistic_attention_forward)
    fea_res, fea_stat = fwd(fea, params)
    fea_res, fea_stat = jax.block_until_ready((fea_res, fea_stat))

    assert fea_res.shape == (N, FEA_OUT, H, W), fea_res.shape
    assert fea_stat.shape == (N, 1, H, W), fea_stat.shape

    ref_res, ref_stat = _reference_forward(fea, params)
    np.testing.assert_allclose(np.asarray(fea_stat), np.asarray(ref_stat),
                               rtol=1e-4, atol=1e-4)
    np.testing.assert_allclose(np.asarray(fea_res), np.asarray(ref_res),
                               rtol=1e-4, atol=1e-4)
    print("KERNEL_OK")
</pallas_src>

<mosaic_0001>
module attributes {stable_mosaic.version = 11 : i64} {
  func.func @_mm_epilogue_kernel(%arg0: i32, %arg1: memref<256x8xf32, #tpu.memory_space<vmem>>, %arg2: memref<8x4xf32, #tpu.memory_space<vmem>>, %arg3: memref<1x4xf32, #tpu.memory_space<vmem>>, %arg4: memref<1x4xf32, #tpu.memory_space<vmem>>, %arg5: memref<256x4xf32, #tpu.memory_space<vmem>>) attributes {dimension_semantics = [#tpu.dimension_semantics<parallel>], iteration_bounds = array<i64: 2>, scalar_prefetch = 0 : i64, scratch_operands = 0 : i64, tpu.core_type = #tpu.core_type<tc>, window_params = [{transform_indices = @transform_0, window_bounds = array<i64: 256, 8>}, {pipeline_mode = #tpu.pipeline_mode<synchronous>, transform_indices = @transform_1, window_bounds = array<i64: 8, 4>}, {pipeline_mode = #tpu.pipeline_mode<synchronous>, transform_indices = @transform_2, window_bounds = array<i64: 1, 4>}, {pipeline_mode = #tpu.pipeline_mode<synchronous>, transform_indices = @transform_3, window_bounds = array<i64: 1, 4>}, {transform_indices = @transform_4, window_bounds = array<i64: 256, 4>}]} {
    %c0 = arith.constant 0 : index
    %c0_0 = arith.constant 0 : index
    %0 = vector.load %arg1[%c0, %c0_0] : memref<256x8xf32, #tpu.memory_space<vmem>>, vector<256x8xf32>
    %c0_1 = arith.constant 0 : index
    %c0_2 = arith.constant 0 : index
    %1 = vector.load %arg2[%c0_1, %c0_2] : memref<8x4xf32, #tpu.memory_space<vmem>>, vector<8x4xf32>
    %cst = arith.constant dense<0.000000e+00> : vector<256x4xf32>
    %2 = tpu.matmul %0, %1, %cst {dimension_numbers = #tpu.dot_dimension_numbers<[1], [0], [0], [1], [0, 0, 1, 1], [], []>} : vector<256x8xf32>, vector<8x4xf32>, vector<256x4xf32> -> vector<256x4xf32>
    %c0_3 = arith.constant 0 : index
    %c0_4 = arith.constant 0 : index
    %3 = vector.load %arg3[%c0_3, %c0_4] : memref<1x4xf32, #tpu.memory_space<vmem>>, vector<1x4xf32>
    %4 = vector.broadcast %3 : vector<1x4xf32> to vector<256x4xf32>
    %5 = arith.mulf %2, %4 : vector<256x4xf32>
    %c0_5 = arith.constant 0 : index
    %c0_6 = arith.constant 0 : index
    %6 = vector.load %arg4[%c0_5, %c0_6] : memref<1x4xf32, #tpu.memory_space<vmem>>, vector<1x4xf32>
    %7 = vector.broadcast %6 : vector<1x4xf32> to vector<256x4xf32>
    %8 = arith.addf %5, %7 : vector<256x4xf32>
    %cst_7 = arith.constant 0.000000e+00 : f32
    %9 = vector.broadcast %cst_7 : f32 to vector<256x4xf32>
    %10 = arith.maximumf %8, %9 : vector<256x4xf32>
    %c0_8 = arith.constant 0 : index
    %c0_9 = arith.constant 0 : index
    %11 = vector.load %arg5[%c0_8, %c0_9] : memref<256x4xf32, #tpu.memory_space<vmem>>, vector<256x4xf32>
    tpu.vector_store %arg5[%c0_8, %c0_9], %10 {strides = array<i32>} : memref<256x4xf32, #tpu.memory_space<vmem>>, vector<256x4xf32>,
    return
  }
  func.func @transform_0(%arg0: i32) -> (i32, i32) {
    %c0_i32 = arith.constant 0 : i32
    %c0_i32_0 = arith.constant 0 : i32
    return %arg0, %c0_i32 : i32, i32
  }
  func.func @transform_1(%arg0: i32) -> (i32, i32) {
    %c0_i32 = arith.constant 0 : i32
    %c0_i32_0 = arith.constant 0 : i32
    %c0_i32_1 = arith.constant 0 : i32
    return %c0_i32, %c0_i32_0 : i32, i32
  }
  func.func @transform_2(%arg0: i32) -> (i32, i32) {
    %c0_i32 = arith.constant 0 : i32
    %c0_i32_0 = arith.constant 0 : i32
    %c0_i32_1 = arith.constant 0 : i32
    return %c0_i32, %c0_i32_0 : i32, i32
  }
  func.func @transform_3(%arg0: i32) -> (i32, i32) {
    %c0_i32 = arith.constant 0 : i32
    %c0_i32_0 = arith.constant 0 : i32
    %c0_i32_1 = arith.constant 0 : i32
    return %c0_i32, %c0_i32_0 : i32, i32
  }
  func.func @transform_4(%arg0: i32) -> (i32, i32) {
    %c0_i32 = arith.constant 0 : i32
    %c0_i32_0 = arith.constant 0 : i32
    return %arg0, %c0_i32 : i32, i32
  }
}

module attributes {stable_mosaic.version = 11 : i64} {
  func.func @_mm_epilogue_kernel(%arg0: i32, %arg1: memref<256x36xf32, #tpu.memory_space<vmem>>, %arg2: memref<36x4xf32, #tpu.memory_space<vmem>>, %arg3: memref<1x4xf32, #tpu.memory_space<vmem>>, %arg4: memref<1x4xf32, #tpu.memory_space<vmem>>, %arg5: memref<256x4xf32, #tpu.memory_space<vmem>>) attributes {dimension_semantics = [#tpu.dimension_semantics<parallel>], iteration_bounds = array<i64: 2>, scalar_prefetch = 0 : i64, scratch_operands = 0 : i64, tpu.core_type = #tpu.core_type<tc>, window_params = [{transform_indices = @transform_0, window_bounds = array<i64: 256, 36>}, {pipeline_mode = #tpu.pipeline_mode<synchronous>, transform_indices = @transform_1, window_bounds = array<i64: 36, 4>}, {pipeline_mode = #tpu.pipeline_mode<synchronous>, transform_indices = @transform_2, window_bounds = array<i64: 1, 4>}, {pipeline_mode = #tpu.pipeline_mode<synchronous>, transform_indices = @transform_3, window_bounds = array<i64: 1, 4>}, {transform_indices = @transform_4, window_bounds = array<i64: 256, 4>}]} {
    %c0 = arith.constant 0 : index
    %c0_0 = arith.constant 0 : index
    %0 = vector.load %arg1[%c0, %c0_0] : memref<256x36xf32, #tpu.memory_space<vmem>>, vector<256x36xf32>
    %c0_1 = arith.constant 0 : index
    %c0_2 = arith.constant 0 : index
    %1 = vector.load %arg2[%c0_1, %c0_2] : memref<36x4xf32, #tpu.memory_space<vmem>>, vector<36x4xf32>
    %cst = arith.constant dense<0.000000e+00> : vector<256x4xf32>
    %2 = tpu.matmul %0, %1, %cst {dimension_numbers = #tpu.dot_dimension_numbers<[1], [0], [0], [1], [0, 0, 1, 1], [], []>} : vector<256x36xf32>, vector<36x4xf32>, vector<256x4xf32> -> vector<256x4xf32>
    %c0_3 = arith.constant 0 : index
    %c0_4 = arith.constant 0 : index
    %3 = vector.load %arg3[%c0_3, %c0_4] : memref<1x4xf32, #tpu.memory_space<vmem>>, vector<1x4xf32>
    %4 = vector.broadcast %3 : vector<1x4xf32> to vector<256x4xf32>
    %5 = arith.mulf %2, %4 : vector<256x4xf32>
    %c0_5 = arith.constant 0 : index
    %c0_6 = arith.constant 0 : index
    %6 = vector.load %arg4[%c0_5, %c0_6] : memref<1x4xf32, #tpu.memory_space<vmem>>, vector<1x4xf32>
    %7 = vector.broadcast %6 : vector<1x4xf32> to vector<256x4xf32>
    %8 = arith.addf %5, %7 : vector<256x4xf32>
    %cst_7 = arith.constant 0.000000e+00 : f32
    %9 = vector.broadcast %cst_7 : f32 to vector<256x4xf32>
    %10 = arith.maximumf %8, %9 : vector<256x4xf32>
    %c0_8 = arith.constant 0 : index
    %c0_9 = arith.constant 0 : index
    %11 = vector.load %arg5[%c0_8, %c0_9] : memref<256x4xf32, #tpu.memory_space<vmem>>, vector<256x4xf32>
    tpu.vector_store %arg5[%c0_8, %c0_9], %10 {strides = array<i32>} : memref<256x4xf32, #tpu.memory_space<vmem>>, vector<256x4xf32>,
    return
  }
  func.func @transform_0(%arg0: i32) -> (i32, i32) {
    %c0_i32 = arith.constant 0 : i32
    %c0_i32_0 = arith.constant 0 : i32
    return %arg0, %c0_i32 : i32, i32
  }
  func.func @transform_1(%arg0: i32) -> (i32, i32) {
    %c0_i32 = arith.constant 0 : i32
    %c0_i32_0 = arith.constant 0 : i32
    %c0_i32_1 = arith.constant 0 : i32
    return %c0_i32, %c0_i32_0 : i32, i32
  }
  func.func @transform_2(%arg0: i32) -> (i32, i32) {
    %c0_i32 = arith.constant 0 : i32
    %c0_i32_0 = arith.constant 0 : i32
    %c0_i32_1 = arith.constant 0 : i32
    return %c0_i32, %c0_i32_0 : i32, i32
  }
  func.func @transform_3(%arg0: i32) -> (i32, i32) {
    %c0_i32 = arith.constant 0 : i32
    %c0_i32_0 = arith.constant 0 : i32
    %c0_i32_1 = arith.constant 0 : i32
    return %c0_i32, %c0_i32_0 : i32, i32
  }
  func.func @transform_4(%arg0: i32) -> (i32, i32) {
    %c0_i32 = arith.constant 0 : i32
    %c0_i32_0 = arith.constant 0 : i32
    return %arg0, %c0_i32 : i32, i32
  }
}

module attributes {stable_mosaic.version = 11 : i64} {
  func.func @_pred_aug_kernel(%arg0: i32, %arg1: memref<256x36xf32, #tpu.memory_space<vmem>>, %arg2: memref<1x36xf32, #tpu.memory_space<vmem>>, %arg3: memref<1x1xf32, #tpu.memory_space<vmem>>, %arg4: memref<256x8xf32, #tpu.memory_space<vmem>>, %arg5: memref<256x1xf32, #tpu.memory_space<vmem>>, %arg6: memref<256x8xf32, #tpu.memory_space<vmem>>) attributes {dimension_semantics = [#tpu.dimension_semantics<parallel>], iteration_bounds = array<i64: 2>, scalar_prefetch = 0 : i64, scratch_operands = 0 : i64, tpu.core_type = #tpu.core_type<tc>, window_params = [{transform_indices = @transform_0, window_bounds = array<i64: 256, 36>}, {pipeline_mode = #tpu.pipeline_mode<synchronous>, transform_indices = @transform_1, window_bounds = array<i64: 1, 36>}, {pipeline_mode = #tpu.pipeline_mode<synchronous>, transform_indices = @transform_2, window_bounds = array<i64: 1, 1>}, {transform_indices = @transform_3, window_bounds = array<i64: 256, 8>}, {transform_indices = @transform_4, window_bounds = array<i64: 256, 1>}, {transform_indices = @transform_5, window_bounds = array<i64: 256, 8>}]} {
    %c0 = arith.constant 0 : index
    %c0_0 = arith.constant 0 : index
    %0 = vector.load %arg1[%c0, %c0_0] : memref<256x36xf32, #tpu.memory_space<vmem>>, vector<256x36xf32>
    %c0_1 = arith.constant 0 : index
    %c0_2 = arith.constant 0 : index
    %1 = vector.load %arg2[%c0_1, %c0_2] : memref<1x36xf32, #tpu.memory_space<vmem>>, vector<1x36xf32>
    %2 = vector.broadcast %1 : vector<1x36xf32> to vector<256x36xf32>
    %3 = arith.mulf %0, %2 : vector<256x36xf32>
    %cst = arith.constant dense<0.000000e+00> : vector<256xf32>
    %4 = vector.multi_reduction <add>, %3, %cst [1] : vector<256x36xf32> to vector<256xf32>
    %5 = vector.shape_cast %4 : vector<256xf32> to vector<256x1xf32>
    %c0_3 = arith.constant 0 : index
    %c0_4 = arith.constant 0 : index
    %6 = vector.load %arg3[%c0_3, %c0_4] : memref<1x1xf32, #tpu.memory_space<vmem>>, vector<1x1xf32>
    %7 = vector.broadcast %6 : vector<1x1xf32> to vector<256x1xf32>
    %8 = arith.addf %5, %7 : vector<256x1xf32>
    %9 = arith.negf %8 : vector<256x1xf32>
    %10 = math.exp %9 : vector<256x1xf32>
    %cst_5 = arith.constant 1.000000e+00 : f32
    %11 = vector.broadcast %cst_5 : f32 to vector<256x1xf32>
    %12 = arith.addf %11, %10 : vector<256x1xf32>
    %13 = arith.divf %11, %12 : vector<256x1xf32>
    %c0_6 = arith.constant 0 : index
    %c0_7 = arith.constant 0 : index
    %14 = vector.load %arg5[%c0_6, %c0_7] : memref<256x1xf32, #tpu.memory_space<vmem>>, vector<256x1xf32>
    tpu.vector_store %arg5[%c0_6, %c0_7], %13 {strides = array<i32>} : memref<256x1xf32, #tpu.memory_space<vmem>>, vector<256x1xf32>,
    %c0_8 = arith.constant 0 : index
    %c0_9 = arith.constant 0 : index
    %15 = vector.load %arg4[%c0_8, %c0_9] : memref<256x8xf32, #tpu.memory_space<vmem>>, vector<256x8xf32>
    %cst_10 = arith.constant 1.000000e+00 : f32
    %16 = vector.broadcast %cst_10 : f32 to vector<256x1xf32>
    %17 = arith.subf %16, %13 : vector<256x1xf32>
    %18 = vector.broadcast %17 : vector<256x1xf32> to vector<256x8xf32>
    %19 = arith.mulf %15, %18 : vector<256x8xf32>
    %c0_11 = arith.constant 0 : index
    %c0_12 = arith.constant 0 : index
    %20 = vector.load %arg6[%c0_11, %c0_12] : memref<256x8xf32, #tpu.memory_space<vmem>>, vector<256x8xf32>
    tpu.vector_store %arg6[%c0_11, %c0_12], %19 {strides = array<i32>} : memref<256x8xf32, #tpu.memory_space<vmem>>, vector<256x8xf32>,
    return
  }
  func.func @transform_0(%arg0: i32) -> (i32, i32) {
    %c0_i32 = arith.constant 0 : i32
    %c0_i32_0 = arith.constant 0 : i32
    return %arg0, %c0_i32 : i32, i32
  }
  func.func @transform_1(%arg0: i32) -> (i32, i32) {
    %c0_i32 = arith.constant 0 : i32
    %c0_i32_0 = arith.constant 0 : i32
    %c0_i32_1 = arith.constant 0 : i32
    return %c0_i32, %c0_i32_0 : i32, i32
  }
  func.func @transform_2(%arg0: i32) -> (i32, i32) {
    %c0_i32 = arith.constant 0 : i32
    %c0_i32_0 = arith.constant 0 : i32
    %c0_i32_1 = arith.constant 0 : i32
    return %c0_i32, %c0_i32_0 : i32, i32
  }
  func.func @transform_3(%arg0: i32) -> (i32, i32) {
    %c0_i32 = arith.constant 0 : i32
    %c0_i32_0 = arith.constant 0 : i32
    return %arg0, %c0_i32 : i32, i32
  }
  func.func @transform_4(%arg0: i32) -> (i32, i32) {
    %c0_i32 = arith.constant 0 : i32
    %c0_i32_0 = arith.constant 0 : i32
    return %arg0, %c0_i32 : i32, i32
  }
  func.func @transform_5(%arg0: i32) -> (i32, i32) {
    %c0_i32 = arith.constant 0 : i32
    %c0_i32_0 = arith.constant 0 : i32
    return %arg0, %c0_i32 : i32, i32
  }
}

module attributes {stable_mosaic.version = 11 : i64} {
  func.func @_mm_epilogue_kernel(%arg0: i32, %arg1: memref<256x144xf32, #tpu.memory_space<vmem>>, %arg2: memref<144x8xf32, #tpu.memory_space<vmem>>, %arg3: memref<1x8xf32, #tpu.memory_space<vmem>>, %arg4: memref<1x8xf32, #tpu.memory_space<vmem>>, %arg5: memref<256x8xf32, #tpu.memory_space<vmem>>) attributes {dimension_semantics = [#tpu.dimension_semantics<parallel>], iteration_bounds = array<i64: 2>, scalar_prefetch = 0 : i64, scratch_operands = 0 : i64, tpu.core_type = #tpu.core_type<tc>, window_params = [{transform_indices = @transform_0, window_bounds = array<i64: 256, 144>}, {pipeline_mode = #tpu.pipeline_mode<synchronous>, transform_indices = @transform_1, window_bounds = array<i64: 144, 8>}, {pipeline_mode = #tpu.pipeline_mode<synchronous>, transform_indices = @transform_2, window_bounds = array<i64: 1, 8>}, {pipeline_mode = #tpu.pipeline_mode<synchronous>, transform_indices = @transform_3, window_bounds = array<i64: 1, 8>}, {transform_indices = @transform_4, window_bounds = array<i64: 256, 8>}]} {
    %c0 = arith.constant 0 : index
    %c0_0 = arith.constant 0 : index
    %0 = vector.load %arg1[%c0, %c0_0] : memref<256x144xf32, #tpu.memory_space<vmem>>, vector<256x144xf32>
    %c0_1 = arith.constant 0 : index
    %c0_2 = arith.constant 0 : index
    %1 = vector.load %arg2[%c0_1, %c0_2] : memref<144x8xf32, #tpu.memory_space<vmem>>, vector<144x8xf32>
    %cst = arith.constant dense<0.000000e+00> : vector<256x8xf32>
    %2 = tpu.matmul %0, %1, %cst {dimension_numbers = #tpu.dot_dimension_numbers<[1], [0], [0], [1], [0, 0, 1, 1], [], []>} : vector<256x144xf32>, vector<144x8xf32>, vector<256x8xf32> -> vector<256x8xf32>
    %c0_3 = arith.constant 0 : index
    %c0_4 = arith.constant 0 : index
    %3 = vector.load %arg3[%c0_3, %c0_4] : memref<1x8xf32, #tpu.memory_space<vmem>>, vector<1x8xf32>
    %4 = vector.broadcast %3 : vector<1x8xf32> to vector<256x8xf32>
    %5 = arith.mulf %2, %4 : vector<256x8xf32>
    %c0_5 = arith.constant 0 : index
    %c0_6 = arith.constant 0 : index
    %6 = vector.load %arg4[%c0_5, %c0_6] : memref<1x8xf32, #tpu.memory_space<vmem>>, vector<1x8xf32>
    %7 = vector.broadcast %6 : vector<1x8xf32> to vector<256x8xf32>
    %8 = arith.addf %5, %7 : vector<256x8xf32>
    %cst_7 = arith.constant 0.000000e+00 : f32
    %9 = vector.broadcast %cst_7 : f32 to vector<256x8xf32>
    %10 = arith.maximumf %8, %9 : vector<256x8xf32>
    %c0_8 = arith.constant 0 : index
    %c0_9 = arith.constant 0 : index
    %11 = vector.load %arg5[%c0_8, %c0_9] : memref<256x8xf32, #tpu.memory_space<vmem>>, vector<256x8xf32>
    tpu.vector_store %arg5[%c0_8, %c0_9], %10 {strides = array<i32>} : memref<256x8xf32, #tpu.memory_space<vmem>>, vector<256x8xf32>,
    return
  }
  func.func @transform_0(%arg0: i32) -> (i32, i32) {
    %c0_i32 = arith.constant 0 : i32
    %c0_i32_0 = arith.constant 0 : i32
    return %arg0, %c0_i32 : i32, i32
  }
  func.func @transform_1(%arg0: i32) -> (i32, i32) {
    %c0_i32 = arith.constant 0 : i32
    %c0_i32_0 = arith.constant 0 : i32
    %c0_i32_1 = arith.constant 0 : i32
    return %c0_i32, %c0_i32_0 : i32, i32
  }
  func.func @transform_2(%arg0: i32) -> (i32, i32) {
    %c0_i32 = arith.constant 0 : i32
    %c0_i32_0 = arith.constant 0 : i32
    %c0_i32_1 = arith.constant 0 : i32
    return %c0_i32, %c0_i32_0 : i32, i32
  }
  func.func @transform_3(%arg0: i32) -> (i32, i32) {
    %c0_i32 = arith.constant 0 : i32
    %c0_i32_0 = arith.constant 0 : i32
    %c0_i32_1 = arith.constant 0 : i32
    return %c0_i32, %c0_i32_0 : i32, i32
  }
  func.func @transform_4(%arg0: i32) -> (i32, i32) {
    %c0_i32 = arith.constant 0 : i32
    %c0_i32_0 = arith.constant 0 : i32
    return %arg0, %c0_i32 : i32, i32
  }
}

</mosaic_0001>

<llo_original>
// kernel: statistic_attention_forward.4
$region0: #{statistic_attention_forward.4}
  #allocation0 [shape = 'u32[]', space=smem, size = 0x4, offset = 0x4, fixed_abs, tag = 'smem constant byte address 0x4 - core index']
  #allocation1 [shape = 'u32[144,128]{1,0:T(1,128)}', space=vmem, size = 0x12000, scoped, tag = 'internal scratch']
  %s0 = inlined_call_operand.vmem [shape: f32[512,8], index: 0, kind: input, shape index: {}]
  %s1 = inlined_call_operand.vmem [shape: f32[8,4], index: 1, kind: input, shape index: {}]
  %s2 = inlined_call_operand.vmem [shape: f32[1,4], index: 2, kind: input, shape index: {}]
  %s3 = inlined_call_operand.vmem [shape: f32[1,4], index: 3, kind: input, shape index: {}]
  %s4 = inlined_call_operand.vmem [shape: f32[512,4], index: 4, kind: output, shape index: {}]
  %s5 = sld [smem:[#allocation0]]
  $region49: #{statistic_attention_forward.4} parent=0
    _
  %s7 = ssub.s32 1, %s5
  %s8 = scalar_select 0, %s7, %s5
  loop: start=0, step=1, limit=4
  $region2: #{statistic_attention_forward.4} parent=0 // loop_pre_header
    _
  $region3: #{statistic_attention_forward.4} parent=0 // loop_header
    %s10 = sphi 0, %s14
    %p11 = scmp.ge.s32.totalorder %s10, 4
    %s20 = sphi 0, %s22
    %s23 = sphi 0, %s20
    %s24 = sphi 0, %s23
    %s40 = sphi 0, %s24
    %s44 = sphi 0, %s44
    %s46 = sphi 0, %s44
    %s47 = sphi 0, %s46
    %s61 = sphi 0, %s47
    %s65 = sphi 0, %s65
    %s67 = sphi 0, %s65
    %s68 = sphi 0, %s67
    %s82 = sphi 0, %s68
    %s86 = sphi 0, %s86
    %s88 = sphi 0, %s86
    %s89 = sphi 0, %s88
    %s103 = sphi 0, %s89
    %s109 = sphi 0, %s111
    %s112 = sphi 0, %s109
    %s113 = sphi 0, %s112
    %s129 = sphi 0, %s113
  $region4: #{statistic_attention_forward.4} parent=0 // loop_header_branch
    %13 = sbr.rel (%p11) target = $region8
  $region5: #{statistic_attention_forward.4} parent=0 // loop_body
    %s15 = ssub.s32 %s10, 1
    %s16 = ssub.s32 %s10, 2
    %s17 = sadd.s32 %s10, 1
    %s18 = ssub.s32 %s10, %s17
    %p19 = scmp.eq.s32.totalorder %s18, 0
    %s21 = sadd.s32 %s20, 1
    %s22 = scalar_select %p19, %s20, %s21
    %p25 = pneg %p19
    %p26 = scmp.eq.s32.totalorder %s10, 1
    %p27 = por %p25, %p26
    %p28 = scmp.ne.s32.totalorder %s20, %s23
    %p29 = scmp.eq.s32.totalorder %s10, 0
    %p30 = por %p28, %p29
    %p31 = scmp.ne.s32.totalorder %s20, %s23
    %p32 = scmp.eq.s32.totalorder %s15, 1
    %p33 = por %p31, %p32
    %p34 = scmp.ne.s32.totalorder %s23, %s24
    %p35 = scmp.eq.s32.totalorder %s15, 0
    %p36 = por %p34, %p35
    %p37 = scmp.ne.s32.totalorder %s23, %s24
    %p38 = scmp.eq.s32.totalorder %s16, 1
    %p39 = por %p37, %p38
    %p41 = scmp.ne.s32.totalorder %s24, %s40
    %p42 = scmp.eq.s32.totalorder %s16, 0
    %p43 = por %p41, %p42
    %s45 = sadd.s32 %s44, 1
    %p48 = scmp.eq.s32.totalorder %s10, 1
    %p49 = scmp.ne.s32.totalorder %s44, %s46
    %p50 = scmp.eq.s32.totalorder %s10, 0
    %p51 = por %p49, %p50
    %p52 = scmp.ne.s32.totalorder %s44, %s46
    %p53 = scmp.eq.s32.totalorder %s15, 1
    %p54 = por %p52, %p53
    %p55 = scmp.ne.s32.totalorder %s46, %s47
    %p56 = scmp.eq.s32.totalorder %s15, 0
    %p57 = por %p55, %p56
    %p58 = scmp.ne.s32.totalorder %s46, %s47
    %p59 = scmp.eq.s32.totalorder %s16, 1
    %p60 = por %p58, %p59
    %p62 = scmp.ne.s32.totalorder %s47, %s61
    %p63 = scmp.eq.s32.totalorder %s16, 0
    %p64 = por %p62, %p63
    %s66 = sadd.s32 %s65, 1
    %p69 = scmp.eq.s32.totalorder %s10, 1
    %p70 = scmp.ne.s32.totalorder %s65, %s67
    %p71 = scmp.eq.s32.totalorder %s10, 0
    %p72 = por %p70, %p71
    %p73 = scmp.ne.s32.totalorder %s65, %s67
    %p74 = scmp.eq.s32.totalorder %s15, 1
    %p75 = por %p73, %p74
    %p76 = scmp.ne.s32.totalorder %s67, %s68
    %p77 = scmp.eq.s32.totalorder %s15, 0
    %p78 = por %p76, %p77
    %p79 = scmp.ne.s32.totalorder %s67, %s68
    %p80 = scmp.eq.s32.totalorder %s16, 1
    %p81 = por %p79, %p80
    %p83 = scmp.ne.s32.totalorder %s68, %s82
    %p84 = scmp.eq.s32.totalorder %s16, 0
    %p85 = por %p83, %p84
    %s87 = sadd.s32 %s86, 1
    %p90 = scmp.eq.s32.totalorder %s10, 1
    %p91 = scmp.ne.s32.totalorder %s86, %s88
    %p92 = scmp.eq.s32.totalorder %s10, 0
    %p93 = por %p91, %p92
    %p94 = scmp.ne.s32.totalorder %s86, %s88
    %p95 = scmp.eq.s32.totalorder %s15, 1
    %p96 = por %p94, %p95
    %p97 = scmp.ne.s32.totalorder %s88, %s89
    %p98 = scmp.eq.s32.totalorder %s15, 0
    %p99 = por %p97, %p98
    %p100 = scmp.ne.s32.totalorder %s88, %s89
    %p101 = scmp.eq.s32.totalorder %s16, 1
    %p102 = por %p100, %p101
    %p104 = scmp.ne.s32.totalorder %s89, %s103
    %p105 = scmp.eq.s32.totalorder %s16, 0
    %p106 = por %p104, %p105
    %s107 = ssub.s32 %s10, %s17
    %p108 = scmp.eq.s32.totalorder %s107, 0
    %s110 = sadd.s32 %s109, 1
    %s111 = scalar_select %p108, %s109, %s110
    %p114 = pneg %p108
    %p115 = scmp.eq.s32.totalorder %s10, 1
    %p116 = por %p114, %p115
    %p117 = scmp.ne.s32.totalorder %s109, %s112
    %p118 = scmp.eq.s32.totalorder %s10, 0
    %p119 = por %p117, %p118
    %p120 = scmp.ne.s32.totalorder %s109, %s112
    %p121 = scmp.eq.s32.totalorder %s15, 1
    %p122 = por %p120, %p121
    %p123 = scmp.ne.s32.totalorder %s112, %s113
    %p124 = scmp.eq.s32.totalorder %s15, 0
    %p125 = por %p123, %p124
    %p126 = scmp.ne.s32.totalorder %s112, %s113
    %p127 = scmp.eq.s32.totalorder %s16, 1
    %p128 = por %p126, %p127
    %p130 = scmp.ne.s32.totalorder %s113, %s129
    %p131 = scmp.eq.s32.totalorder %s16, 0
    %p132 = por %p130, %p131
    %p133 = scmp.le.s32.totalorder 1, %s10
    %p134 = scmp.lt.s32.totalorder %s10, 3
    %p135 = pnand %p133, %p134
    %p136 = pneg %p135
    // Predicated region
    $region9: #{statistic_attention_forward.4} parent=5 // pred_check
      _
    $region10: #{statistic_attention_forward.4} parent=5 // pred_check_branch
      %138 = sbr.rel (%p135) target = $region12
    $region11: #{statistic_attention_forward.4} parent=5 // pred_region
      %s139 = ssub.s32 %s10, 1
      // Predicated region
      $region13: #{statistic_attention_forward.4} parent=11 // pred_check
        %p140 = pneg %p57
      $region14: #{statistic_attention_forward.4} parent=11 // pred_check_branch
        %142 = sbr.rel (%p140) target = $region16
      $region15: #{statistic_attention_forward.4} parent=11 // pred_region
        _
      $region16: #{statistic_attention_forward.4} parent=11 // pred_fallthru
        _
      // Predicated region
      $region17: #{statistic_attention_forward.4} parent=11 // pred_check
        %p143 = pneg %p78
      $region18: #{statistic_attention_forward.4} parent=11 // pred_check_branch
        %145 = sbr.rel (%p143) target = $region20
      $region19: #{statistic_attention_forward.4} parent=11 // pred_region
        _
      $region20: #{statistic_attention_forward.4} parent=11 // pred_fallthru
        _
      // Predicated region
      $region21: #{statistic_attention_forward.4} parent=11 // pred_check
        %p146 = pneg %p99
      $region22: #{statistic_attention_forward.4} parent=11 // pred_check_branch
        %148 = sbr.rel (%p146) target = $region24
      $region23: #{statistic_attention_forward.4} parent=11 // pred_region
        _
      $region24: #{statistic_attention_forward.4} parent=11 // pred_fallthru
        _
    $region12: #{statistic_attention_forward.4} parent=5 // pred_fallthru
      _
    %p149 = scmp.lt.s32.totalorder %s10, 2
    // Predicated region
    $region25: #{statistic_attention_forward.4} parent=5 // pred_check
      %p150 = pneg %p149
    $region26: #{statistic_attention_forward.4} parent=5 // pred_check_branch
      %152 = sbr.rel (%p150) target = $region28
    $region27: #{statistic_attention_forward.4} parent=5 // pred_region
      // Predicated region
      $region29: #{statistic_attention_forward.4} parent=27 // pred_check
        %p153 = pneg %p30
      $region30: #{statistic_attention_forward.4} parent=27 // pred_check_branch
        %155 = sbr.rel (%p153) target = $region32
      $region31: #{statistic_attention_forward.4} parent=27 // pred_region
        %s156 = smul.u32 32, %s10
        %p157 = scmp.lt.s32.totalorder %s156, 63
        %s158 = scalar_select %p157, %s156, 63
        %s159 = smul.addr %s158, 8
        %s160 = scalar_lea.vmem %s0, %s159
        %s161 = smul.u32 32, %s10
      $region32: #{statistic_attention_forward.4} parent=27 // pred_fallthru
        _
    $region28: #{statistic_attention_forward.4} parent=5 // pred_fallthru
      _
    %p162 = scmp.le.s32.totalorder 1, %s10
    %p163 = scmp.lt.s32.totalorder %s10, 3
    %p164 = pnand %p162, %p163
    %p165 = pneg %p164
    // Predicated region
    $region33: #{statistic_attention_forward.4} parent=5 // pred_check
      _
    $region34: #{statistic_attention_forward.4} parent=5 // pred_check_branch
      %167 = sbr.rel (%p164) target = $region36
    $region35: #{statistic_attention_forward.4} parent=5 // pred_region
      %s168 = ssub.s32 %s10, 1
      %s169 = smul.u32 32, %s15
      %p170 = scmp.lt.s32.totalorder %s169, 63
      %s171 = scalar_select %p170, %s169, 63
      %s172 = smul.addr %s171, 8
      %s173 = scalar_lea.vmem %s0, %s172
      %p174 = pneg %p36
      %p175 = pneg %p33
      %p176 = pneg %p57
      %p177 = pneg %p54
      %p178 = pneg %p78
      %p179 = pneg %p75
      %p180 = pneg %p99
      %p181 = pneg %p96
      %p182 = pneg %p125
      %p183 = pneg %p122
      %s184 = smul.u32 32, %s15
      %p185 = scmp.lt.s32.totalorder %s184, 63
      %s186 = scalar_select %p185, %s184, 63
      %s187 = smul.addr %s186, 8
      %s188 = scalar_lea.vmem %s4, %s187
      %s189 = smul.u32 32, %s15
      %p190 = scmp.lt.s32.totalorder %s189, 63
      %s191 = scalar_select %p190, %s189, 63
      %s192 = smul.addr %s191, 8
      %s193 = scalar_lea.vmem %s0, %s192
      %s194 = smul.u32 32, %s15
      %s195 = smul.u32 32, %s15
      %p196 = scmp.lt.s32.totalorder %s195, 63
      %s197 = scalar_select %p196, %s195, 63
      %s198 = smul.addr %s197, 8
      %s199 = scalar_lea.vmem %s4, %s198
      %s200 = smul.u32 32, %s15
      %v201 = vld [vmem:[%s193] sm:$0xff]
      %v202 = vld [vmem:[%s193 + $0x8] sm:$0xff]
      %v203 = vld [vmem:[%s193 + $0x10] sm:$0xff]
      %v204 = vld [vmem:[%s193 + $0x18] sm:$0xff]
      %v205 = vld [vmem:[%s193 + $0x20] sm:$0xff]
      %v206 = vld [vmem:[%s193 + $0x28] sm:$0xff]
      %v207 = vld [vmem:[%s193 + $0x30] sm:$0xff]
      %v208 = vld [vmem:[%s193 + $0x38] sm:$0xff]
      %v209 = vld [vmem:[%s193 + $0x40] sm:$0xff]
      %v210 = vld [vmem:[%s193 + $0x48] sm:$0xff]
      %v211 = vld [vmem:[%s193 + $0x50] sm:$0xff]
      %v212 = vld [vmem:[%s193 + $0x58] sm:$0xff]
      %v213 = vld [vmem:[%s193 + $0x60] sm:$0xff]
      %v214 = vld [vmem:[%s193 + $0x68] sm:$0xff]
      %v215 = vld [vmem:[%s193 + $0x70] sm:$0xff]
      %v216 = vld [vmem:[%s193 + $0x78] sm:$0xff]
      %v217 = vld [vmem:[%s193 + $0x80] sm:$0xff]
      %v218 = vld [vmem:[%s193 + $0x88] sm:$0xff]
      %v219 = vld [vmem:[%s193 + $0x90] sm:$0xff]
      %v220 = vld [vmem:[%s193 + $0x98] sm:$0xff]
      %v221 = vld [vmem:[%s193 + $0xa0] sm:$0xff]
      %v222 = vld [vmem:[%s193 + $0xa8] sm:$0xff]
      %v223 = vld [vmem:[%s193 + $0xb0] sm:$0xff]
      %v224 = vld [vmem:[%s193 + $0xb8] sm:$0xff]
      %v225 = vld [vmem:[%s193 + $0xc0] sm:$0xff]
      %v226 = vld [vmem:[%s193 + $0xc8] sm:$0xff]
      %v227 = vld [vmem:[%s193 + $0xd0] sm:$0xff]
      %v228 = vld [vmem:[%s193 + $0xd8] sm:$0xff]
      %v229 = vld [vmem:[%s193 + $0xe0] sm:$0xff]
      %v230 = vld [vmem:[%s193 + $0xe8] sm:$0xff]
      %v231 = vld [vmem:[%s193 + $0xf0] sm:$0xff]
      %v232 = vld [vmem:[%s193 + $0xf8] sm:$0xff]
      %v233 = vld [vmem:[%s1] sm:$0xff]
      %vm234 = vcmask 64512
      %v236 = vsel %vm234, %v201, 0
      %v239 = vsel %vm234, %v202, 0
      %v242 = vsel %vm234, %v203, 0
      %v245 = vsel %vm234, %v204, 0
      %v248 = vsel %vm234, %v205, 0
      %v251 = vsel %vm234, %v206, 0
      %v254 = vsel %vm234, %v207, 0
      %v257 = vsel %vm234, %v208, 0
      %v260 = vsel %vm234, %v209, 0
      %v263 = vsel %vm234, %v210, 0
      %v266 = vsel %vm234, %v211, 0
      %v269 = vsel %vm234, %v212, 0
      %v272 = vsel %vm234, %v213, 0
      %v275 = vsel %vm234, %v214, 0
      %v278 = vsel %vm234, %v215, 0
      %v281 = vsel %vm234, %v216, 0
      %v284 = vsel %vm234, %v217, 0
      %v287 = vsel %vm234, %v218, 0
      %v290 = vsel %vm234, %v219, 0
      %v293 = vsel %vm234, %v220, 0
      %v296 = vsel %vm234, %v221, 0
      %v299 = vsel %vm234, %v222, 0
      %v302 = vsel %vm234, %v223, 0
      %v305 = vsel %vm234, %v224, 0
      %v308 = vsel %vm234, %v225, 0
      %v311 = vsel %vm234, %v226, 0
      %v314 = vsel %vm234, %v227, 0
      %v317 = vsel %vm234, %v228, 0
      %v320 = vsel %vm234, %v229, 0
      %v323 = vsel %vm234, %v230, 0
      %v326 = vsel %vm234, %v231, 0
      %v329 = vsel %vm234, %v232, 0
      %331 = vmatprep.subr.mxu0 0.0
      %332 = vmatpush1.msra.mxu0 %v233
      %333 = vmatprep.subr.mxu0 0.0
      %334 = vmatpush1.msra.mxu0 0.0
      %335 = vmatprep.subr.mxu0 0.0
      %336 = vmatpush1.msra.mxu0 0.0
      %337 = vmatprep.subr.mxu0 0.0
      %338 = vmatpush1.msra.mxu0 0.0
      %339 = vmatprep.subr.mxu0 0.0
      %340 = vmatpush1.msra.mxu0 0.0
      %341 = vmatprep.subr.mxu0 0.0
      %342 = vmatpush1.msra.mxu0 0.0
      %343 = vmatprep.subr.mxu0 0.0
      %344 = vmatpush1.msra.mxu0 0.0
      %345 = vmatprep.subr.mxu0 0.0
      %346 = vmatpush1.msra.mxu0 0.0
      %347 = vmatprep.subr.mxu0 0.0
      %348 = vmatpush1.msra.mxu0 0.0
      %349 = vmatprep.subr.mxu0 0.0
      %350 = vmatpush1.msra.mxu0 0.0
      %351 = vmatprep.subr.mxu0 0.0
      %352 = vmatpush1.msra.mxu0 0.0
      %353 = vmatprep.subr.mxu0 0.0
      %354 = vmatpush1.msra.mxu0 0.0
      %355 = vmatprep.subr.mxu0 0.0
      %356 = vmatpush1.msra.mxu0 0.0
      %357 = vmatprep.subr.mxu0 0.0
      %358 = vmatpush1.msra.mxu0 0.0
      %359 = vmatprep.subr.mxu0 0.0
      %360 = vmatpush1.msra.mxu0 0.0
      %361 = vmatprep.subr.mxu0 0.0
      %362 = vmatpush1.msra.mxu0 0.0
      %363 = vmatprep.subr.mxu0 0.0
      %364 = vmatpush1.msra.mxu0 0.0
      %365 = vmatprep.subr.mxu0 0.0
      %366 = vmatpush1.msra.mxu0 0.0
      %367 = vmatprep.subr.mxu0 0.0
      %368 = vmatpush1.msra.mxu0 0.0
      %369 = vmatprep.subr.mxu0 0.0
      %370 = vmatpush1.msra.mxu0 0.0
      %371 = vmatprep.subr.mxu0 0.0
      %372 = vmatpush1.msra.mxu0 0.0
      %373 = vmatprep.subr.mxu0 0.0
      %374 = vmatpush1.msra.mxu0 0.0
      %375 = vmatprep.subr.mxu0 0.0
      %376 = vmatpush1.msra.mxu0 0.0
      %377 = vmatprep.subr.mxu0 0.0
      %378 = vmatpush1.msra.mxu0 0.0
      %379 = vmatprep.subr.mxu0 0.0
      %380 = vmatpush1.msra.mxu0 0.0
      %381 = vmatprep.subr.mxu0 0.0
      %382 = vmatpush1.msra.mxu0 0.0
      %383 = vmatprep.subr.mxu0 0.0
      %384 = vmatpush1.msra.mxu0 0.0
      %385 = vmatprep.subr.mxu0 0.0
      %386 = vmatpush1.msra.mxu0 0.0
      %387 = vmatprep.subr.mxu0 0.0
      %388 = vmatpush1.msra.mxu0 0.0
      %389 = vmatprep.subr.mxu0 0.0
      %390 = vmatpush1.msra.mxu0 0.0
      %391 = vmatprep.subr.mxu0 0.0
      %392 = vmatpush1.msra.mxu0 0.0
      %393 = vmatprep.subr.mxu0 0.0
      %394 = vmatpush1.msra.mxu0 0.0
      %395 = vmatprep.mubr.f32.mxu0 0.0
      %396 = vmatmul.mubr.f32.gmra.mrb[0].mxu0 %v236
      %v397 = vpop.f32.mrb[0].mxu0
      %v398 = vadd.f32 0.0, %v397
      %v399 = vpop.f32.mrb[0].mxu0
      %400 = vmatprep.mubr.f32.mxu0 0.0
      %401 = vmatmul.mubr.f32.gmra.mrb[0].mxu0 %v239
      %v402 = vpop.f32.mrb[0].mxu0
      %v403 = vadd.f32 0.0, %v402
      %v404 = vpop.f32.mrb[0].mxu0
      %405 = vmatprep.mubr.f32.mxu0 0.0
      %406 = vmatmul.mubr.f32.gmra.mrb[0].mxu0 %v242
      %v407 = vpop.f32.mrb[0].mxu0
      %v408 = vadd.f32 0.0, %v407
      %v409 = vpop.f32.mrb[0].mxu0
      %410 = vmatprep.mubr.f32.mxu0 0.0
      %411 = vmatmul.mubr.f32.gmra.mrb[0].mxu0 %v245
      %v412 = vpop.f32.mrb[0].mxu0
      %v413 = vadd.f32 0.0, %v412
      %v414 = vpop.f32.mrb[0].mxu0
      %415 = vmatprep.mubr.f32.mxu0 0.0
      %416 = vmatmul.mubr.f32.gmra.mrb[0].mxu0 %v248
      %v417 = vpop.f32.mrb[0].mxu0
      %v418 = vadd.f32 0.0, %v417
      %v419 = vpop.f32.mrb[0].mxu0
      %420 = vmatprep.mubr.f32.mxu0 0.0
      %421 = vmatmul.mubr.f32.gmra.mrb[0].mxu0 %v251
      %v422 = vpop.f32.mrb[0].mxu0
      %v423 = vadd.f32 0.0, %v422
      %v424 = vpop.f32.mrb[0].mxu0
      %425 = vmatprep.mubr.f32.mxu0 0.0
      %426 = vmatmul.mubr.f32.gmra.mrb[0].mxu0 %v254
      %v427 = vpop.f32.mrb[0].mxu0
      %v428 = vadd.f32 0.0, %v427
      %v429 = vpop.f32.mrb[0].mxu0
      %430 = vmatprep.mubr.f32.mxu0 0.0
      %431 = vmatmul.mubr.f32.gmra.mrb[0].mxu0 %v257
      %v432 = vpop.f32.mrb[0].mxu0
      %v433 = vadd.f32 0.0, %v432
      %v434 = vpop.f32.mrb[0].mxu0
      %435 = vmatprep.mubr.f32.mxu0 0.0
      %436 = vmatmul.mubr.f32.gmra.mrb[0].mxu0 %v260
      %v437 = vpop.f32.mrb[0].mxu0
      %v438 = vadd.f32 0.0, %v437
      %v439 = vpop.f32.mrb[0].mxu0
      %440 = vmatprep.mubr.f32.mxu0 0.0
      %441 = vmatmul.mubr.f32.gmra.mrb[0].mxu0 %v263
      %v442 = vpop.f32.mrb[0].mxu0
      %v443 = vadd.f32 0.0, %v442
      %v444 = vpop.f32.mrb[0].mxu0
      %445 = vmatprep.mubr.f32.mxu0 0.0
      %446 = vmatmul.mubr.f32.gmra.mrb[0].mxu0 %v266
      %v447 = vpop.f32.mrb[0].mxu0
      %v448 = vadd.f32 0.0, %v447
      %v449 = vpop.f32.mrb[0].mxu0
      %450 = vmatprep.mubr.f32.mxu0 0.0
      %451 = vmatmul.mubr.f32.gmra.mrb[0].mxu0 %v269
      %v452 = vpop.f32.mrb[0].mxu0
      %v453 = vadd.f32 0.0, %v452
      %v454 = vpop.f32.mrb[0].mxu0
      %455 = vmatprep.mubr.f32.mxu0 0.0
      %456 = vmatmul.mubr.f32.gmra.mrb[0].mxu0 %v272
      %v457 = vpop.f32.mrb[0].mxu0
      %v458 = vadd.f32 0.0, %v457
      %v459 = vpop.f32.mrb[0].mxu0
      %460 = vmatprep.mubr.f32.mxu0 0.0
      %461 = vmatmul.mubr.f32.gmra.mrb[0].mxu0 %v275
      %v462 = vpop.f32.mrb[0].mxu0
      %v463 = vadd.f32 0.0, %v462
      %v464 = vpop.f32.mrb[0].mxu0
      %465 = vmatprep.mubr.f32.mxu0 0.0
      %466 = vmatmul.mubr.f32.gmra.mrb[0].mxu0 %v278
      %v467 = vpop.f32.mrb[0].mxu0
      %v468 = vadd.f32 0.0, %v467
      %v469 = vpop.f32.mrb[0].mxu0
      %470 = vmatprep.mubr.f32.mxu0 0.0
      %471 = vmatmul.mubr.f32.gmra.mrb[0].mxu0 %v281
      %v472 = vpop.f32.mrb[0].mxu0
      %v473 = vadd.f32 0.0, %v472
      %v474 = vpop.f32.mrb[0].mxu0
      %475 = vmatprep.mubr.f32.mxu0 0.0
      %476 = vmatmul.mubr.f32.gmra.mrb[0].mxu0 %v284
      %v477 = vpop.f32.mrb[0].mxu0
      %v478 = vadd.f32 0.0, %v477
      %v479 = vpop.f32.mrb[0].mxu0
      %480 = vmatprep.mubr.f32.mxu0 0.0
      %481 = vmatmul.mubr.f32.gmra.mrb[0].mxu0 %v287
      %v482 = vpop.f32.mrb[0].mxu0
      %v483 = vadd.f32 0.0, %v482
      %v484 = vpop.f32.mrb[0].mxu0
      %485 = vmatprep.mubr.f32.mxu0 0.0
      %486 = vmatmul.mubr.f32.gmra.mrb[0].mxu0 %v290
      %v487 = vpop.f32.mrb[0].mxu0
      %v488 = vadd.f32 0.0, %v487
      %v489 = vpop.f32.mrb[0].mxu0
      %490 = vmatprep.mubr.f32.mxu0 0.0
      %491 = vmatmul.mubr.f32.gmra.mrb[0].mxu0 %v293
      %v492 = vpop.f32.mrb[0].mxu0
      %v493 = vadd.f32 0.0, %v492
      %v494 = vpop.f32.mrb[0].mxu0
      %495 = vmatprep.mubr.f32.mxu0 0.0
      %496 = vmatmul.mubr.f32.gmra.mrb[0].mxu0 %v296
      %v497 = vpop.f32.mrb[0].mxu0
      %v498 = vadd.f32 0.0, %v497
      %v499 = vpop.f32.mrb[0].mxu0
      %500 = vmatprep.mubr.f32.mxu0 0.0
      %501 = vmatmul.mubr.f32.gmra.mrb[0].mxu0 %v299
      %v502 = vpop.f32.mrb[0].mxu0
      %v503 = vadd.f32 0.0, %v502
      %v504 = vpop.f32.mrb[0].mxu0
      %505 = vmatprep.mubr.f32.mxu0 0.0
      %506 = vmatmul.mubr.f32.gmra.mrb[0].mxu0 %v302
      %v507 = vpop.f32.mrb[0].mxu0
      %v508 = vadd.f32 0.0, %v507
      %v509 = vpop.f32.mrb[0].mxu0
      %510 = vmatprep.mubr.f32.mxu0 0.0
      %511 = vmatmul.mubr.f32.gmra.mrb[0].mxu0 %v305
      %v512 = vpop.f32.mrb[0].mxu0
      %v513 = vadd.f32 0.0, %v512
      %v514 = vpop.f32.mrb[0].mxu0
      %515 = vmatprep.mubr.f32.mxu0 0.0
      %516 = vmatmul.mubr.f32.gmra.mrb[0].mxu0 %v308
      %v517 = vpop.f32.mrb[0].mxu0
      %v518 = vadd.f32 0.0, %v517
      %v519 = vpop.f32.mrb[0].mxu0
      %520 = vmatprep.mubr.f32.mxu0 0.0
      %521 = vmatmul.mubr.f32.gmra.mrb[0].mxu0 %v311
      %v522 = vpop.f32.mrb[0].mxu0
      %v523 = vadd.f32 0.0, %v522
      %v524 = vpop.f32.mrb[0].mxu0
      %525 = vmatprep.mubr.f32.mxu0 0.0
      %526 = vmatmul.mubr.f32.gmra.mrb[0].mxu0 %v314
      %v527 = vpop.f32.mrb[0].mxu0
      %v528 = vadd.f32 0.0, %v527
      %v529 = vpop.f32.mrb[0].mxu0
      %530 = vmatprep.mubr.f32.mxu0 0.0
      %531 = vmatmul.mubr.f32.gmra.mrb[0].mxu0 %v317
      %v532 = vpop.f32.mrb[0].mxu0
      %v533 = vadd.f32 0.0, %v532
      %v534 = vpop.f32.mrb[0].mxu0
      %535 = vmatprep.mubr.f32.mxu0 0.0
      %536 = vmatmul.mubr.f32.gmra.mrb[0].mxu0 %v320
      %v537 = vpop.f32.mrb[0].mxu0
      %v538 = vadd.f32 0.0, %v537
      %v539 = vpop.f32.mrb[0].mxu0
      %540 = vmatprep.mubr.f32.mxu0 0.0
      %541 = vmatmul.mubr.f32.gmra.mrb[0].mxu0 %v323
      %v542 = vpop.f32.mrb[0].mxu0
      %v543 = vadd.f32 0.0, %v542
      %v544 = vpop.f32.mrb[0].mxu0
      %545 = vmatprep.mubr.f32.mxu0 0.0
      %546 = vmatmul.mubr.f32.gmra.mrb[0].mxu0 %v326
      %v547 = vpop.f32.mrb[0].mxu0
      %v548 = vadd.f32 0.0, %v547
      %v549 = vpop.f32.mrb[0].mxu0
      %550 = vmatprep.mubr.f32.mxu0 0.0
      %551 = vmatmul.mubr.f32.gmra.mrb[0].mxu0 %v329
      %v552 = vpop.f32.mrb[0].mxu0
      %v553 = vadd.f32 0.0, %v552
      %v554 = vpop.f32.mrb[0].mxu0
      %555 = vdwg.mxu0
      %v556 = vld [vmem:[%s2] sm:$0x1]
      %v558 = vlaneseq
      %v559 = vshrl.u32 %v558, 7
      %v560 = vsub.s32 0, %v559
      %v561 = vrot.slane %v556, %v560
      %v563 = vmul.f32 %v398, %v561
      %v564 = vmul.f32 %v403, %v561
      %v565 = vmul.f32 %v408, %v561
      %v566 = vmul.f32 %v413, %v561
      %v567 = vmul.f32 %v418, %v561
      %v568 = vmul.f32 %v423, %v561
      %v569 = vmul.f32 %v428, %v561
      %v570 = vmul.f32 %v433, %v561
      %v571 = vmul.f32 %v438, %v561
      %v572 = vmul.f32 %v443, %v561
      %v573 = vmul.f32 %v448, %v561
      %v574 = vmul.f32 %v453, %v561
      %v575 = vmul.f32 %v458, %v561
      %v576 = vmul.f32 %v463, %v561
      %v577 = vmul.f32 %v468, %v561
      %v578 = vmul.f32 %v473, %v561
      %v579 = vmul.f32 %v478, %v561
      %v580 = vmul.f32 %v483, %v561
      %v581 = vmul.f32 %v488, %v561
      %v582 = vmul.f32 %v493, %v561
      %v583 = vmul.f32 %v498, %v561
      %v584 = vmul.f32 %v503, %v561
      %v585 = vmul.f32 %v508, %v561
      %v586 = vmul.f32 %v513, %v561
      %v587 = vmul.f32 %v518, %v561
      %v588 = vmul.f32 %v523, %v561
      %v589 = vmul.f32 %v528, %v561
      %v590 = vmul.f32 %v533, %v561
      %v591 = vmul.f32 %v538, %v561
      %v592 = vmul.f32 %v543, %v561
      %v593 = vmul.f32 %v548, %v561
      %v594 = vmul.f32 %v553, %v561
      %v595 = vld [vmem:[%s3] sm:$0x1]
      %v597 = vlaneseq
      %v598 = vshrl.u32 %v597, 7
      %v599 = vsub.s32 0, %v598
      %v600 = vrot.slane %v595, %v599
      %v602 = vadd.f32 %v563, %v600
      %v603 = vadd.f32 %v564, %v600
      %v604 = vadd.f32 %v565, %v600
      %v605 = vadd.f32 %v566, %v600
      %v606 = vadd.f32 %v567, %v600
      %v607 = vadd.f32 %v568, %v600
      %v608 = vadd.f32 %v569, %v600
      %v609 = vadd.f32 %v570, %v600
      %v610 = vadd.f32 %v571, %v600
      %v611 = vadd.f32 %v572, %v600
      %v612 = vadd.f32 %v573, %v600
      %v613 = vadd.f32 %v574, %v600
      %v614 = vadd.f32 %v575, %v600
      %v615 = vadd.f32 %v576, %v600
      %v616 = vadd.f32 %v577, %v600
      %v617 = vadd.f32 %v578, %v600
      %v618 = vadd.f32 %v579, %v600
      %v619 = vadd.f32 %v580, %v600
      %v620 = vadd.f32 %v581, %v600
      %v621 = vadd.f32 %v582, %v600
      %v622 = vadd.f32 %v583, %v600
      %v623 = vadd.f32 %v584, %v600
      %v624 = vadd.f32 %v585, %v600
      %v625 = vadd.f32 %v586, %v600
      %v626 = vadd.f32 %v587, %v600
      %v627 = vadd.f32 %v588, %v600
      %v628 = vadd.f32 %v589, %v600
      %v629 = vadd.f32 %v590, %v600
      %v630 = vadd.f32 %v591, %v600
      %v631 = vadd.f32 %v592, %v600
      %v632 = vadd.f32 %v593, %v600
      %v633 = vadd.f32 %v594, %v600
      %v634 = vmax.f32 %v602, 0.0
      %v635 = vmax.f32 %v603, 0.0
      %v636 = vmax.f32 %v604, 0.0
      %v637 = vmax.f32 %v605, 0.0
      %v638 = vmax.f32 %v606, 0.0
      %v639 = vmax.f32 %v607, 0.0
      %v640 = vmax.f32 %v608, 0.0
      %v641 = vmax.f32 %v609, 0.0
      %v642 = vmax.f32 %v610, 0.0
      %v643 = vmax.f32 %v611, 0.0
      %v644 = vmax.f32 %v612, 0.0
      %v645 = vmax.f32 %v613, 0.0
      %v646 = vmax.f32 %v614, 0.0
      %v647 = vmax.f32 %v615, 0.0
      %v648 = vmax.f32 %v616, 0.0
      %v649 = vmax.f32 %v617, 0.0
      %v650 = vmax.f32 %v618, 0.0
      %v651 = vmax.f32 %v619, 0.0
      %v652 = vmax.f32 %v620, 0.0
      %v653 = vmax.f32 %v621, 0.0
      %v654 = vmax.f32 %v622, 0.0
      %v655 = vmax.f32 %v623, 0.0
      %v656 = vmax.f32 %v624, 0.0
      %v657 = vmax.f32 %v625, 0.0
      %v658 = vmax.f32 %v626, 0.0
      %v659 = vmax.f32 %v627, 0.0
      %v660 = vmax.f32 %v628, 0.0
      %v661 = vmax.f32 %v629, 0.0
      %v662 = vmax.f32 %v630, 0.0
      %v663 = vmax.f32 %v631, 0.0
      %v664 = vmax.f32 %v632, 0.0
      %v665 = vmax.f32 %v633, 0.0
      %vm666 = vcmask 31744
      %667 = vst.msk [vmem:[%s199] sm:$0xff] %vm666, %v634
      %668 = vst.msk [vmem:[%s199 + $0x8] sm:$0xff] %vm666, %v635
      %669 = vst.msk [vmem:[%s199 + $0x10] sm:$0xff] %vm666, %v636
      %670 = vst.msk [vmem:[%s199 + $0x18] sm:$0xff] %vm666, %v637
      %671 = vst.msk [vmem:[%s199 + $0x20] sm:$0xff] %vm666, %v638
      %672 = vst.msk [vmem:[%s199 + $0x28] sm:$0xff] %vm666, %v639
      %673 = vst.msk [vmem:[%s199 + $0x30] sm:$0xff] %vm666, %v640
      %674 = vst.msk [vmem:[%s199 + $0x38] sm:$0xff] %vm666, %v641
      %675 = vst.msk [vmem:[%s199 + $0x40] sm:$0xff] %vm666, %v642
      %676 = vst.msk [vmem:[%s199 + $0x48] sm:$0xff] %vm666, %v643
      %677 = vst.msk [vmem:[%s199 + $0x50] sm:$0xff] %vm666, %v644
      %678 = vst.msk [vmem:[%s199 + $0x58] sm:$0xff] %vm666, %v645
      %679 = vst.msk [vmem:[%s199 + $0x60] sm:$0xff] %vm666, %v646
      %680 = vst.msk [vmem:[%s199 + $0x68] sm:$0xff] %vm666, %v647
      %681 = vst.msk [vmem:[%s199 + $0x70] sm:$0xff] %vm666, %v648
      %682 = vst.msk [vmem:[%s199 + $0x78] sm:$0xff] %vm666, %v649
      %683 = vst.msk [vmem:[%s199 + $0x80] sm:$0xff] %vm666, %v650
      %684 = vst.msk [vmem:[%s199 + $0x88] sm:$0xff] %vm666, %v651
      %685 = vst.msk [vmem:[%s199 + $0x90] sm:$0xff] %vm666, %v652
      %686 = vst.msk [vmem:[%s199 + $0x98] sm:$0xff] %vm666, %v653
      %687 = vst.msk [vmem:[%s199 + $0xa0] sm:$0xff] %vm666, %v654
      %688 = vst.msk [vmem:[%s199 + $0xa8] sm:$0xff] %vm666, %v655
      %689 = vst.msk [vmem:[%s199 + $0xb0] sm:$0xff] %vm666, %v656
      %690 = vst.msk [vmem:[%s199 + $0xb8] sm:$0xff] %vm666, %v657
      %691 = vst.msk [vmem:[%s199 + $0xc0] sm:$0xff] %vm666, %v658
      %692 = vst.msk [vmem:[%s199 + $0xc8] sm:$0xff] %vm666, %v659
      %693 = vst.msk [vmem:[%s199 + $0xd0] sm:$0xff] %vm666, %v660
      %694 = vst.msk [vmem:[%s199 + $0xd8] sm:$0xff] %vm666, %v661
      %695 = vst.msk [vmem:[%s199 + $0xe0] sm:$0xff] %vm666, %v662
      %696 = vst.msk [vmem:[%s199 + $0xe8] sm:$0xff] %vm666, %v663
      %697 = vst.msk [vmem:[%s199 + $0xf0] sm:$0xff] %vm666, %v664
      %698 = vst.msk [vmem:[%s199 + $0xf8] sm:$0xff] %vm666, %v665
      %s699 = smul.u32 32, %s15
      %p700 = scmp.lt.s32.totalorder %s699, 63
      %s701 = scalar_select %p700, %s699, 63
      %s702 = smul.addr %s701, 8
      %s703 = scalar_lea.vmem %s4, %s702
      // Predicated region
      $region37: #{statistic_attention_forward.4} parent=35 // pred_check
        %p704 = pneg %p122
      $region38: #{statistic_attention_forward.4} parent=35 // pred_check_branch
        %706 = sbr.rel (%p704) target = $region40
      $region39: #{statistic_attention_forward.4} parent=35 // pred_region
        %s707 = smul.u32 32, %s15
      $region40: #{statistic_attention_forward.4} parent=35 // pred_fallthru
        _
    $region36: #{statistic_attention_forward.4} parent=5 // pred_fallthru
      _
    %p708 = scmp.le.s32.totalorder 2, %s10
    // Predicated region
    $region41: #{statistic_attention_forward.4} parent=5 // pred_check
      %p709 = pneg %p708
    $region42: #{statistic_attention_forward.4} parent=5 // pred_check_branch
      %711 = sbr.rel (%p709) target = $region44
    $region43: #{statistic_attention_forward.4} parent=5 // pred_region
      %s712 = ssub.s32 %s10, 2
      // Predicated region
      $region45: #{statistic_attention_forward.4} parent=43 // pred_check
        %p713 = pneg %p128
      $region46: #{statistic_attention_forward.4} parent=43 // pred_check_branch
        %715 = sbr.rel (%p713) target = $region48
      $region47: #{statistic_attention_forward.4} parent=43 // pred_region
        %s716 = smul.u32 32, %s16
        %p717 = scmp.lt.s32.totalorder %s716, 63
        %s718 = scalar_select %p717, %s716, 63
        %s719 = smul.addr %s718, 8
        %s720 = scalar_lea.vmem %s4, %s719
      $region48: #{statistic_attention_forward.4} parent=43 // pred_fallthru
        _
    $region44: #{statistic_attention_forward.4} parent=5 // pred_fallthru
      _
  $region6: #{statistic_attention_forward.4} parent=0 // loop_footer
    %s14 = sadd.s32 1, %s10
  $region7: #{statistic_attention_forward.4} parent=0 // loop_footer_branch
    %9 = sbr.rel target = $region3
  $region8: #{statistic_attention_forward.4} parent=0 // loop_exit
    _

// kernel: statistic_attention_forward.5
$region0: #{statistic_attention_forward.5}
  #allocation0 [shape = 'u32[]', space=smem, size = 0x4, offset = 0x4, fixed_abs, tag = 'smem constant byte address 0x4 - core index']
  #allocation1 [shape = 'u32[144,128]{1,0:T(1,128)}', space=vmem, size = 0x12000, scoped, tag = 'internal scratch']
  %s0 = inlined_call_operand.vmem [shape: f32[512,36], index: 0, kind: input, shape index: {}]
  %s1 = inlined_call_operand.vmem [shape: f32[36,4], index: 1, kind: input, shape index: {}]
  %s2 = inlined_call_operand.vmem [shape: f32[1,4], index: 2, kind: input, shape index: {}]
  %s3 = inlined_call_operand.vmem [shape: f32[1,4], index: 3, kind: input, shape index: {}]
  %s4 = inlined_call_operand.vmem [shape: f32[512,4], index: 4, kind: output, shape index: {}]
  %s5 = sld [smem:[#allocation0]]
  $region49: #{statistic_attention_forward.5} parent=0
    _
  %s7 = ssub.s32 1, %s5
  %s8 = scalar_select 0, %s7, %s5
  loop: start=0, step=1, limit=4
  $region2: #{statistic_attention_forward.5} parent=0 // loop_pre_header
    _
  $region3: #{statistic_attention_forward.5} parent=0 // loop_header
    %s10 = sphi 0, %s14
    %p11 = scmp.ge.s32.totalorder %s10, 4
    %s20 = sphi 0, %s22
    %s23 = sphi 0, %s20
    %s24 = sphi 0, %s23
    %s40 = sphi 0, %s24
    %s44 = sphi 0, %s44
    %s46 = sphi 0, %s44
    %s47 = sphi 0, %s46
    %s61 = sphi 0, %s47
    %s65 = sphi 0, %s65
    %s67 = sphi 0, %s65
    %s68 = sphi 0, %s67
    %s82 = sphi 0, %s68
    %s86 = sphi 0, %s86
    %s88 = sphi 0, %s86
    %s89 = sphi 0, %s88
    %s103 = sphi 0, %s89
    %s109 = sphi 0, %s111
    %s112 = sphi 0, %s109
    %s113 = sphi 0, %s112
    %s129 = sphi 0, %s113
  $region4: #{statistic_attention_forward.5} parent=0 // loop_header_branch
    %13 = sbr.rel (%p11) target = $region8
  $region5: #{statistic_attention_forward.5} parent=0 // loop_body
    %s15 = ssub.s32 %s10, 1
    %s16 = ssub.s32 %s10, 2
    %s17 = sadd.s32 %s10, 1
    %s18 = ssub.s32 %s10, %s17
    %p19 = scmp.eq.s32.totalorder %s18, 0
    %s21 = sadd.s32 %s20, 1
    %s22 = scalar_select %p19, %s20, %s21
    %p25 = pneg %p19
    %p26 = scmp.eq.s32.totalorder %s10, 1
    %p27 = por %p25, %p26
    %p28 = scmp.ne.s32.totalorder %s20, %s23
    %p29 = scmp.eq.s32.totalorder %s10, 0
    %p30 = por %p28, %p29
    %p31 = scmp.ne.s32.totalorder %s20, %s23
    %p32 = scmp.eq.s32.totalorder %s15, 1
    %p33 = por %p31, %p32
    %p34 = scmp.ne.s32.totalorder %s23, %s24
    %p35 = scmp.eq.s32.totalorder %s15, 0
    %p36 = por %p34, %p35
    %p37 = scmp.ne.s32.totalorder %s23, %s24
    %p38 = scmp.eq.s32.totalorder %s16, 1
    %p39 = por %p37, %p38
    %p41 = scmp.ne.s32.totalorder %s24, %s40
    %p42 = scmp.eq.s32.totalorder %s16, 0
    %p43 = por %p41, %p42
    %s45 = sadd.s32 %s44, 1
    %p48 = scmp.eq.s32.totalorder %s10, 1
    %p49 = scmp.ne.s32.totalorder %s44, %s46
    %p50 = scmp.eq.s32.totalorder %s10, 0
    %p51 = por %p49, %p50
    %p52 = scmp.ne.s32.totalorder %s44, %s46
    %p53 = scmp.eq.s32.totalorder %s15, 1
    %p54 = por %p52, %p53
    %p55 = scmp.ne.s32.totalorder %s46, %s47
    %p56 = scmp.eq.s32.totalorder %s15, 0
    %p57 = por %p55, %p56
    %p58 = scmp.ne.s32.totalorder %s46, %s47
    %p59 = scmp.eq.s32.totalorder %s16, 1
    %p60 = por %p58, %p59
    %p62 = scmp.ne.s32.totalorder %s47, %s61
    %p63 = scmp.eq.s32.totalorder %s16, 0
    %p64 = por %p62, %p63
    %s66 = sadd.s32 %s65, 1
    %p69 = scmp.eq.s32.totalorder %s10, 1
    %p70 = scmp.ne.s32.totalorder %s65, %s67
    %p71 = scmp.eq.s32.totalorder %s10, 0
    %p72 = por %p70, %p71
    %p73 = scmp.ne.s32.totalorder %s65, %s67
    %p74 = scmp.eq.s32.totalorder %s15, 1
    %p75 = por %p73, %p74
    %p76 = scmp.ne.s32.totalorder %s67, %s68
    %p77 = scmp.eq.s32.totalorder %s15, 0
    %p78 = por %p76, %p77
    %p79 = scmp.ne.s32.totalorder %s67, %s68
    %p80 = scmp.eq.s32.totalorder %s16, 1
    %p81 = por %p79, %p80
    %p83 = scmp.ne.s32.totalorder %s68, %s82
    %p84 = scmp.eq.s32.totalorder %s16, 0
    %p85 = por %p83, %p84
    %s87 = sadd.s32 %s86, 1
    %p90 = scmp.eq.s32.totalorder %s10, 1
    %p91 = scmp.ne.s32.totalorder %s86, %s88
    %p92 = scmp.eq.s32.totalorder %s10, 0
    %p93 = por %p91, %p92
    %p94 = scmp.ne.s32.totalorder %s86, %s88
    %p95 = scmp.eq.s32.totalorder %s15, 1
    %p96 = por %p94, %p95
    %p97 = scmp.ne.s32.totalorder %s88, %s89
    %p98 = scmp.eq.s32.totalorder %s15, 0
    %p99 = por %p97, %p98
    %p100 = scmp.ne.s32.totalorder %s88, %s89
    %p101 = scmp.eq.s32.totalorder %s16, 1
    %p102 = por %p100, %p101
    %p104 = scmp.ne.s32.totalorder %s89, %s103
    %p105 = scmp.eq.s32.totalorder %s16, 0
    %p106 = por %p104, %p105
    %s107 = ssub.s32 %s10, %s17
    %p108 = scmp.eq.s32.totalorder %s107, 0
    %s110 = sadd.s32 %s109, 1
    %s111 = scalar_select %p108, %s109, %s110
    %p114 = pneg %p108
    %p115 = scmp.eq.s32.totalorder %s10, 1
    %p116 = por %p114, %p115
    %p117 = scmp.ne.s32.totalorder %s109, %s112
    %p118 = scmp.eq.s32.totalorder %s10, 0
    %p119 = por %p117, %p118
    %p120 = scmp.ne.s32.totalorder %s109, %s112
    %p121 = scmp.eq.s32.totalorder %s15, 1
    %p122 = por %p120, %p121
    %p123 = scmp.ne.s32.totalorder %s112, %s113
    %p124 = scmp.eq.s32.totalorder %s15, 0
    %p125 = por %p123, %p124
    %p126 = scmp.ne.s32.totalorder %s112, %s113
    %p127 = scmp.eq.s32.totalorder %s16, 1
    %p128 = por %p126, %p127
    %p130 = scmp.ne.s32.totalorder %s113, %s129
    %p131 = scmp.eq.s32.totalorder %s16, 0
    %p132 = por %p130, %p131
    %p133 = scmp.le.s32.totalorder 1, %s10
    %p134 = scmp.lt.s32.totalorder %s10, 3
    %p135 = pnand %p133, %p134
    %p136 = pneg %p135
    // Predicated region
    $region9: #{statistic_attention_forward.5} parent=5 // pred_check
      _
    $region10: #{statistic_attention_forward.5} parent=5 // pred_check_branch
      %138 = sbr.rel (%p135) target = $region12
    $region11: #{statistic_attention_forward.5} parent=5 // pred_region
      %s139 = ssub.s32 %s10, 1
      // Predicated region
      $region13: #{statistic_attention_forward.5} parent=11 // pred_check
        %p140 = pneg %p57
      $region14: #{statistic_attention_forward.5} parent=11 // pred_check_branch
        %142 = sbr.rel (%p140) target = $region16
      $region15: #{statistic_attention_forward.5} parent=11 // pred_region
        _
      $region16: #{statistic_attention_forward.5} parent=11 // pred_fallthru
        _
      // Predicated region
      $region17: #{statistic_attention_forward.5} parent=11 // pred_check
        %p143 = pneg %p78
      $region18: #{statistic_attention_forward.5} parent=11 // pred_check_branch
        %145 = sbr.rel (%p143) target = $region20
      $region19: #{statistic_attention_forward.5} parent=11 // pred_region
        _
      $region20: #{statistic_attention_forward.5} parent=11 // pred_fallthru
        _
      // Predicated region
      $region21: #{statistic_attention_forward.5} parent=11 // pred_check
        %p146 = pneg %p99
      $region22: #{statistic_attention_forward.5} parent=11 // pred_check_branch
        %148 = sbr.rel (%p146) target = $region24
      $region23: #{statistic_attention_forward.5} parent=11 // pred_region
        _
      $region24: #{statistic_attention_forward.5} parent=11 // pred_fallthru
        _
    $region12: #{statistic_attention_forward.5} parent=5 // pred_fallthru
      _
    %p149 = scmp.lt.s32.totalorder %s10, 2
    // Predicated region
    $region25: #{statistic_attention_forward.5} parent=5 // pred_check
      %p150 = pneg %p149
    $region26: #{statistic_attention_forward.5} parent=5 // pred_check_branch
      %152 = sbr.rel (%p150) target = $region28
    $region27: #{statistic_attention_forward.5} parent=5 // pred_region
      // Predicated region
      $region29: #{statistic_attention_forward.5} parent=27 // pred_check
        %p153 = pneg %p30
      $region30: #{statistic_attention_forward.5} parent=27 // pred_check_branch
        %155 = sbr.rel (%p153) target = $region32
      $region31: #{statistic_attention_forward.5} parent=27 // pred_region
        %s156 = smul.u32 32, %s10
        %p157 = scmp.lt.s32.totalorder %s156, 63
        %s158 = scalar_select %p157, %s156, 63
        %s159 = smul.addr %s158, 8
        %s160 = scalar_lea.vmem %s0, %s159
        %s161 = smul.u32 32, %s10
      $region32: #{statistic_attention_forward.5} parent=27 // pred_fallthru
        _
    $region28: #{statistic_attention_forward.5} parent=5 // pred_fallthru
      _
    %p162 = scmp.le.s32.totalorder 1, %s10
    %p163 = scmp.lt.s32.totalorder %s10, 3
    %p164 = pnand %p162, %p163
    %p165 = pneg %p164
    // Predicated region
    $region33: #{statistic_attention_forward.5} parent=5 // pred_check
      _
    $region34: #{statistic_attention_forward.5} parent=5 // pred_check_branch
      %167 = sbr.rel (%p164) target = $region36
    $region35: #{statistic_attention_forward.5} parent=5 // pred_region
      %s168 = ssub.s32 %s10, 1
      %s169 = smul.u32 32, %s15
      %p170 = scmp.lt.s32.totalorder %s169, 63
      %s171 = scalar_select %p170, %s169, 63
      %s172 = smul.addr %s171, 8
      %s173 = scalar_lea.vmem %s0, %s172
      %p174 = pneg %p36
      %p175 = pneg %p33
      %p176 = pneg %p57
      %p177 = pneg %p54
      %p178 = pneg %p78
      %p179 = pneg %p75
      %p180 = pneg %p99
      %p181 = pneg %p96
      %p182 = pneg %p125
      %p183 = pneg %p122
      %s184 = smul.u32 32, %s15
      %p185 = scmp.lt.s32.totalorder %s184, 63
      %s186 = scalar_select %p185, %s184, 63
      %s187 = smul.addr %s186, 8
      %s188 = scalar_lea.vmem %s4, %s187
      %s189 = smul.u32 32, %s15
      %p190 = scmp.lt.s32.totalorder %s189, 63
      %s191 = scalar_select %p190, %s189, 63
      %s192 = smul.addr %s191, 8
      %s193 = scalar_lea.vmem %s0, %s192
      %s194 = smul.u32 32, %s15
      %s195 = smul.u32 32, %s15
      %p196 = scmp.lt.s32.totalorder %s195, 63
      %s197 = scalar_select %p196, %s195, 63
      %s198 = smul.addr %s197, 8
      %s199 = scalar_lea.vmem %s4, %s198
      %s200 = smul.u32 32, %s15
      %v201 = vld [vmem:[%s193] sm:$0xff]
      %v202 = vld [vmem:[%s193 + $0x8] sm:$0xff]
      %v203 = vld [vmem:[%s193 + $0x10] sm:$0xff]
      %v204 = vld [vmem:[%s193 + $0x18] sm:$0xff]
      %v205 = vld [vmem:[%s193 + $0x20] sm:$0xff]
      %v206 = vld [vmem:[%s193 + $0x28] sm:$0xff]
      %v207 = vld [vmem:[%s193 + $0x30] sm:$0xff]
      %v208 = vld [vmem:[%s193 + $0x38] sm:$0xff]
      %v209 = vld [vmem:[%s193 + $0x40] sm:$0xff]
      %v210 = vld [vmem:[%s193 + $0x48] sm:$0xff]
      %v211 = vld [vmem:[%s193 + $0x50] sm:$0xff]
      %v212 = vld [vmem:[%s193 + $0x58] sm:$0xff]
      %v213 = vld [vmem:[%s193 + $0x60] sm:$0xff]
      %v214 = vld [vmem:[%s193 + $0x68] sm:$0xff]
      %v215 = vld [vmem:[%s193 + $0x70] sm:$0xff]
      %v216 = vld [vmem:[%s193 + $0x78] sm:$0xff]
      %v217 = vld [vmem:[%s193 + $0x80] sm:$0xff]
      %v218 = vld [vmem:[%s193 + $0x88] sm:$0xff]
      %v219 = vld [vmem:[%s193 + $0x90] sm:$0xff]
      %v220 = vld [vmem:[%s193 + $0x98] sm:$0xff]
      %v221 = vld [vmem:[%s193 + $0xa0] sm:$0xff]
      %v222 = vld [vmem:[%s193 + $0xa8] sm:$0xff]
      %v223 = vld [vmem:[%s193 + $0xb0] sm:$0xff]
      %v224 = vld [vmem:[%s193 + $0xb8] sm:$0xff]
      %v225 = vld [vmem:[%s193 + $0xc0] sm:$0xff]
      %v226 = vld [vmem:[%s193 + $0xc8] sm:$0xff]
      %v227 = vld [vmem:[%s193 + $0xd0] sm:$0xff]
      %v228 = vld [vmem:[%s193 + $0xd8] sm:$0xff]
      %v229 = vld [vmem:[%s193 + $0xe0] sm:$0xff]
      %v230 = vld [vmem:[%s193 + $0xe8] sm:$0xff]
      %v231 = vld [vmem:[%s193 + $0xf0] sm:$0xff]
      %v232 = vld [vmem:[%s193 + $0xf8] sm:$0xff]
      %v233 = vld [vmem:[%s1] sm:$0xff]
      %v234 = vld [vmem:[%s1 + $0x8] sm:$0xff]
      %v235 = vld [vmem:[%s1 + $0x10] sm:$0xff]
      %v236 = vld [vmem:[%s1 + $0x18] sm:$0xff]
      %v237 = vld [vmem:[%s1 + $0x20] sm:$0xf]
      %vm238 = vcmask 293888
      %v240 = vsel %vm238, %v201, 0
      %v243 = vsel %vm238, %v202, 0
      %v246 = vsel %vm238, %v203, 0
      %v249 = vsel %vm238, %v204, 0
      %v252 = vsel %vm238, %v205, 0
      %v255 = vsel %vm238, %v206, 0
      %v258 = vsel %vm238, %v207, 0
      %v261 = vsel %vm238, %v208, 0
      %v264 = vsel %vm238, %v209, 0
      %v267 = vsel %vm238, %v210, 0
      %v270 = vsel %vm238, %v211, 0
      %v273 = vsel %vm238, %v212, 0
      %v276 = vsel %vm238, %v213, 0
      %v279 = vsel %vm238, %v214, 0
      %v282 = vsel %vm238, %v215, 0
      %v285 = vsel %vm238, %v216, 0
      %v288 = vsel %vm238, %v217, 0
      %v291 = vsel %vm238, %v218, 0
      %v294 = vsel %vm238, %v219, 0
      %v297 = vsel %vm238, %v220, 0
      %v300 = vsel %vm238, %v221, 0
      %v303 = vsel %vm238, %v222, 0
      %v306 = vsel %vm238, %v223, 0
      %v309 = vsel %vm238, %v224, 0
      %v312 = vsel %vm238, %v225, 0
      %v315 = vsel %vm238, %v226, 0
      %v318 = vsel %vm238, %v227, 0
      %v321 = vsel %vm238, %v228, 0
      %v324 = vsel %vm238, %v229, 0
      %v327 = vsel %vm238, %v230, 0
      %v330 = vsel %vm238, %v231, 0
      %v333 = vsel %vm238, %v232, 0
      %vm335 = vcmask 1043456
      %v337 = vsel %vm335, %v237, 0
      %339 = vmatprep.subr.mxu0 0.0
      %340 = vmatpush1.msra.mxu0 %v233
      %341 = vmatprep.subr.mxu0 0.0
      %342 = vmatpush1.msra.mxu0 %v234
      %343 = vmatprep.subr.mxu0 0.0
      %344 = vmatpush1.msra.mxu0 %v235
      %345 = vmatprep.subr.mxu0 0.0
      %346 = vmatpush1.msra.mxu0 %v236
      %347 = vmatprep.subr.mxu0 0.0
      %348 = vmatpush1.msra.mxu0 %v337
      %349 = vmatprep.subr.mxu0 0.0
      %350 = vmatpush1.msra.mxu0 0.0
      %351 = vmatprep.subr.mxu0 0.0
      %352 = vmatpush1.msra.mxu0 0.0
      %353 = vmatprep.subr.mxu0 0.0
      %354 = vmatpush1.msra.mxu0 0.0
      %355 = vmatprep.subr.mxu0 0.0
      %356 = vmatpush1.msra.mxu0 0.0
      %357 = vmatprep.subr.mxu0 0.0
      %358 = vmatpush1.msra.mxu0 0.0
      %359 = vmatprep.subr.mxu0 0.0
      %360 = vmatpush1.msra.mxu0 0.0
      %361 = vmatprep.subr.mxu0 0.0
      %362 = vmatpush1.msra.mxu0 0.0
      %363 = vmatprep.subr.mxu0 0.0
      %364 = vmatpush1.msra.mxu0 0.0
      %365 = vmatprep.subr.mxu0 0.0
      %366 = vmatpush1.msra.mxu0 0.0
      %367 = vmatprep.subr.mxu0 0.0
      %368 = vmatpush1.msra.mxu0 0.0
      %369 = vmatprep.subr.mxu0 0.0
      %370 = vmatpush1.msra.mxu0 0.0
      %371 = vmatprep.subr.mxu0 0.0
      %372 = vmatpush1.msra.mxu0 0.0
      %373 = vmatprep.subr.mxu0 0.0
      %374 = vmatpush1.msra.mxu0 0.0
      %375 = vmatprep.subr.mxu0 0.0
      %376 = vmatpush1.msra.mxu0 0.0
      %377 = vmatprep.subr.mxu0 0.0
      %378 = vmatpush1.msra.mxu0 0.0
      %379 = vmatprep.subr.mxu0 0.0
      %380 = vmatpush1.msra.mxu0 0.0
      %381 = vmatprep.subr.mxu0 0.0
      %382 = vmatpush1.msra.mxu0 0.0
      %383 = vmatprep.subr.mxu0 0.0
      %384 = vmatpush1.msra.mxu0 0.0
      %385 = vmatprep.subr.mxu0 0.0
      %386 = vmatpush1.msra.mxu0 0.0
      %387 = vmatprep.subr.mxu0 0.0
      %388 = vmatpush1.msra.mxu0 0.0
      %389 = vmatprep.subr.mxu0 0.0
      %390 = vmatpush1.msra.mxu0 0.0
      %391 = vmatprep.subr.mxu0 0.0
      %392 = vmatpush1.msra.mxu0 0.0
      %393 = vmatprep.subr.mxu0 0.0
      %394 = vmatpush1.msra.mxu0 0.0
      %395 = vmatprep.subr.mxu0 0.0
      %396 = vmatpush1.msra.mxu0 0.0
      %397 = vmatprep.subr.mxu0 0.0
      %398 = vmatpush1.msra.mxu0 0.0
      %399 = vmatprep.subr.mxu0 0.0
      %400 = vmatpush1.msra.mxu0 0.0
      %401 = vmatprep.subr.mxu0 0.0
      %402 = vmatpush1.msra.mxu0 0.0
      %403 = vmatprep.mubr.f32.mxu0 0.0
      %404 = vmatmul.mubr.f32.gmra.mrb[0].mxu0 %v240
      %v405 = vpop.f32.mrb[0].mxu0
      %v406 = vadd.f32 0.0, %v405
      %v407 = vpop.f32.mrb[0].mxu0
      %408 = vmatprep.mubr.f32.mxu0 0.0
      %409 = vmatmul.mubr.f32.gmra.mrb[0].mxu0 %v243
      %v410 = vpop.f32.mrb[0].mxu0
      %v411 = vadd.f32 0.0, %v410
      %v412 = vpop.f32.mrb[0].mxu0
      %413 = vmatprep.mubr.f32.mxu0 0.0
      %414 = vmatmul.mubr.f32.gmra.mrb[0].mxu0 %v246
      %v415 = vpop.f32.mrb[0].mxu0
      %v416 = vadd.f32 0.0, %v415
      %v417 = vpop.f32.mrb[0].mxu0
      %418 = vmatprep.mubr.f32.mxu0 0.0
      %419 = vmatmul.mubr.f32.gmra.mrb[0].mxu0 %v249
      %v420 = vpop.f32.mrb[0].mxu0
      %v421 = vadd.f32 0.0, %v420
      %v422 = vpop.f32.mrb[0].mxu0
      %423 = vmatprep.mubr.f32.mxu0 0.0
      %424 = vmatmul.mubr.f32.gmra.mrb[0].mxu0 %v252
      %v425 = vpop.f32.mrb[0].mxu0
      %v426 = vadd.f32 0.0, %v425
      %v427 = vpop.f32.mrb[0].mxu0
      %428 = vmatprep.mubr.f32.mxu0 0.0
      %429 = vmatmul.mubr.f32.gmra.mrb[0].mxu0 %v255
      %v430 = vpop.f32.mrb[0].mxu0
      %v431 = vadd.f32 0.0, %v430
      %v432 = vpop.f32.mrb[0].mxu0
      %433 = vmatprep.mubr.f32.mxu0 0.0
      %434 = vmatmul.mubr.f32.gmra.mrb[0].mxu0 %v258
      %v435 = vpop.f32.mrb[0].mxu0
      %v436 = vadd.f32 0.0, %v435
      %v437 = vpop.f32.mrb[0].mxu0
      %438 = vmatprep.mubr.f32.mxu0 0.0
      %439 = vmatmul.mubr.f32.gmra.mrb[0].mxu0 %v261
      %v440 = vpop.f32.mrb[0].mxu0
      %v441 = vadd.f32 0.0, %v440
      %v442 = vpop.f32.mrb[0].mxu0
      %443 = vmatprep.mubr.f32.mxu0 0.0
      %444 = vmatmul.mubr.f32.gmra.mrb[0].mxu0 %v264
      %v445 = vpop.f32.mrb[0].mxu0
      %v446 = vadd.f32 0.0, %v445
      %v447 = vpop.f32.mrb[0].mxu0
      %448 = vmatprep.mubr.f32.mxu0 0.0
      %449 = vmatmul.mubr.f32.gmra.mrb[0].mxu0 %v267
      %v450 = vpop.f32.mrb[0].mxu0
      %v451 = vadd.f32 0.0, %v450
      %v452 = vpop.f32.mrb[0].mxu0
      %453 = vmatprep.mubr.f32.mxu0 0.0
      %454 = vmatmul.mubr.f32.gmra.mrb[0].mxu0 %v270
      %v455 = vpop.f32.mrb[0].mxu0
      %v456 = vadd.f32 0.0, %v455
      %v457 = vpop.f32.mrb[0].mxu0
      %458 = vmatprep.mubr.f32.mxu0 0.0
      %459 = vmatmul.mubr.f32.gmra.mrb[0].mxu0 %v273
      %v460 = vpop.f32.mrb[0].mxu0
      %v461 = vadd.f32 0.0, %v460
      %v462 = vpop.f32.mrb[0].mxu0
      %463 = vmatprep.mubr.f32.mxu0 0.0
      %464 = vmatmul.mubr.f32.gmra.mrb[0].mxu0 %v276
      %v465 = vpop.f32.mrb[0].mxu0
      %v466 = vadd.f32 0.0, %v465
      %v467 = vpop.f32.mrb[0].mxu0
      %468 = vmatprep.mubr.f32.mxu0 0.0
      %469 = vmatmul.mubr.f32.gmra.mrb[0].mxu0 %v279
      %v470 = vpop.f32.mrb[0].mxu0
      %v471 = vadd.f32 0.0, %v470
      %v472 = vpop.f32.mrb[0].mxu0
      %473 = vmatprep.mubr.f32.mxu0 0.0
      %474 = vmatmul.mubr.f32.gmra.mrb[0].mxu0 %v282
      %v475 = vpop.f32.mrb[0].mxu0
      %v476 = vadd.f32 0.0, %v475
      %v477 = vpop.f32.mrb[0].mxu0
      %478 = vmatprep.mubr.f32.mxu0 0.0
      %479 = vmatmul.mubr.f32.gmra.mrb[0].mxu0 %v285
      %v480 = vpop.f32.mrb[0].mxu0
      %v481 = vadd.f32 0.0, %v480
      %v482 = vpop.f32.mrb[0].mxu0
      %483 = vmatprep.mubr.f32.mxu0 0.0
      %484 = vmatmul.mubr.f32.gmra.mrb[0].mxu0 %v288
      %v485 = vpop.f32.mrb[0].mxu0
      %v486 = vadd.f32 0.0, %v485
      %v487 = vpop.f32.mrb[0].mxu0
      %488 = vmatprep.mubr.f32.mxu0 0.0
      %489 = vmatmul.mubr.f32.gmra.mrb[0].mxu0 %v291
      %v490 = vpop.f32.mrb[0].mxu0
      %v491 = vadd.f32 0.0, %v490
      %v492 = vpop.f32.mrb[0].mxu0
      %493 = vmatprep.mubr.f32.mxu0 0.0
      %494 = vmatmul.mubr.f32.gmra.mrb[0].mxu0 %v294
      %v495 = vpop.f32.mrb[0].mxu0
      %v496 = vadd.f32 0.0, %v495
      %v497 = vpop.f32.mrb[0].mxu0
      %498 = vmatprep.mubr.f32.mxu0 0.0
      %499 = vmatmul.mubr.f32.gmra.mrb[0].mxu0 %v297
      %v500 = vpop.f32.mrb[0].mxu0
      %v501 = vadd.f32 0.0, %v500
      %v502 = vpop.f32.mrb[0].mxu0
      %503 = vmatprep.mubr.f32.mxu0 0.0
      %504 = vmatmul.mubr.f32.gmra.mrb[0].mxu0 %v300
      %v505 = vpop.f32.mrb[0].mxu0
      %v506 = vadd.f32 0.0, %v505
      %v507 = vpop.f32.mrb[0].mxu0
      %508 = vmatprep.mubr.f32.mxu0 0.0
      %509 = vmatmul.mubr.f32.gmra.mrb[0].mxu0 %v303
      %v510 = vpop.f32.mrb[0].mxu0
      %v511 = vadd.f32 0.0, %v510
      %v512 = vpop.f32.mrb[0].mxu0
      %513 = vmatprep.mubr.f32.mxu0 0.0
      %514 = vmatmul.mubr.f32.gmra.mrb[0].mxu0 %v306
      %v515 = vpop.f32.mrb[0].mxu0
      %v516 = vadd.f32 0.0, %v515
      %v517 = vpop.f32.mrb[0].mxu0
      %518 = vmatprep.mubr.f32.mxu0 0.0
      %519 = vmatmul.mubr.f32.gmra.mrb[0].mxu0 %v309
      %v520 = vpop.f32.mrb[0].mxu0
      %v521 = vadd.f32 0.0, %v520
      %v522 = vpop.f32.mrb[0].mxu0
      %523 = vmatprep.mubr.f32.mxu0 0.0
      %524 = vmatmul.mubr.f32.gmra.mrb[0].mxu0 %v312
      %v525 = vpop.f32.mrb[0].mxu0
      %v526 = vadd.f32 0.0, %v525
      %v527 = vpop.f32.mrb[0].mxu0
      %528 = vmatprep.mubr.f32.mxu0 0.0
      %529 = vmatmul.mubr.f32.gmra.mrb[0].mxu0 %v315
      %v530 = vpop.f32.mrb[0].mxu0
      %v531 = vadd.f32 0.0, %v530
      %v532 = vpop.f32.mrb[0].mxu0
      %533 = vmatprep.mubr.f32.mxu0 0.0
      %534 = vmatmul.mubr.f32.gmra.mrb[0].mxu0 %v318
      %v535 = vpop.f32.mrb[0].mxu0
      %v536 = vadd.f32 0.0, %v535
      %v537 = vpop.f32.mrb[0].mxu0
      %538 = vmatprep.mubr.f32.mxu0 0.0
      %539 = vmatmul.mubr.f32.gmra.mrb[0].mxu0 %v321
      %v540 = vpop.f32.mrb[0].mxu0
      %v541 = vadd.f32 0.0, %v540
      %v542 = vpop.f32.mrb[0].mxu0
      %543 = vmatprep.mubr.f32.mxu0 0.0
      %544 = vmatmul.mubr.f32.gmra.mrb[0].mxu0 %v324
      %v545 = vpop.f32.mrb[0].mxu0
      %v546 = vadd.f32 0.0, %v545
      %v547 = vpop.f32.mrb[0].mxu0
      %548 = vmatprep.mubr.f32.mxu0 0.0
      %549 = vmatmul.mubr.f32.gmra.mrb[0].mxu0 %v327
      %v550 = vpop.f32.mrb[0].mxu0
      %v551 = vadd.f32 0.0, %v550
      %v552 = vpop.f32.mrb[0].mxu0
      %553 = vmatprep.mubr.f32.mxu0 0.0
      %554 = vmatmul.mubr.f32.gmra.mrb[0].mxu0 %v330
      %v555 = vpop.f32.mrb[0].mxu0
      %v556 = vadd.f32 0.0, %v555
      %v557 = vpop.f32.mrb[0].mxu0
      %558 = vmatprep.mubr.f32.mxu0 0.0
      %559 = vmatmul.mubr.f32.gmra.mrb[0].mxu0 %v333
      %v560 = vpop.f32.mrb[0].mxu0
      %v561 = vadd.f32 0.0, %v560
      %v562 = vpop.f32.mrb[0].mxu0
      %563 = vdwg.mxu0
      %v564 = vld [vmem:[%s2] sm:$0x1]
      %v566 = vlaneseq
      %v567 = vshrl.u32 %v566, 7
      %v568 = vsub.s32 0, %v567
      %v569 = vrot.slane %v564, %v568
      %v571 = vmul.f32 %v406, %v569
      %v572 = vmul.f32 %v411, %v569
      %v573 = vmul.f32 %v416, %v569
      %v574 = vmul.f32 %v421, %v569
      %v575 = vmul.f32 %v426, %v569
      %v576 = vmul.f32 %v431, %v569
      %v577 = vmul.f32 %v436, %v569
      %v578 = vmul.f32 %v441, %v569
      %v579 = vmul.f32 %v446, %v569
      %v580 = vmul.f32 %v451, %v569
      %v581 = vmul.f32 %v456, %v569
      %v582 = vmul.f32 %v461, %v569
      %v583 = vmul.f32 %v466, %v569
      %v584 = vmul.f32 %v471, %v569
      %v585 = vmul.f32 %v476, %v569
      %v586 = vmul.f32 %v481, %v569
      %v587 = vmul.f32 %v486, %v569
      %v588 = vmul.f32 %v491, %v569
      %v589 = vmul.f32 %v496, %v569
      %v590 = vmul.f32 %v501, %v569
      %v591 = vmul.f32 %v506, %v569
      %v592 = vmul.f32 %v511, %v569
      %v593 = vmul.f32 %v516, %v569
      %v594 = vmul.f32 %v521, %v569
      %v595 = vmul.f32 %v526, %v569
      %v596 = vmul.f32 %v531, %v569
      %v597 = vmul.f32 %v536, %v569
      %v598 = vmul.f32 %v541, %v569
      %v599 = vmul.f32 %v546, %v569
      %v600 = vmul.f32 %v551, %v569
      %v601 = vmul.f32 %v556, %v569
      %v602 = vmul.f32 %v561, %v569
      %v603 = vld [vmem:[%s3] sm:$0x1]
      %v605 = vlaneseq
      %v606 = vshrl.u32 %v605, 7
      %v607 = vsub.s32 0, %v606
      %v608 = vrot.slane %v603, %v607
      %v610 = vadd.f32 %v571, %v608
      %v611 = vadd.f32 %v572, %v608
      %v612 = vadd.f32 %v573, %v608
      %v613 = vadd.f32 %v574, %v608
      %v614 = vadd.f32 %v575, %v608
      %v615 = vadd.f32 %v576, %v608
      %v616 = vadd.f32 %v577, %v608
      %v617 = vadd.f32 %v578, %v608
      %v618 = vadd.f32 %v579, %v608
      %v619 = vadd.f32 %v580, %v608
      %v620 = vadd.f32 %v581, %v608
      %v621 = vadd.f32 %v582, %v608
      %v622 = vadd.f32 %v583, %v608
      %v623 = vadd.f32 %v584, %v608
      %v624 = vadd.f32 %v585, %v608
      %v625 = vadd.f32 %v586, %v608
      %v626 = vadd.f32 %v587, %v608
      %v627 = vadd.f32 %v588, %v608
      %v628 = vadd.f32 %v589, %v608
      %v629 = vadd.f32 %v590, %v608
      %v630 = vadd.f32 %v591, %v608
      %v631 = vadd.f32 %v592, %v608
      %v632 = vadd.f32 %v593, %v608
      %v633 = vadd.f32 %v594, %v608
      %v634 = vadd.f32 %v595, %v608
      %v635 = vadd.f32 %v596, %v608
      %v636 = vadd.f32 %v597, %v608
      %v637 = vadd.f32 %v598, %v608
      %v638 = vadd.f32 %v599, %v608
      %v639 = vadd.f32 %v600, %v608
      %v640 = vadd.f32 %v601, %v608
      %v641 = vadd.f32 %v602, %v608
      %v642 = vmax.f32 %v610, 0.0
      %v643 = vmax.f32 %v611, 0.0
      %v644 = vmax.f32 %v612, 0.0
      %v645 = vmax.f32 %v613, 0.0
      %v646 = vmax.f32 %v614, 0.0
      %v647 = vmax.f32 %v615, 0.0
      %v648 = vmax.f32 %v616, 0.0
      %v649 = vmax.f32 %v617, 0.0
      %v650 = vmax.f32 %v618, 0.0
      %v651 = vmax.f32 %v619, 0.0
      %v652 = vmax.f32 %v620, 0.0
      %v653 = vmax.f32 %v621, 0.0
      %v654 = vmax.f32 %v622, 0.0
      %v655 = vmax.f32 %v623, 0.0
      %v656 = vmax.f32 %v624, 0.0
      %v657 = vmax.f32 %v625, 0.0
      %v658 = vmax.f32 %v626, 0.0
      %v659 = vmax.f32 %v627, 0.0
      %v660 = vmax.f32 %v628, 0.0
      %v661 = vmax.f32 %v629, 0.0
      %v662 = vmax.f32 %v630, 0.0
      %v663 = vmax.f32 %v631, 0.0
      %v664 = vmax.f32 %v632, 0.0
      %v665 = vmax.f32 %v633, 0.0
      %v666 = vmax.f32 %v634, 0.0
      %v667 = vmax.f32 %v635, 0.0
      %v668 = vmax.f32 %v636, 0.0
      %v669 = vmax.f32 %v637, 0.0
      %v670 = vmax.f32 %v638, 0.0
      %v671 = vmax.f32 %v639, 0.0
      %v672 = vmax.f32 %v640, 0.0
      %v673 = vmax.f32 %v641, 0.0
      %vm674 = vcmask 31744
      %675 = vst.msk [vmem:[%s199] sm:$0xff] %vm674, %v642
      %676 = vst.msk [vmem:[%s199 + $0x8] sm:$0xff] %vm674, %v643
      %677 = vst.msk [vmem:[%s199 + $0x10] sm:$0xff] %vm674, %v644
      %678 = vst.msk [vmem:[%s199 + $0x18] sm:$0xff] %vm674, %v645
      %679 = vst.msk [vmem:[%s199 + $0x20] sm:$0xff] %vm674, %v646
      %680 = vst.msk [vmem:[%s199 + $0x28] sm:$0xff] %vm674, %v647
      %681 = vst.msk [vmem:[%s199 + $0x30] sm:$0xff] %vm674, %v648
      %682 = vst.msk [vmem:[%s199 + $0x38] sm:$0xff] %vm674, %v649
      %683 = vst.msk [vmem:[%s199 + $0x40] sm:$0xff] %vm674, %v650
      %684 = vst.msk [vmem:[%s199 + $0x48] sm:$0xff] %vm674, %v651
      %685 = vst.msk [vmem:[%s199 + $0x50] sm:$0xff] %vm674, %v652
      %686 = vst.msk [vmem:[%s199 + $0x58] sm:$0xff] %vm674, %v653
      %687 = vst.msk [vmem:[%s199 + $0x60] sm:$0xff] %vm674, %v654
      %688 = vst.msk [vmem:[%s199 + $0x68] sm:$0xff] %vm674, %v655
      %689 = vst.msk [vmem:[%s199 + $0x70] sm:$0xff] %vm674, %v656
      %690 = vst.msk [vmem:[%s199 + $0x78] sm:$0xff] %vm674, %v657
      %691 = vst.msk [vmem:[%s199 + $0x80] sm:$0xff] %vm674, %v658
      %692 = vst.msk [vmem:[%s199 + $0x88] sm:$0xff] %vm674, %v659
      %693 = vst.msk [vmem:[%s199 + $0x90] sm:$0xff] %vm674, %v660
      %694 = vst.msk [vmem:[%s199 + $0x98] sm:$0xff] %vm674, %v661
      %695 = vst.msk [vmem:[%s199 + $0xa0] sm:$0xff] %vm674, %v662
      %696 = vst.msk [vmem:[%s199 + $0xa8] sm:$0xff] %vm674, %v663
      %697 = vst.msk [vmem:[%s199 + $0xb0] sm:$0xff] %vm674, %v664
      %698 = vst.msk [vmem:[%s199 + $0xb8] sm:$0xff] %vm674, %v665
      %699 = vst.msk [vmem:[%s199 + $0xc0] sm:$0xff] %vm674, %v666
      %700 = vst.msk [vmem:[%s199 + $0xc8] sm:$0xff] %vm674, %v667
      %701 = vst.msk [vmem:[%s199 + $0xd0] sm:$0xff] %vm674, %v668
      %702 = vst.msk [vmem:[%s199 + $0xd8] sm:$0xff] %vm674, %v669
      %703 = vst.msk [vmem:[%s199 + $0xe0] sm:$0xff] %vm674, %v670
      %704 = vst.msk [vmem:[%s199 + $0xe8] sm:$0xff] %vm674, %v671
      %705 = vst.msk [vmem:[%s199 + $0xf0] sm:$0xff] %vm674, %v672
      %706 = vst.msk [vmem:[%s199 + $0xf8] sm:$0xff] %vm674, %v673
      %s707 = smul.u32 32, %s15
      %p708 = scmp.lt.s32.totalorder %s707, 63
      %s709 = scalar_select %p708, %s707, 63
      %s710 = smul.addr %s709, 8
      %s711 = scalar_lea.vmem %s4, %s710
      // Predicated region
      $region37: #{statistic_attention_forward.5} parent=35 // pred_check
        %p712 = pneg %p122
      $region38: #{statistic_attention_forward.5} parent=35 // pred_check_branch
        %714 = sbr.rel (%p712) target = $region40
      $region39: #{statistic_attention_forward.5} parent=35 // pred_region
        %s715 = smul.u32 32, %s15
      $region40: #{statistic_attention_forward.5} parent=35 // pred_fallthru
        _
    $region36: #{statistic_attention_forward.5} parent=5 // pred_fallthru
      _
    %p716 = scmp.le.s32.totalorder 2, %s10
    // Predicated region
    $region41: #{statistic_attention_forward.5} parent=5 // pred_check
      %p717 = pneg %p716
    $region42: #{statistic_attention_forward.5} parent=5 // pred_check_branch
      %719 = sbr.rel (%p717) target = $region44
    $region43: #{statistic_attention_forward.5} parent=5 // pred_region
      %s720 = ssub.s32 %s10, 2
      // Predicated region
      $region45: #{statistic_attention_forward.5} parent=43 // pred_check
        %p721 = pneg %p128
      $region46: #{statistic_attention_forward.5} parent=43 // pred_check_branch
        %723 = sbr.rel (%p721) target = $region48
      $region47: #{statistic_attention_forward.5} parent=43 // pred_region
        %s724 = smul.u32 32, %s16
        %p725 = scmp.lt.s32.totalorder %s724, 63
        %s726 = scalar_select %p725, %s724, 63
        %s727 = smul.addr %s726, 8
        %s728 = scalar_lea.vmem %s4, %s727
      $region48: #{statistic_attention_forward.5} parent=43 // pred_fallthru
        _
    $region44: #{statistic_attention_forward.5} parent=5 // pred_fallthru
      _
  $region6: #{statistic_attention_forward.5} parent=0 // loop_footer
    %s14 = sadd.s32 1, %s10
  $region7: #{statistic_attention_forward.5} parent=0 // loop_footer_branch
    %9 = sbr.rel target = $region3
  $region8: #{statistic_attention_forward.5} parent=0 // loop_exit
    _

// kernel: statistic_attention_forward.6
$region0: #{statistic_attention_forward.6}
  #allocation0 [shape = 'u32[]', space=smem, size = 0x4, offset = 0x4, fixed_abs, tag = 'smem constant byte address 0x4 - core index']
  #allocation1 [shape = 'u32[144,128]{1,0:T(1,128)}', space=vmem, size = 0x12000, scoped, tag = 'internal scratch']
  #allocation2 [shape = 'f32[1,1]{1,0:T(1,128)S(1)}', space=vmem, size = 0x200, scoped, tag = 'scoped memory for statistic_attention_forward.6']
  %s0 = inlined_call_operand.vmem [shape: f32[512,36], index: 0, kind: input, shape index: {}]
  %s1 = inlined_call_operand.vmem [shape: f32[1,36], index: 1, kind: input, shape index: {}]
  %s2 = inlined_call_operand.<no memory space> [shape: f32[1,1], index: 2, kind: input, shape index: {}]
  %s3 = inlined_call_operand.vmem [shape: f32[512,8], index: 3, kind: input, shape index: {}]
  %s4 = inlined_call_operand.vmem [shape: f32[512,1], index: 4, kind: output, shape index: {0}]
  %s5 = inlined_call_operand.vmem [shape: f32[512,8], index: 5, kind: output, shape index: {1}]
  %6 = xla_tuple %s4, %s5
  %s7 = sld [smem:[#allocation0]]
  $region57: #{statistic_attention_forward.6} parent=0
    _
  %s9 = ssub.s32 1, %s7
  %s10 = scalar_select 0, %s9, %s7
  %v11 = vstv %s2
  %12 = vst [vmem:[#allocation2] sm:$0x1] %v11
  loop: start=0, step=1, limit=4
  $region2: #{statistic_attention_forward.6} parent=0 // loop_pre_header
    _
  $region3: #{statistic_attention_forward.6} parent=0 // loop_header
    %s14 = sphi 0, %s18
    %p15 = scmp.ge.s32.totalorder %s14, 4
    %s24 = sphi 0, %s26
    %s27 = sphi 0, %s24
    %s28 = sphi 0, %s27
    %s44 = sphi 0, %s28
    %s48 = sphi 0, %s48
    %s50 = sphi 0, %s48
    %s51 = sphi 0, %s50
    %s65 = sphi 0, %s51
    %s69 = sphi 0, %s69
    %s71 = sphi 0, %s69
    %s72 = sphi 0, %s71
    %s86 = sphi 0, %s72
    %s92 = sphi 0, %s94
    %s95 = sphi 0, %s92
    %s96 = sphi 0, %s95
    %s112 = sphi 0, %s96
    %s118 = sphi 0, %s120
    %s121 = sphi 0, %s118
    %s122 = sphi 0, %s121
    %s138 = sphi 0, %s122
    %s144 = sphi 0, %s146
    %s147 = sphi 0, %s144
    %s148 = sphi 0, %s147
    %s164 = sphi 0, %s148
  $region4: #{statistic_attention_forward.6} parent=0 // loop_header_branch
    %17 = sbr.rel (%p15) target = $region8
  $region5: #{statistic_attention_forward.6} parent=0 // loop_body
    %s19 = ssub.s32 %s14, 1
    %s20 = ssub.s32 %s14, 2
    %s21 = sadd.s32 %s14, 1
    %s22 = ssub.s32 %s14, %s21
    %p23 = scmp.eq.s32.totalorder %s22, 0
    %s25 = sadd.s32 %s24, 1
    %s26 = scalar_select %p23, %s24, %s25
    %p29 = pneg %p23
    %p30 = scmp.eq.s32.totalorder %s14, 1
    %p31 = por %p29, %p30
    %p32 = scmp.ne.s32.totalorder %s24, %s27
    %p33 = scmp.eq.s32.totalorder %s14, 0
    %p34 = por %p32, %p33
    %p35 = scmp.ne.s32.totalorder %s24, %s27
    %p36 = scmp.eq.s32.totalorder %s19, 1
    %p37 = por %p35, %p36
    %p38 = scmp.ne.s32.totalorder %s27, %s28
    %p39 = scmp.eq.s32.totalorder %s19, 0
    %p40 = por %p38, %p39
    %p41 = scmp.ne.s32.totalorder %s27, %s28
    %p42 = scmp.eq.s32.totalorder %s20, 1
    %p43 = por %p41, %p42
    %p45 = scmp.ne.s32.totalorder %s28, %s44
    %p46 = scmp.eq.s32.totalorder %s20, 0
    %p47 = por %p45, %p46
    %s49 = sadd.s32 %s48, 1
    %p52 = scmp.eq.s32.totalorder %s14, 1
    %p53 = scmp.ne.s32.totalorder %s48, %s50
    %p54 = scmp.eq.s32.totalorder %s14, 0
    %p55 = por %p53, %p54
    %p56 = scmp.ne.s32.totalorder %s48, %s50
    %p57 = scmp.eq.s32.totalorder %s19, 1
    %p58 = por %p56, %p57
    %p59 = scmp.ne.s32.totalorder %s50, %s51
    %p60 = scmp.eq.s32.totalorder %s19, 0
    %p61 = por %p59, %p60
    %p62 = scmp.ne.s32.totalorder %s50, %s51
    %p63 = scmp.eq.s32.totalorder %s20, 1
    %p64 = por %p62, %p63
    %p66 = scmp.ne.s32.totalorder %s51, %s65
    %p67 = scmp.eq.s32.totalorder %s20, 0
    %p68 = por %p66, %p67
    %s70 = sadd.s32 %s69, 1
    %p73 = scmp.eq.s32.totalorder %s14, 1
    %p74 = scmp.ne.s32.totalorder %s69, %s71
    %p75 = scmp.eq.s32.totalorder %s14, 0
    %p76 = por %p74, %p75
    %p77 = scmp.ne.s32.totalorder %s69, %s71
    %p78 = scmp.eq.s32.totalorder %s19, 1
    %p79 = por %p77, %p78
    %p80 = scmp.ne.s32.totalorder %s71, %s72
    %p81 = scmp.eq.s32.totalorder %s19, 0
    %p82 = por %p80, %p81
    %p83 = scmp.ne.s32.totalorder %s71, %s72
    %p84 = scmp.eq.s32.totalorder %s20, 1
    %p85 = por %p83, %p84
    %p87 = scmp.ne.s32.totalorder %s72, %s86
    %p88 = scmp.eq.s32.totalorder %s20, 0
    %p89 = por %p87, %p88
    %s90 = ssub.s32 %s14, %s21
    %p91 = scmp.eq.s32.totalorder %s90, 0
    %s93 = sadd.s32 %s92, 1
    %s94 = scalar_select %p91, %s92, %s93
    %p97 = pneg %p91
    %p98 = scmp.eq.s32.totalorder %s14, 1
    %p99 = por %p97, %p98
    %p100 = scmp.ne.s32.totalorder %s92, %s95
    %p101 = scmp.eq.s32.totalorder %s14, 0
    %p102 = por %p100, %p101
    %p103 = scmp.ne.s32.totalorder %s92, %s95
    %p104 = scmp.eq.s32.totalorder %s19, 1
    %p105 = por %p103, %p104
    %p106 = scmp.ne.s32.totalorder %s95, %s96
    %p107 = scmp.eq.s32.totalorder %s19, 0
    %p108 = por %p106, %p107
    %p109 = scmp.ne.s32.totalorder %s95, %s96
    %p110 = scmp.eq.s32.totalorder %s20, 1
    %p111 = por %p109, %p110
    %p113 = scmp.ne.s32.totalorder %s96, %s112
    %p114 = scmp.eq.s32.totalorder %s20, 0
    %p115 = por %p113, %p114
    %s116 = ssub.s32 %s14, %s21
    %p117 = scmp.eq.s32.totalorder %s116, 0
    %s119 = sadd.s32 %s118, 1
    %s120 = scalar_select %p117, %s118, %s119
    %p123 = pneg %p117
    %p124 = scmp.eq.s32.totalorder %s14, 1
    %p125 = por %p123, %p124
    %p126 = scmp.ne.s32.totalorder %s118, %s121
    %p127 = scmp.eq.s32.totalorder %s14, 0
    %p128 = por %p126, %p127
    %p129 = scmp.ne.s32.totalorder %s118, %s121
    %p130 = scmp.eq.s32.totalorder %s19, 1
    %p131 = por %p129, %p130
    %p132 = scmp.ne.s32.totalorder %s121, %s122
    %p133 = scmp.eq.s32.totalorder %s19, 0
    %p134 = por %p132, %p133
    %p135 = scmp.ne.s32.totalorder %s121, %s122
    %p136 = scmp.eq.s32.totalorder %s20, 1
    %p137 = por %p135, %p136
    %p139 = scmp.ne.s32.totalorder %s122, %s138
    %p140 = scmp.eq.s32.totalorder %s20, 0
    %p141 = por %p139, %p140
    %s142 = ssub.s32 %s14, %s21
    %p143 = scmp.eq.s32.totalorder %s142, 0
    %s145 = sadd.s32 %s144, 1
    %s146 = scalar_select %p143, %s144, %s145
    %p149 = pneg %p143
    %p150 = scmp.eq.s32.totalorder %s14, 1
    %p151 = por %p149, %p150
    %p152 = scmp.ne.s32.totalorder %s144, %s147
    %p153 = scmp.eq.s32.totalorder %s14, 0
    %p154 = por %p152, %p153
    %p155 = scmp.ne.s32.totalorder %s144, %s147
    %p156 = scmp.eq.s32.totalorder %s19, 1
    %p157 = por %p155, %p156
    %p158 = scmp.ne.s32.totalorder %s147, %s148
    %p159 = scmp.eq.s32.totalorder %s19, 0
    %p160 = por %p158, %p159
    %p161 = scmp.ne.s32.totalorder %s147, %s148
    %p162 = scmp.eq.s32.totalorder %s20, 1
    %p163 = por %p161, %p162
    %p165 = scmp.ne.s32.totalorder %s148, %s164
    %p166 = scmp.eq.s32.totalorder %s20, 0
    %p167 = por %p165, %p166
    %p168 = scmp.le.s32.totalorder 1, %s14
    %p169 = scmp.lt.s32.totalorder %s14, 3
    %p170 = pnand %p168, %p169
    %p171 = pneg %p170
    // Predicated region
    $region9: #{statistic_attention_forward.6} parent=5 // pred_check
      _
    $region10: #{statistic_attention_forward.6} parent=5 // pred_check_branch
      %173 = sbr.rel (%p170) target = $region12
    $region11: #{statistic_attention_forward.6} parent=5 // pred_region
      %s174 = ssub.s32 %s14, 1
      // Predicated region
      $region13: #{statistic_attention_forward.6} parent=11 // pred_check
        %p175 = pneg %p61
      $region14: #{statistic_attention_forward.6} parent=11 // pred_check_branch
        %177 = sbr.rel (%p175) target = $region16
      $region15: #{statistic_attention_forward.6} parent=11 // pred_region
        _
      $region16: #{statistic_attention_forward.6} parent=11 // pred_fallthru
        _
      // Predicated region
      $region17: #{statistic_attention_forward.6} parent=11 // pred_check
        %p178 = pneg %p82
      $region18: #{statistic_attention_forward.6} parent=11 // pred_check_branch
        %180 = sbr.rel (%p178) target = $region20
      $region19: #{statistic_attention_forward.6} parent=11 // pred_region
        _
      $region20: #{statistic_attention_forward.6} parent=11 // pred_fallthru
        _
    $region12: #{statistic_attention_forward.6} parent=5 // pred_fallthru
      _
    %p181 = scmp.lt.s32.totalorder %s14, 2
    // Predicated region
    $region21: #{statistic_attention_forward.6} parent=5 // pred_check
      %p182 = pneg %p181
    $region22: #{statistic_attention_forward.6} parent=5 // pred_check_branch
      %184 = sbr.rel (%p182) target = $region24
    $region23: #{statistic_attention_forward.6} parent=5 // pred_region
      // Predicated region
      $region25: #{statistic_attention_forward.6} parent=23 // pred_check
        %p185 = pneg %p34
      $region26: #{statistic_attention_forward.6} parent=23 // pred_check_branch
        %187 = sbr.rel (%p185) target = $region28
      $region27: #{statistic_attention_forward.6} parent=23 // pred_region
        %s188 = smul.u32 32, %s14
        %p189 = scmp.lt.s32.totalorder %s188, 63
        %s190 = scalar_select %p189, %s188, 63
        %s191 = smul.addr %s190, 8
        %s192 = scalar_lea.vmem %s0, %s191
        %s193 = smul.u32 32, %s14
      $region28: #{statistic_attention_forward.6} parent=23 // pred_fallthru
        _
      // Predicated region
      $region29: #{statistic_attention_forward.6} parent=23 // pred_check
        %p194 = pneg %p102
      $region30: #{statistic_attention_forward.6} parent=23 // pred_check_branch
        %196 = sbr.rel (%p194) target = $region32
      $region31: #{statistic_attention_forward.6} parent=23 // pred_region
        %s197 = smul.u32 32, %s14
        %p198 = scmp.lt.s32.totalorder %s197, 63
        %s199 = scalar_select %p198, %s197, 63
        %s200 = smul.addr %s199, 8
        %s201 = scalar_lea.vmem %s3, %s200
        %s202 = smul.u32 32, %s14
      $region32: #{statistic_attention_forward.6} parent=23 // pred_fallthru
        _
    $region24: #{statistic_attention_forward.6} parent=5 // pred_fallthru
      _
    %p203 = scmp.le.s32.totalorder 1, %s14
    %p204 = scmp.lt.s32.totalorder %s14, 3
    %p205 = pnand %p203, %p204
    %p206 = pneg %p205
    // Predicated region
    $region33: #{statistic_attention_forward.6} parent=5 // pred_check
      _
    $region34: #{statistic_attention_forward.6} parent=5 // pred_check_branch
      %208 = sbr.rel (%p205) target = $region36
    $region35: #{statistic_attention_forward.6} parent=5 // pred_region
      %s209 = ssub.s32 %s14, 1
      %s210 = smul.u32 32, %s19
      %p211 = scmp.lt.s32.totalorder %s210, 63
      %s212 = scalar_select %p211, %s210, 63
      %s213 = smul.addr %s212, 8
      %s214 = scalar_lea.vmem %s0, %s213
      %p215 = pneg %p40
      %p216 = pneg %p37
      %p217 = pneg %p61
      %p218 = pneg %p58
      %p219 = pneg %p82
      %p220 = pneg %p79
      %s221 = smul.u32 32, %s19
      %p222 = scmp.lt.s32.totalorder %s221, 63
      %s223 = scalar_select %p222, %s221, 63
      %s224 = smul.addr %s223, 8
      %s225 = scalar_lea.vmem %s3, %s224
      %p226 = pneg %p108
      %p227 = pneg %p105
      %p228 = pneg %p134
      %p229 = pneg %p131
      %s230 = smul.u32 32, %s19
      %p231 = scmp.lt.s32.totalorder %s230, 63
      %s232 = scalar_select %p231, %s230, 63
      %s233 = smul.addr %s232, 8
      %s234 = scalar_lea.vmem %s4, %s233
      %p235 = pneg %p160
      %p236 = pneg %p157
      %s237 = smul.u32 32, %s19
      %p238 = scmp.lt.s32.totalorder %s237, 63
      %s239 = scalar_select %p238, %s237, 63
      %s240 = smul.addr %s239, 8
      %s241 = scalar_lea.vmem %s5, %s240
      %s242 = smul.u32 32, %s19
      %p243 = scmp.lt.s32.totalorder %s242, 63
      %s244 = scalar_select %p243, %s242, 63
      %s245 = smul.addr %s244, 8
      %s246 = scalar_lea.vmem %s0, %s245
      %s247 = smul.u32 32, %s19
      %s248 = smul.u32 32, %s19
      %p249 = scmp.lt.s32.totalorder %s248, 63
      %s250 = scalar_select %p249, %s248, 63
      %s251 = smul.addr %s250, 8
      %s252 = scalar_lea.vmem %s3, %s251
      %s253 = smul.u32 32, %s19
      %s254 = smul.u32 32, %s19
      %p255 = scmp.lt.s32.totalorder %s254, 63
      %s256 = scalar_select %p255, %s254, 63
      %s257 = smul.addr %s256, 8
      %s258 = scalar_lea.vmem %s4, %s257
      %s259 = smul.u32 32, %s19
      %s260 = smul.u32 32, %s19
      %p261 = scmp.lt.s32.totalorder %s260, 63
      %s262 = scalar_select %p261, %s260, 63
      %s263 = smul.addr %s262, 8
      %s264 = scalar_lea.vmem %s5, %s263
      %s265 = smul.u32 32, %s19
      %v266 = vld [vmem:[%s246] sm:$0xff]
      %v267 = vld [vmem:[%s246 + $0x8] sm:$0xff]
      %v268 = vld [vmem:[%s246 + $0x10] sm:$0xff]
      %v269 = vld [vmem:[%s246 + $0x18] sm:$0xff]
      %v270 = vld [vmem:[%s246 + $0x20] sm:$0xff]
      %v271 = vld [vmem:[%s246 + $0x28] sm:$0xff]
      %v272 = vld [vmem:[%s246 + $0x30] sm:$0xff]
      %v273 = vld [vmem:[%s246 + $0x38] sm:$0xff]
      %v274 = vld [vmem:[%s246 + $0x40] sm:$0xff]
      %v275 = vld [vmem:[%s246 + $0x48] sm:$0xff]
      %v276 = vld [vmem:[%s246 + $0x50] sm:$0xff]
      %v277 = vld [vmem:[%s246 + $0x58] sm:$0xff]
      %v278 = vld [vmem:[%s246 + $0x60] sm:$0xff]
      %v279 = vld [vmem:[%s246 + $0x68] sm:$0xff]
      %v280 = vld [vmem:[%s246 + $0x70] sm:$0xff]
      %v281 = vld [vmem:[%s246 + $0x78] sm:$0xff]
      %v282 = vld [vmem:[%s246 + $0x80] sm:$0xff]
      %v283 = vld [vmem:[%s246 + $0x88] sm:$0xff]
      %v284 = vld [vmem:[%s246 + $0x90] sm:$0xff]
      %v285 = vld [vmem:[%s246 + $0x98] sm:$0xff]
      %v286 = vld [vmem:[%s246 + $0xa0] sm:$0xff]
      %v287 = vld [vmem:[%s246 + $0xa8] sm:$0xff]
      %v288 = vld [vmem:[%s246 + $0xb0] sm:$0xff]
      %v289 = vld [vmem:[%s246 + $0xb8] sm:$0xff]
      %v290 = vld [vmem:[%s246 + $0xc0] sm:$0xff]
      %v291 = vld [vmem:[%s246 + $0xc8] sm:$0xff]
      %v292 = vld [vmem:[%s246 + $0xd0] sm:$0xff]
      %v293 = vld [vmem:[%s246 + $0xd8] sm:$0xff]
      %v294 = vld [vmem:[%s246 + $0xe0] sm:$0xff]
      %v295 = vld [vmem:[%s246 + $0xe8] sm:$0xff]
      %v296 = vld [vmem:[%s246 + $0xf0] sm:$0xff]
      %v297 = vld [vmem:[%s246 + $0xf8] sm:$0xff]
      %v298 = vld [vmem:[%s1] sm:$0x1]
      %v300 = vlaneseq
      %v301 = vshrl.u32 %v300, 7
      %v302 = vsub.s32 0, %v301
      %v303 = vrot.slane %v298, %v302
      %v305 = vmul.f32 %v266, %v303
      %v306 = vmul.f32 %v267, %v303
      %v307 = vmul.f32 %v268, %v303
      %v308 = vmul.f32 %v269, %v303
      %v309 = vmul.f32 %v270, %v303
      %v310 = vmul.f32 %v271, %v303
      %v311 = vmul.f32 %v272, %v303
      %v312 = vmul.f32 %v273, %v303
      %v313 = vmul.f32 %v274, %v303
      %v314 = vmul.f32 %v275, %v303
      %v315 = vmul.f32 %v276, %v303
      %v316 = vmul.f32 %v277, %v303
      %v317 = vmul.f32 %v278, %v303
      %v318 = vmul.f32 %v279, %v303
      %v319 = vmul.f32 %v280, %v303
      %v320 = vmul.f32 %v281, %v303
      %v321 = vmul.f32 %v282, %v303
      %v322 = vmul.f32 %v283, %v303
      %v323 = vmul.f32 %v284, %v303
      %v324 = vmul.f32 %v285, %v303
      %v325 = vmul.f32 %v286, %v303
      %v326 = vmul.f32 %v287, %v303
      %v327 = vmul.f32 %v288, %v303
      %v328 = vmul.f32 %v289, %v303
      %v329 = vmul.f32 %v290, %v303
      %v330 = vmul.f32 %v291, %v303
      %v331 = vmul.f32 %v292, %v303
      %v332 = vmul.f32 %v293, %v303
      %v333 = vmul.f32 %v294, %v303
      %v334 = vmul.f32 %v295, %v303
      %v335 = vmul.f32 %v296, %v303
      %v336 = vmul.f32 %v297, %v303
      %vm337 = vcmask 293888
      %v338 = vsel %vm337, %v305, 0.0
      %339 = vadd.xlane.f32.xlu0 %v338
      %v340 = vpop.xlane.xlu0 %339
      %v341 = vsel %vm337, %v306, 0.0
      %342 = vadd.xlane.f32.xlu0 %v341
      %v343 = vpop.xlane.xlu0 %342
      %v344 = vsel %vm337, %v307, 0.0
      %345 = vadd.xlane.f32.xlu0 %v344
      %v346 = vpop.xlane.xlu0 %345
      %v347 = vsel %vm337, %v308, 0.0
      %348 = vadd.xlane.f32.xlu0 %v347
      %v349 = vpop.xlane.xlu0 %348
      %v350 = vsel %vm337, %v309, 0.0
      %351 = vadd.xlane.f32.xlu0 %v350
      %v352 = vpop.xlane.xlu0 %351
      %v353 = vsel %vm337, %v310, 0.0
      %354 = vadd.xlane.f32.xlu0 %v353
      %v355 = vpop.xlane.xlu0 %354
      %v356 = vsel %vm337, %v311, 0.0
      %357 = vadd.xlane.f32.xlu0 %v356
      %v358 = vpop.xlane.xlu0 %357
      %v359 = vsel %vm337, %v312, 0.0
      %360 = vadd.xlane.f32.xlu0 %v359
      %v361 = vpop.xlane.xlu0 %360
      %v362 = vsel %vm337, %v313, 0.0
      %363 = vadd.xlane.f32.xlu0 %v362
      %v364 = vpop.xlane.xlu0 %363
      %v365 = vsel %vm337, %v314, 0.0
      %366 = vadd.xlane.f32.xlu0 %v365
      %v367 = vpop.xlane.xlu0 %366
      %v368 = vsel %vm337, %v315, 0.0
      %369 = vadd.xlane.f32.xlu0 %v368
      %v370 = vpop.xlane.xlu0 %369
      %v371 = vsel %vm337, %v316, 0.0
      %372 = vadd.xlane.f32.xlu0 %v371
      %v373 = vpop.xlane.xlu0 %372
      %v374 = vsel %vm337, %v317, 0.0
      %375 = vadd.xlane.f32.xlu0 %v374
      %v376 = vpop.xlane.xlu0 %375
      %v377 = vsel %vm337, %v318, 0.0
      %378 = vadd.xlane.f32.xlu0 %v377
      %v379 = vpop.xlane.xlu0 %378
      %v380 = vsel %vm337, %v319, 0.0
      %381 = vadd.xlane.f32.xlu0 %v380
      %v382 = vpop.xlane.xlu0 %381
      %v383 = vsel %vm337, %v320, 0.0
      %384 = vadd.xlane.f32.xlu0 %v383
      %v385 = vpop.xlane.xlu0 %384
      %v386 = vsel %vm337, %v321, 0.0
      %387 = vadd.xlane.f32.xlu0 %v386
      %v388 = vpop.xlane.xlu0 %387
      %v389 = vsel %vm337, %v322, 0.0
      %390 = vadd.xlane.f32.xlu0 %v389
      %v391 = vpop.xlane.xlu0 %390
      %v392 = vsel %vm337, %v323, 0.0
      %393 = vadd.xlane.f32.xlu0 %v392
      %v394 = vpop.xlane.xlu0 %393
      %v395 = vsel %vm337, %v324, 0.0
      %396 = vadd.xlane.f32.xlu0 %v395
      %v397 = vpop.xlane.xlu0 %396
      %v398 = vsel %vm337, %v325, 0.0
      %399 = vadd.xlane.f32.xlu0 %v398
      %v400 = vpop.xlane.xlu0 %399
      %v401 = vsel %vm337, %v326, 0.0
      %402 = vadd.xlane.f32.xlu0 %v401
      %v403 = vpop.xlane.xlu0 %402
      %v404 = vsel %vm337, %v327, 0.0
      %405 = vadd.xlane.f32.xlu0 %v404
      %v406 = vpop.xlane.xlu0 %405
      %v407 = vsel %vm337, %v328, 0.0
      %408 = vadd.xlane.f32.xlu0 %v407
      %v409 = vpop.xlane.xlu0 %408
      %v410 = vsel %vm337, %v329, 0.0
      %411 = vadd.xlane.f32.xlu0 %v410
      %v412 = vpop.xlane.xlu0 %411
      %v413 = vsel %vm337, %v330, 0.0
      %414 = vadd.xlane.f32.xlu0 %v413
      %v415 = vpop.xlane.xlu0 %414
      %v416 = vsel %vm337, %v331, 0.0
      %417 = vadd.xlane.f32.xlu0 %v416
      %v418 = vpop.xlane.xlu0 %417
      %v419 = vsel %vm337, %v332, 0.0
      %420 = vadd.xlane.f32.xlu0 %v419
      %v421 = vpop.xlane.xlu0 %420
      %v422 = vsel %vm337, %v333, 0.0
      %423 = vadd.xlane.f32.xlu0 %v422
      %v424 = vpop.xlane.xlu0 %423
      %v425 = vsel %vm337, %v334, 0.0
      %426 = vadd.xlane.f32.xlu0 %v425
      %v427 = vpop.xlane.xlu0 %426
      %v428 = vsel %vm337, %v335, 0.0
      %429 = vadd.xlane.f32.xlu0 %v428
      %v430 = vpop.xlane.xlu0 %429
      %v431 = vsel %vm337, %v336, 0.0
      %432 = vadd.xlane.f32.xlu0 %v431
      %v433 = vpop.xlane.xlu0 %432
      %v434 = vld [vmem:[#allocation2] sm:$0x1]
      %v436 = vlaneseq
      %v437 = vshrl.u32 %v436, 7
      %v438 = vsub.s32 0, %v437
      %v439 = vrot.slane %v434, %v438
      %v441 = vadd.f32 %v340, %v439
      %v442 = vadd.f32 %v343, %v439
      %v443 = vadd.f32 %v346, %v439
      %v444 = vadd.f32 %v349, %v439
      %v445 = vadd.f32 %v352, %v439
      %v446 = vadd.f32 %v355, %v439
      %v447 = vadd.f32 %v358, %v439
      %v448 = vadd.f32 %v361, %v439
      %v449 = vadd.f32 %v364, %v439
      %v450 = vadd.f32 %v367, %v439
      %v451 = vadd.f32 %v370, %v439
      %v452 = vadd.f32 %v373, %v439
      %v453 = vadd.f32 %v376, %v439
      %v454 = vadd.f32 %v379, %v439
      %v455 = vadd.f32 %v382, %v439
      %v456 = vadd.f32 %v385, %v439
      %v457 = vadd.f32 %v388, %v439
      %v458 = vadd.f32 %v391, %v439
      %v459 = vadd.f32 %v394, %v439
      %v460 = vadd.f32 %v397, %v439
      %v461 = vadd.f32 %v400, %v439
      %v462 = vadd.f32 %v403, %v439
      %v463 = vadd.f32 %v406, %v439
      %v464 = vadd.f32 %v409, %v439
      %v465 = vadd.f32 %v412, %v439
      %v466 = vadd.f32 %v415, %v439
      %v467 = vadd.f32 %v418, %v439
      %v468 = vadd.f32 %v421, %v439
      %v469 = vadd.f32 %v424, %v439
      %v470 = vadd.f32 %v427, %v439
      %v471 = vadd.f32 %v430, %v439
      %v472 = vadd.f32 %v433, %v439
      %v473 = vxor.u32 %v441, 2147483648
      %v474 = vxor.u32 %v442, 2147483648
      %v475 = vxor.u32 %v443, 2147483648
      %v476 = vxor.u32 %v444, 2147483648
      %v477 = vxor.u32 %v445, 2147483648
      %v478 = vxor.u32 %v446, 2147483648
      %v479 = vxor.u32 %v447, 2147483648
      %v480 = vxor.u32 %v448, 2147483648
      %v481 = vxor.u32 %v449, 2147483648
      %v482 = vxor.u32 %v450, 2147483648
      %v483 = vxor.u32 %v451, 2147483648
      %v484 = vxor.u32 %v452, 2147483648
      %v485 = vxor.u32 %v453, 2147483648
      %v486 = vxor.u32 %v454, 2147483648
      %v487 = vxor.u32 %v455, 2147483648
      %v488 = vxor.u32 %v456, 2147483648
      %v489 = vxor.u32 %v457, 2147483648
      %v490 = vxor.u32 %v458, 2147483648
      %v491 = vxor.u32 %v459, 2147483648
      %v492 = vxor.u32 %v460, 2147483648
      %v493 = vxor.u32 %v461, 2147483648
      %v494 = vxor.u32 %v462, 2147483648
      %v495 = vxor.u32 %v463, 2147483648
      %v496 = vxor.u32 %v464, 2147483648
      %v497 = vxor.u32 %v465, 2147483648
      %v498 = vxor.u32 %v466, 2147483648
      %v499 = vxor.u32 %v467, 2147483648
      %v500 = vxor.u32 %v468, 2147483648
      %v501 = vxor.u32 %v469, 2147483648
      %v502 = vxor.u32 %v470, 2147483648
      %v503 = vxor.u32 %v471, 2147483648
      %v504 = vxor.u32 %v472, 2147483648
      %v505 = vmul.f32 %v473, 1.442695
      %v506 = vpow.pop %v505
      %v507 = vmul.f32 %v474, 1.442695
      %v508 = vpow.pop %v507
      %v509 = vmul.f32 %v475, 1.442695
      %v510 = vpow.pop %v509
      %v511 = vmul.f32 %v476, 1.442695
      %v512 = vpow.pop %v511
      %v513 = vmul.f32 %v477, 1.442695
      %v514 = vpow.pop %v513
      %v515 = vmul.f32 %v478, 1.442695
      %v516 = vpow.pop %v515
      %v517 = vmul.f32 %v479, 1.442695
      %v518 = vpow.pop %v517
      %v519 = vmul.f32 %v480, 1.442695
      %v520 = vpow.pop %v519
      %v521 = vmul.f32 %v481, 1.442695
      %v522 = vpow.pop %v521
      %v523 = vmul.f32 %v482, 1.442695
      %v524 = vpow.pop %v523
      %v525 = vmul.f32 %v483, 1.442695
      %v526 = vpow.pop %v525
      %v527 = vmul.f32 %v484, 1.442695
      %v528 = vpow.pop %v527
      %v529 = vmul.f32 %v485, 1.442695
      %v530 = vpow.pop %v529
      %v531 = vmul.f32 %v486, 1.442695
      %v532 = vpow.pop %v531
      %v533 = vmul.f32 %v487, 1.442695
      %v534 = vpow.pop %v533
      %v535 = vmul.f32 %v488, 1.442695
      %v536 = vpow.pop %v535
      %v537 = vmul.f32 %v489, 1.442695
      %v538 = vpow.pop %v537
      %v539 = vmul.f32 %v490, 1.442695
      %v540 = vpow.pop %v539
      %v541 = vmul.f32 %v491, 1.442695
      %v542 = vpow.pop %v541
      %v543 = vmul.f32 %v492, 1.442695
      %v544 = vpow.pop %v543
      %v545 = vmul.f32 %v493, 1.442695
      %v546 = vpow.pop %v545
      %v547 = vmul.f32 %v494, 1.442695
      %v548 = vpow.pop %v547
      %v549 = vmul.f32 %v495, 1.442695
      %v550 = vpow.pop %v549
      %v551 = vmul.f32 %v496, 1.442695
      %v552 = vpow.pop %v551
      %v553 = vmul.f32 %v497, 1.442695
      %v554 = vpow.pop %v553
      %v555 = vmul.f32 %v498, 1.442695
      %v556 = vpow.pop %v555
      %v557 = vmul.f32 %v499, 1.442695
      %v558 = vpow.pop %v557
      %v559 = vmul.f32 %v500, 1.442695
      %v560 = vpow.pop %v559
      %v561 = vmul.f32 %v501, 1.442695
      %v562 = vpow.pop %v561
      %v563 = vmul.f32 %v502, 1.442695
      %v564 = vpow.pop %v563
      %v565 = vmul.f32 %v503, 1.442695
      %v566 = vpow.pop %v565
      %v567 = vmul.f32 %v504, 1.442695
      %v568 = vpow.pop %v567
      %v569 = vadd.f32 %v506, 1.0
      %v570 = vadd.f32 %v508, 1.0
      %v571 = vadd.f32 %v510, 1.0
      %v572 = vadd.f32 %v512, 1.0
      %v573 = vadd.f32 %v514, 1.0
      %v574 = vadd.f32 %v516, 1.0
      %v575 = vadd.f32 %v518, 1.0
      %v576 = vadd.f32 %v520, 1.0
      %v577 = vadd.f32 %v522, 1.0
      %v578 = vadd.f32 %v524, 1.0
      %v579 = vadd.f32 %v526, 1.0
      %v580 = vadd.f32 %v528, 1.0
      %v581 = vadd.f32 %v530, 1.0
      %v582 = vadd.f32 %v532, 1.0
      %v583 = vadd.f32 %v534, 1.0
      %v584 = vadd.f32 %v536, 1.0
      %v585 = vadd.f32 %v538, 1.0
      %v586 = vadd.f32 %v540, 1.0
      %v587 = vadd.f32 %v542, 1.0
      %v588 = vadd.f32 %v544, 1.0
      %v589 = vadd.f32 %v546, 1.0
      %v590 = vadd.f32 %v548, 1.0
      %v591 = vadd.f32 %v550, 1.0
      %v592 = vadd.f32 %v552, 1.0
      %v593 = vadd.f32 %v554, 1.0
      %v594 = vadd.f32 %v556, 1.0
      %v595 = vadd.f32 %v558, 1.0
      %v596 = vadd.f32 %v560, 1.0
      %v597 = vadd.f32 %v562, 1.0
      %v598 = vadd.f32 %v564, 1.0
      %v599 = vadd.f32 %v566, 1.0
      %v600 = vadd.f32 %v568, 1.0
      %v601 = vrcp.pop %v569
      %v602 = vmul.f32 1.0, %v601
      %v603 = vrcp.pop %v570
      %v604 = vmul.f32 1.0, %v603
      %v605 = vrcp.pop %v571
      %v606 = vmul.f32 1.0, %v605
      %v607 = vrcp.pop %v572
      %v608 = vmul.f32 1.0, %v607
      %v609 = vrcp.pop %v573
      %v610 = vmul.f32 1.0, %v609
      %v611 = vrcp.pop %v574
      %v612 = vmul.f32 1.0, %v611
      %v613 = vrcp.pop %v575
      %v614 = vmul.f32 1.0, %v613
      %v615 = vrcp.pop %v576
      %v616 = vmul.f32 1.0, %v615
      %v617 = vrcp.pop %v577
      %v618 = vmul.f32 1.0, %v617
      %v619 = vrcp.pop %v578
      %v620 = vmul.f32 1.0, %v619
      %v621 = vrcp.pop %v579
      %v622 = vmul.f32 1.0, %v621
      %v623 = vrcp.pop %v580
      %v624 = vmul.f32 1.0, %v623
      %v625 = vrcp.pop %v581
      %v626 = vmul.f32 1.0, %v625
      %v627 = vrcp.pop %v582
      %v628 = vmul.f32 1.0, %v627
      %v629 = vrcp.pop %v583
      %v630 = vmul.f32 1.0, %v629
      %v631 = vrcp.pop %v584
      %v632 = vmul.f32 1.0, %v631
      %v633 = vrcp.pop %v585
      %v634 = vmul.f32 1.0, %v633
      %v635 = vrcp.pop %v586
      %v636 = vmul.f32 1.0, %v635
      %v637 = vrcp.pop %v587
      %v638 = vmul.f32 1.0, %v637
      %v639 = vrcp.pop %v588
      %v640 = vmul.f32 1.0, %v639
      %v641 = vrcp.pop %v589
      %v642 = vmul.f32 1.0, %v641
      %v643 = vrcp.pop %v590
      %v644 = vmul.f32 1.0, %v643
      %v645 = vrcp.pop %v591
      %v646 = vmul.f32 1.0, %v645
      %v647 = vrcp.pop %v592
      %v648 = vmul.f32 1.0, %v647
      %v649 = vrcp.pop %v593
      %v650 = vmul.f32 1.0, %v649
      %v651 = vrcp.pop %v594
      %v652 = vmul.f32 1.0, %v651
      %v653 = vrcp.pop %v595
      %v654 = vmul.f32 1.0, %v653
      %v655 = vrcp.pop %v596
      %v656 = vmul.f32 1.0, %v655
      %v657 = vrcp.pop %v597
      %v658 = vmul.f32 1.0, %v657
      %v659 = vrcp.pop %v598
      %v660 = vmul.f32 1.0, %v659
      %v661 = vrcp.pop %v599
      %v662 = vmul.f32 1.0, %v661
      %v663 = vrcp.pop %v600
      %v664 = vmul.f32 1.0, %v663
      %vm665 = vcmask 7168
      %666 = vst.msk [vmem:[%s258] sm:$0xff] %vm665, %v602
      %667 = vst.msk [vmem:[%s258 + $0x8] sm:$0xff] %vm665, %v604
      %668 = vst.msk [vmem:[%s258 + $0x10] sm:$0xff] %vm665, %v606
      %669 = vst.msk [vmem:[%s258 + $0x18] sm:$0xff] %vm665, %v608
      %670 = vst.msk [vmem:[%s258 + $0x20] sm:$0xff] %vm665, %v610
      %671 = vst.msk [vmem:[%s258 + $0x28] sm:$0xff] %vm665, %v612
      %672 = vst.msk [vmem:[%s258 + $0x30] sm:$0xff] %vm665, %v614
      %673 = vst.msk [vmem:[%s258 + $0x38] sm:$0xff] %vm665, %v616
      %674 = vst.msk [vmem:[%s258 + $0x40] sm:$0xff] %vm665, %v618
      %675 = vst.msk [vmem:[%s258 + $0x48] sm:$0xff] %vm665, %v620
      %676 = vst.msk [vmem:[%s258 + $0x50] sm:$0xff] %vm665, %v622
      %677 = vst.msk [vmem:[%s258 + $0x58] sm:$0xff] %vm665, %v624
      %678 = vst.msk [vmem:[%s258 + $0x60] sm:$0xff] %vm665, %v626
      %679 = vst.msk [vmem:[%s258 + $0x68] sm:$0xff] %vm665, %v628
      %680 = vst.msk [vmem:[%s258 + $0x70] sm:$0xff] %vm665, %v630
      %681 = vst.msk [vmem:[%s258 + $0x78] sm:$0xff] %vm665, %v632
      %682 = vst.msk [vmem:[%s258 + $0x80] sm:$0xff] %vm665, %v634
      %683 = vst.msk [vmem:[%s258 + $0x88] sm:$0xff] %vm665, %v636
      %684 = vst.msk [vmem:[%s258 + $0x90] sm:$0xff] %vm665, %v638
      %685 = vst.msk [vmem:[%s258 + $0x98] sm:$0xff] %vm665, %v640
      %686 = vst.msk [vmem:[%s258 + $0xa0] sm:$0xff] %vm665, %v642
      %687 = vst.msk [vmem:[%s258 + $0xa8] sm:$0xff] %vm665, %v644
      %688 = vst.msk [vmem:[%s258 + $0xb0] sm:$0xff] %vm665, %v646
      %689 = vst.msk [vmem:[%s258 + $0xb8] sm:$0xff] %vm665, %v648
      %690 = vst.msk [vmem:[%s258 + $0xc0] sm:$0xff] %vm665, %v650
      %691 = vst.msk [vmem:[%s258 + $0xc8] sm:$0xff] %vm665, %v652
      %692 = vst.msk [vmem:[%s258 + $0xd0] sm:$0xff] %vm665, %v654
      %693 = vst.msk [vmem:[%s258 + $0xd8] sm:$0xff] %vm665, %v656
      %694 = vst.msk [vmem:[%s258 + $0xe0] sm:$0xff] %vm665, %v658
      %695 = vst.msk [vmem:[%s258 + $0xe8] sm:$0xff] %vm665, %v660
      %696 = vst.msk [vmem:[%s258 + $0xf0] sm:$0xff] %vm665, %v662
      %697 = vst.msk [vmem:[%s258 + $0xf8] sm:$0xff] %vm665, %v664
      %v698 = vld [vmem:[%s252] sm:$0xff]
      %v699 = vld [vmem:[%s252 + $0x8] sm:$0xff]
      %v700 = vld [vmem:[%s252 + $0x10] sm:$0xff]
      %v701 = vld [vmem:[%s252 + $0x18] sm:$0xff]
      %v702 = vld [vmem:[%s252 + $0x20] sm:$0xff]
      %v703 = vld [vmem:[%s252 + $0x28] sm:$0xff]
      %v704 = vld [vmem:[%s252 + $0x30] sm:$0xff]
      %v705 = vld [vmem:[%s252 + $0x38] sm:$0xff]
      %v706 = vld [vmem:[%s252 + $0x40] sm:$0xff]
      %v707 = vld [vmem:[%s252 + $0x48] sm:$0xff]
      %v708 = vld [vmem:[%s252 + $0x50] sm:$0xff]
      %v709 = vld [vmem:[%s252 + $0x58] sm:$0xff]
      %v710 = vld [vmem:[%s252 + $0x60] sm:$0xff]
      %v711 = vld [vmem:[%s252 + $0x68] sm:$0xff]
      %v712 = vld [vmem:[%s252 + $0x70] sm:$0xff]
      %v713 = vld [vmem:[%s252 + $0x78] sm:$0xff]
      %v714 = vld [vmem:[%s252 + $0x80] sm:$0xff]
      %v715 = vld [vmem:[%s252 + $0x88] sm:$0xff]
      %v716 = vld [vmem:[%s252 + $0x90] sm:$0xff]
      %v717 = vld [vmem:[%s252 + $0x98] sm:$0xff]
      %v718 = vld [vmem:[%s252 + $0xa0] sm:$0xff]
      %v719 = vld [vmem:[%s252 + $0xa8] sm:$0xff]
      %v720 = vld [vmem:[%s252 + $0xb0] sm:$0xff]
      %v721 = vld [vmem:[%s252 + $0xb8] sm:$0xff]
      %v722 = vld [vmem:[%s252 + $0xc0] sm:$0xff]
      %v723 = vld [vmem:[%s252 + $0xc8] sm:$0xff]
      %v724 = vld [vmem:[%s252 + $0xd0] sm:$0xff]
      %v725 = vld [vmem:[%s252 + $0xd8] sm:$0xff]
      %v726 = vld [vmem:[%s252 + $0xe0] sm:$0xff]
      %v727 = vld [vmem:[%s252 + $0xe8] sm:$0xff]
      %v728 = vld [vmem:[%s252 + $0xf0] sm:$0xff]
      %v729 = vld [vmem:[%s252 + $0xf8] sm:$0xff]
      %v730 = vsub.f32 1.0, %v602
      %v731 = vsub.f32 1.0, %v604
      %v732 = vsub.f32 1.0, %v606
      %v733 = vsub.f32 1.0, %v608
      %v734 = vsub.f32 1.0, %v610
      %v735 = vsub.f32 1.0, %v612
      %v736 = vsub.f32 1.0, %v614
      %v737 = vsub.f32 1.0, %v616
      %v738 = vsub.f32 1.0, %v618
      %v739 = vsub.f32 1.0, %v620
      %v740 = vsub.f32 1.0, %v622
      %v741 = vsub.f32 1.0, %v624
      %v742 = vsub.f32 1.0, %v626
      %v743 = vsub.f32 1.0, %v628
      %v744 = vsub.f32 1.0, %v630
      %v745 = vsub.f32 1.0, %v632
      %v746 = vsub.f32 1.0, %v634
      %v747 = vsub.f32 1.0, %v636
      %v748 = vsub.f32 1.0, %v638
      %v749 = vsub.f32 1.0, %v640
      %v750 = vsub.f32 1.0, %v642
      %v751 = vsub.f32 1.0, %v644
      %v752 = vsub.f32 1.0, %v646
      %v753 = vsub.f32 1.0, %v648
      %v754 = vsub.f32 1.0, %v650
      %v755 = vsub.f32 1.0, %v652
      %v756 = vsub.f32 1.0, %v654
      %v757 = vsub.f32 1.0, %v656
      %v758 = vsub.f32 1.0, %v658
      %v759 = vsub.f32 1.0, %v660
      %v760 = vsub.f32 1.0, %v662
      %v761 = vsub.f32 1.0, %v664
      %763 = vset.pattern.permute.xlu0 0
      %764 = vperm.xlu0 %763, %v730
      %v765 = vpop.permute.xlu0 %764
      %768 = vset.pattern.permute.xlu0 0
      %769 = vperm.xlu0 %768, %v731
      %v770 = vpop.permute.xlu0 %769
      %773 = vset.pattern.permute.xlu0 0
      %774 = vperm.xlu0 %773, %v732
      %v775 = vpop.permute.xlu0 %774
      %778 = vset.pattern.permute.xlu0 0
      %779 = vperm.xlu0 %778, %v733
      %v780 = vpop.permute.xlu0 %779
      %783 = vset.pattern.permute.xlu0 0
      %784 = vperm.xlu0 %783, %v734
      %v785 = vpop.permute.xlu0 %784
      %788 = vset.pattern.permute.xlu0 0
      %789 = vperm.xlu0 %788, %v735
      %v790 = vpop.permute.xlu0 %789
      %793 = vset.pattern.permute.xlu0 0
      %794 = vperm.xlu0 %793, %v736
      %v795 = vpop.permute.xlu0 %794
      %798 = vset.pattern.permute.xlu0 0
      %799 = vperm.xlu0 %798, %v737
      %v800 = vpop.permute.xlu0 %799
      %803 = vset.pattern.permute.xlu0 0
      %804 = vperm.xlu0 %803, %v738
      %v805 = vpop.permute.xlu0 %804
      %808 = vset.pattern.permute.xlu0 0
      %809 = vperm.xlu0 %808, %v739
      %v810 = vpop.permute.xlu0 %809
      %813 = vset.pattern.permute.xlu0 0
      %814 = vperm.xlu0 %813, %v740
      %v815 = vpop.permute.xlu0 %814
      %818 = vset.pattern.permute.xlu0 0
      %819 = vperm.xlu0 %818, %v741
      %v820 = vpop.permute.xlu0 %819
      %823 = vset.pattern.permute.xlu0 0
      %824 = vperm.xlu0 %823, %v742
      %v825 = vpop.permute.xlu0 %824
      %828 = vset.pattern.permute.xlu0 0
      %829 = vperm.xlu0 %828, %v743
      %v830 = vpop.permute.xlu0 %829
      %833 = vset.pattern.permute.xlu0 0
      %834 = vperm.xlu0 %833, %v744
      %v835 = vpop.permute.xlu0 %834
      %838 = vset.pattern.permute.xlu0 0
      %839 = vperm.xlu0 %838, %v745
      %v840 = vpop.permute.xlu0 %839
      %843 = vset.pattern.permute.xlu0 0
      %844 = vperm.xlu0 %843, %v746
      %v845 = vpop.permute.xlu0 %844
      %848 = vset.pattern.permute.xlu0 0
      %849 = vperm.xlu0 %848, %v747
      %v850 = vpop.permute.xlu0 %849
      %853 = vset.pattern.permute.xlu0 0
      %854 = vperm.xlu0 %853, %v748
      %v855 = vpop.permute.xlu0 %854
      %858 = vset.pattern.permute.xlu0 0
      %859 = vperm.xlu0 %858, %v749
      %v860 = vpop.permute.xlu0 %859
      %863 = vset.pattern.permute.xlu0 0
      %864 = vperm.xlu0 %863, %v750
      %v865 = vpop.permute.xlu0 %864
      %868 = vset.pattern.permute.xlu0 0
      %869 = vperm.xlu0 %868, %v751
      %v870 = vpop.permute.xlu0 %869
      %873 = vset.pattern.permute.xlu0 0
      %874 = vperm.xlu0 %873, %v752
      %v875 = vpop.permute.xlu0 %874
      %878 = vset.pattern.permute.xlu0 0
      %879 = vperm.xlu0 %878, %v753
      %v880 = vpop.permute.xlu0 %879
      %883 = vset.pattern.permute.xlu0 0
      %884 = vperm.xlu0 %883, %v754
      %v885 = vpop.permute.xlu0 %884
      %888 = vset.pattern.permute.xlu0 0
      %889 = vperm.xlu0 %888, %v755
      %v890 = vpop.permute.xlu0 %889
      %893 = vset.pattern.permute.xlu0 0
      %894 = vperm.xlu0 %893, %v756
      %v895 = vpop.permute.xlu0 %894
      %898 = vset.pattern.permute.xlu0 0
      %899 = vperm.xlu0 %898, %v757
      %v900 = vpop.permute.xlu0 %899
      %903 = vset.pattern.permute.xlu0 0
      %904 = vperm.xlu0 %903, %v758
      %v905 = vpop.permute.xlu0 %904
      %908 = vset.pattern.permute.xlu0 0
      %909 = vperm.xlu0 %908, %v759
      %v910 = vpop.permute.xlu0 %909
      %913 = vset.pattern.permute.xlu0 0
      %914 = vperm.xlu0 %913, %v760
      %v915 = vpop.permute.xlu0 %914
      %918 = vset.pattern.permute.xlu0 0
      %919 = vperm.xlu0 %918, %v761
      %v920 = vpop.permute.xlu0 %919
      %v922 = vmul.f32 %v698, %v765
      %v923 = vmul.f32 %v699, %v770
      %v924 = vmul.f32 %v700, %v775
      %v925 = vmul.f32 %v701, %v780
      %v926 = vmul.f32 %v702, %v785
      %v927 = vmul.f32 %v703, %v790
      %v928 = vmul.f32 %v704, %v795
      %v929 = vmul.f32 %v705, %v800
      %v930 = vmul.f32 %v706, %v805
      %v931 = vmul.f32 %v707, %v810
      %v932 = vmul.f32 %v708, %v815
      %v933 = vmul.f32 %v709, %v820
      %v934 = vmul.f32 %v710, %v825
      %v935 = vmul.f32 %v711, %v830
      %v936 = vmul.f32 %v712, %v835
      %v937 = vmul.f32 %v713, %v840
      %v938 = vmul.f32 %v714, %v845
      %v939 = vmul.f32 %v715, %v850
      %v940 = vmul.f32 %v716, %v855
      %v941 = vmul.f32 %v717, %v860
      %v942 = vmul.f32 %v718, %v865
      %v943 = vmul.f32 %v719, %v870
      %v944 = vmul.f32 %v720, %v875
      %v945 = vmul.f32 %v721, %v880
      %v946 = vmul.f32 %v722, %v885
      %v947 = vmul.f32 %v723, %v890
      %v948 = vmul.f32 %v724, %v895
      %v949 = vmul.f32 %v725, %v900
      %v950 = vmul.f32 %v726, %v905
      %v951 = vmul.f32 %v727, %v910
      %v952 = vmul.f32 %v728, %v915
      %v953 = vmul.f32 %v729, %v920
      %vm954 = vcmask 64512
      %955 = vst.msk [vmem:[%s264] sm:$0xff] %vm954, %v922
      %956 = vst.msk [vmem:[%s264 + $0x8] sm:$0xff] %vm954, %v923
      %957 = vst.msk [vmem:[%s264 + $0x10] sm:$0xff] %vm954, %v924
      %958 = vst.msk [vmem:[%s264 + $0x18] sm:$0xff] %vm954, %v925
      %959 = vst.msk [vmem:[%s264 + $0x20] sm:$0xff] %vm954, %v926
      %960 = vst.msk [vmem:[%s264 + $0x28] sm:$0xff] %vm954, %v927
      %961 = vst.msk [vmem:[%s264 + $0x30] sm:$0xff] %vm954, %v928
      %962 = vst.msk [vmem:[%s264 + $0x38] sm:$0xff] %vm954, %v929
      %963 = vst.msk [vmem:[%s264 + $0x40] sm:$0xff] %vm954, %v930
      %964 = vst.msk [vmem:[%s264 + $0x48] sm:$0xff] %vm954, %v931
      %965 = vst.msk [vmem:[%s264 + $0x50] sm:$0xff] %vm954, %v932
      %966 = vst.msk [vmem:[%s264 + $0x58] sm:$0xff] %vm954, %v933
      %967 = vst.msk [vmem:[%s264 + $0x60] sm:$0xff] %vm954, %v934
      %968 = vst.msk [vmem:[%s264 + $0x68] sm:$0xff] %vm954, %v935
      %969 = vst.msk [vmem:[%s264 + $0x70] sm:$0xff] %vm954, %v936
      %970 = vst.msk [vmem:[%s264 + $0x78] sm:$0xff] %vm954, %v937
      %971 = vst.msk [vmem:[%s264 + $0x80] sm:$0xff] %vm954, %v938
      %972 = vst.msk [vmem:[%s264 + $0x88] sm:$0xff] %vm954, %v939
      %973 = vst.msk [vmem:[%s264 + $0x90] sm:$0xff] %vm954, %v940
      %974 = vst.msk [vmem:[%s264 + $0x98] sm:$0xff] %vm954, %v941
      %975 = vst.msk [vmem:[%s264 + $0xa0] sm:$0xff] %vm954, %v942
      %976 = vst.msk [vmem:[%s264 + $0xa8] sm:$0xff] %vm954, %v943
      %977 = vst.msk [vmem:[%s264 + $0xb0] sm:$0xff] %vm954, %v944
      %978 = vst.msk [vmem:[%s264 + $0xb8] sm:$0xff] %vm954, %v945
      %979 = vst.msk [vmem:[%s264 + $0xc0] sm:$0xff] %vm954, %v946
      %980 = vst.msk [vmem:[%s264 + $0xc8] sm:$0xff] %vm954, %v947
      %981 = vst.msk [vmem:[%s264 + $0xd0] sm:$0xff] %vm954, %v948
      %982 = vst.msk [vmem:[%s264 + $0xd8] sm:$0xff] %vm954, %v949
      %983 = vst.msk [vmem:[%s264 + $0xe0] sm:$0xff] %vm954, %v950
      %984 = vst.msk [vmem:[%s264 + $0xe8] sm:$0xff] %vm954, %v951
      %985 = vst.msk [vmem:[%s264 + $0xf0] sm:$0xff] %vm954, %v952
      %986 = vst.msk [vmem:[%s264 + $0xf8] sm:$0xff] %vm954, %v953
      %s987 = smul.u32 32, %s19
      %p988 = scmp.lt.s32.totalorder %s987, 63
      %s989 = scalar_select %p988, %s987, 63
      %s990 = smul.addr %s989, 8
      %s991 = scalar_lea.vmem %s4, %s990
      %s992 = smul.u32 32, %s19
      %p993 = scmp.lt.s32.totalorder %s992, 63
      %s994 = scalar_select %p993, %s992, 63
      %s995 = smul.addr %s994, 8
      %s996 = scalar_lea.vmem %s5, %s995
      // Predicated region
      $region37: #{statistic_attention_forward.6} parent=35 // pred_check
        %p997 = pneg %p131
      $region38: #{statistic_attention_forward.6} parent=35 // pred_check_branch
        %999 = sbr.rel (%p997) target = $region40
      $region39: #{statistic_attention_forward.6} parent=35 // pred_region
        %s1000 = smul.u32 32, %s19
      $region40: #{statistic_attention_forward.6} parent=35 // pred_fallthru
        _
      // Predicated region
      $region41: #{statistic_attention_forward.6} parent=35 // pred_check
        %p1001 = pneg %p157
      $region42: #{statistic_attention_forward.6} parent=35 // pred_check_branch
        %1003 = sbr.rel (%p1001) target = $region44
      $region43: #{statistic_attention_forward.6} parent=35 // pred_region
        %s1004 = smul.u32 32, %s19
      $region44: #{statistic_attention_forward.6} parent=35 // pred_fallthru
        _
    $region36: #{statistic_attention_forward.6} parent=5 // pred_fallthru
      _
    %p1005 = scmp.le.s32.totalorder 2, %s14
    // Predicated region
    $region45: #{statistic_attention_forward.6} parent=5 // pred_check
      %p1006 = pneg %p1005
    $region46: #{statistic_attention_forward.6} parent=5 // pred_check_branch
      %1008 = sbr.rel (%p1006) target = $region48
    $region47: #{statistic_attention_forward.6} parent=5 // pred_region
      %s1009 = ssub.s32 %s14, 2
      // Predicated region
      $region49: #{statistic_attention_forward.6} parent=47 // pred_check
        %p1010 = pneg %p137
      $region50: #{statistic_attention_forward.6} parent=47 // pred_check_branch
        %1012 = sbr.rel (%p1010) target = $region52
      $region51: #{statistic_attention_forward.6} parent=47 // pred_region
        %s1013 = smul.u32 32, %s20
        %p1014 = scmp.lt.s32.totalorder %s1013, 63
        %s1015 = scalar_select %p1014, %s1013, 63
        %s1016 = smul.addr %s1015, 8
        %s1017 = scalar_lea.vmem %s4, %s1016
      $region52: #{statistic_attention_forward.6} parent=47 // pred_fallthru
        _
      // Predicated region
      $region53: #{statistic_attention_forward.6} parent=47 // pred_check
        %p1018 = pneg %p163
      $region54: #{statistic_attention_forward.6} parent=47 // pred_check_branch
        %1020 = sbr.rel (%p1018) target = $region56
      $region55: #{statistic_attention_forward.6} parent=47 // pred_region
        %s1021 = smul.u32 32, %s20
        %p1022 = scmp.lt.s32.totalorder %s1021, 63
        %s1023 = scalar_select %p1022, %s1021, 63
        %s1024 = smul.addr %s1023, 8
        %s1025 = scalar_lea.vmem %s5, %s1024
      $region56: #{statistic_attention_forward.6} parent=47 // pred_fallthru
        _
    $region48: #{statistic_attention_forward.6} parent=5 // pred_fallthru
      _
  $region6: #{statistic_attention_forward.6} parent=0 // loop_footer
    %s18 = sadd.s32 1, %s14
  $region7: #{statistic_attention_forward.6} parent=0 // loop_footer_branch
    %13 = sbr.rel target = $region3
  $region8: #{statistic_attention_forward.6} parent=0 // loop_exit
    _

// kernel: statistic_attention_forward.7
$region0: #{statistic_attention_forward.7}
  #allocation0 [shape = 'u32[]', space=smem, size = 0x4, offset = 0x4, fixed_abs, tag = 'smem constant byte address 0x4 - core index']
  #allocation1 [shape = 'u32[144,128]{1,0:T(1,128)}', space=vmem, size = 0x12000, scoped, tag = 'internal scratch']
  %s0 = inlined_call_operand.vmem [shape: f32[512,144], index: 0, kind: input, shape index: {}]
  %s1 = inlined_call_operand.vmem [shape: f32[144,8], index: 1, kind: input, shape index: {}]
  %s2 = inlined_call_operand.vmem [shape: f32[1,8], index: 2, kind: input, shape index: {}]
  %s3 = inlined_call_operand.vmem [shape: f32[1,8], index: 3, kind: input, shape index: {}]
  %s4 = inlined_call_operand.vmem [shape: f32[512,8], index: 4, kind: output, shape index: {}]
  %s5 = sld [smem:[#allocation0]]
  $region49: #{statistic_attention_forward.7} parent=0
    _
  %s7 = ssub.s32 1, %s5
  %s8 = scalar_select 0, %s7, %s5
  loop: start=0, step=1, limit=4
  $region2: #{statistic_attention_forward.7} parent=0 // loop_pre_header
    _
  $region3: #{statistic_attention_forward.7} parent=0 // loop_header
    %s10 = sphi 0, %s14
    %p11 = scmp.ge.s32.totalorder %s10, 4
    %s20 = sphi 0, %s22
    %s23 = sphi 0, %s20
    %s24 = sphi 0, %s23
    %s40 = sphi 0, %s24
    %s44 = sphi 0, %s44
    %s46 = sphi 0, %s44
    %s47 = sphi 0, %s46
    %s61 = sphi 0, %s47
    %s65 = sphi 0, %s65
    %s67 = sphi 0, %s65
    %s68 = sphi 0, %s67
    %s82 = sphi 0, %s68
    %s86 = sphi 0, %s86
    %s88 = sphi 0, %s86
    %s89 = sphi 0, %s88
    %s103 = sphi 0, %s89
    %s109 = sphi 0, %s111
    %s112 = sphi 0, %s109
    %s113 = sphi 0, %s112
    %s129 = sphi 0, %s113
  $region4: #{statistic_attention_forward.7} parent=0 // loop_header_branch
    %13 = sbr.rel (%p11) target = $region8
  $region5: #{statistic_attention_forward.7} parent=0 // loop_body
    %s15 = ssub.s32 %s10, 1
    %s16 = ssub.s32 %s10, 2
    %s17 = sadd.s32 %s10, 1
    %s18 = ssub.s32 %s10, %s17
    %p19 = scmp.eq.s32.totalorder %s18, 0
    %s21 = sadd.s32 %s20, 1
    %s22 = scalar_select %p19, %s20, %s21
    %p25 = pneg %p19
    %p26 = scmp.eq.s32.totalorder %s10, 1
    %p27 = por %p25, %p26
    %p28 = scmp.ne.s32.totalorder %s20, %s23
    %p29 = scmp.eq.s32.totalorder %s10, 0
    %p30 = por %p28, %p29
    %p31 = scmp.ne.s32.totalorder %s20, %s23
    %p32 = scmp.eq.s32.totalorder %s15, 1
    %p33 = por %p31, %p32
    %p34 = scmp.ne.s32.totalorder %s23, %s24
    %p35 = scmp.eq.s32.totalorder %s15, 0
    %p36 = por %p34, %p35
    %p37 = scmp.ne.s32.totalorder %s23, %s24
    %p38 = scmp.eq.s32.totalorder %s16, 1
    %p39 = por %p37, %p38
    %p41 = scmp.ne.s32.totalorder %s24, %s40
    %p42 = scmp.eq.s32.totalorder %s16, 0
    %p43 = por %p41, %p42
    %s45 = sadd.s32 %s44, 1
    %p48 = scmp.eq.s32.totalorder %s10, 1
    %p49 = scmp.ne.s32.totalorder %s44, %s46
    %p50 = scmp.eq.s32.totalorder %s10, 0
    %p51 = por %p49, %p50
    %p52 = scmp.ne.s32.totalorder %s44, %s46
    %p53 = scmp.eq.s32.totalorder %s15, 1
    %p54 = por %p52, %p53
    %p55 = scmp.ne.s32.totalorder %s46, %s47
    %p56 = scmp.eq.s32.totalorder %s15, 0
    %p57 = por %p55, %p56
    %p58 = scmp.ne.s32.totalorder %s46, %s47
    %p59 = scmp.eq.s32.totalorder %s16, 1
    %p60 = por %p58, %p59
    %p62 = scmp.ne.s32.totalorder %s47, %s61
    %p63 = scmp.eq.s32.totalorder %s16, 0
    %p64 = por %p62, %p63
    %s66 = sadd.s32 %s65, 1
    %p69 = scmp.eq.s32.totalorder %s10, 1
    %p70 = scmp.ne.s32.totalorder %s65, %s67
    %p71 = scmp.eq.s32.totalorder %s10, 0
    %p72 = por %p70, %p71
    %p73 = scmp.ne.s32.totalorder %s65, %s67
    %p74 = scmp.eq.s32.totalorder %s15, 1
    %p75 = por %p73, %p74
    %p76 = scmp.ne.s32.totalorder %s67, %s68
    %p77 = scmp.eq.s32.totalorder %s15, 0
    %p78 = por %p76, %p77
    %p79 = scmp.ne.s32.totalorder %s67, %s68
    %p80 = scmp.eq.s32.totalorder %s16, 1
    %p81 = por %p79, %p80
    %p83 = scmp.ne.s32.totalorder %s68, %s82
    %p84 = scmp.eq.s32.totalorder %s16, 0
    %p85 = por %p83, %p84
    %s87 = sadd.s32 %s86, 1
    %p90 = scmp.eq.s32.totalorder %s10, 1
    %p91 = scmp.ne.s32.totalorder %s86, %s88
    %p92 = scmp.eq.s32.totalorder %s10, 0
    %p93 = por %p91, %p92
    %p94 = scmp.ne.s32.totalorder %s86, %s88
    %p95 = scmp.eq.s32.totalorder %s15, 1
    %p96 = por %p94, %p95
    %p97 = scmp.ne.s32.totalorder %s88, %s89
    %p98 = scmp.eq.s32.totalorder %s15, 0
    %p99 = por %p97, %p98
    %p100 = scmp.ne.s32.totalorder %s88, %s89
    %p101 = scmp.eq.s32.totalorder %s16, 1
    %p102 = por %p100, %p101
    %p104 = scmp.ne.s32.totalorder %s89, %s103
    %p105 = scmp.eq.s32.totalorder %s16, 0
    %p106 = por %p104, %p105
    %s107 = ssub.s32 %s10, %s17
    %p108 = scmp.eq.s32.totalorder %s107, 0
    %s110 = sadd.s32 %s109, 1
    %s111 = scalar_select %p108, %s109, %s110
    %p114 = pneg %p108
    %p115 = scmp.eq.s32.totalorder %s10, 1
    %p116 = por %p114, %p115
    %p117 = scmp.ne.s32.totalorder %s109, %s112
    %p118 = scmp.eq.s32.totalorder %s10, 0
    %p119 = por %p117, %p118
    %p120 = scmp.ne.s32.totalorder %s109, %s112
    %p121 = scmp.eq.s32.totalorder %s15, 1
    %p122 = por %p120, %p121
    %p123 = scmp.ne.s32.totalorder %s112, %s113
    %p124 = scmp.eq.s32.totalorder %s15, 0
    %p125 = por %p123, %p124
    %p126 = scmp.ne.s32.totalorder %s112, %s113
    %p127 = scmp.eq.s32.totalorder %s16, 1
    %p128 = por %p126, %p127
    %p130 = scmp.ne.s32.totalorder %s113, %s129
    %p131 = scmp.eq.s32.totalorder %s16, 0
    %p132 = por %p130, %p131
    %p133 = scmp.le.s32.totalorder 1, %s10
    %p134 = scmp.lt.s32.totalorder %s10, 3
    %p135 = pnand %p133, %p134
    %p136 = pneg %p135
    // Predicated region
    $region9: #{statistic_attention_forward.7} parent=5 // pred_check
      _
    $region10: #{statistic_attention_forward.7} parent=5 // pred_check_branch
      %138 = sbr.rel (%p135) target = $region12
    $region11: #{statistic_attention_forward.7} parent=5 // pred_region
      %s139 = ssub.s32 %s10, 1
      // Predicated region
      $region13: #{statistic_attention_forward.7} parent=11 // pred_check
        %p140 = pneg %p57
      $region14: #{statistic_attention_forward.7} parent=11 // pred_check_branch
        %142 = sbr.rel (%p140) target = $region16
      $region15: #{statistic_attention_forward.7} parent=11 // pred_region
        _
      $region16: #{statistic_attention_forward.7} parent=11 // pred_fallthru
        _
      // Predicated region
      $region17: #{statistic_attention_forward.7} parent=11 // pred_check
        %p143 = pneg %p78
      $region18: #{statistic_attention_forward.7} parent=11 // pred_check_branch
        %145 = sbr.rel (%p143) target = $region20
      $region19: #{statistic_attention_forward.7} parent=11 // pred_region
        _
      $region20: #{statistic_attention_forward.7} parent=11 // pred_fallthru
        _
      // Predicated region
      $region21: #{statistic_attention_forward.7} parent=11 // pred_check
        %p146 = pneg %p99
      $region22: #{statistic_attention_forward.7} parent=11 // pred_check_branch
        %148 = sbr.rel (%p146) target = $region24
      $region23: #{statistic_attention_forward.7} parent=11 // pred_region
        _
      $region24: #{statistic_attention_forward.7} parent=11 // pred_fallthru
        _
    $region12: #{statistic_attention_forward.7} parent=5 // pred_fallthru
      _
    %p149 = scmp.lt.s32.totalorder %s10, 2
    // Predicated region
    $region25: #{statistic_attention_forward.7} parent=5 // pred_check
      %p150 = pneg %p149
    $region26: #{statistic_attention_forward.7} parent=5 // pred_check_branch
      %152 = sbr.rel (%p150) target = $region28
    $region27: #{statistic_attention_forward.7} parent=5 // pred_region
      // Predicated region
      $region29: #{statistic_attention_forward.7} parent=27 // pred_check
        %p153 = pneg %p30
      $region30: #{statistic_attention_forward.7} parent=27 // pred_check_branch
        %155 = sbr.rel (%p153) target = $region32
      $region31: #{statistic_attention_forward.7} parent=27 // pred_region
        %s156 = smul.u32 32, %s10
        %p157 = scmp.lt.s32.totalorder %s156, 63
        %s158 = scalar_select %p157, %s156, 63
        %s159 = smul.addr %s158, 2
        %s160 = smul.addr %s159, 8
        %s161 = scalar_lea.vmem %s0, %s160
        %s162 = smul.u32 32, %s10
      $region32: #{statistic_attention_forward.7} parent=27 // pred_fallthru
        _
    $region28: #{statistic_attention_forward.7} parent=5 // pred_fallthru
      _
    %p163 = scmp.le.s32.totalorder 1, %s10
    %p164 = scmp.lt.s32.totalorder %s10, 3
    %p165 = pnand %p163, %p164
    %p166 = pneg %p165
    // Predicated region
    $region33: #{statistic_attention_forward.7} parent=5 // pred_check
      _
    $region34: #{statistic_attention_forward.7} parent=5 // pred_check_branch
      %168 = sbr.rel (%p165) target = $region36
    $region35: #{statistic_attention_forward.7} parent=5 // pred_region
      %s169 = ssub.s32 %s10, 1
      %s170 = smul.u32 32, %s15
      %p171 = scmp.lt.s32.totalorder %s170, 63
      %s172 = scalar_select %p171, %s170, 63
      %s173 = smul.addr %s172, 2
      %s174 = smul.addr %s173, 8
      %s175 = scalar_lea.vmem %s0, %s174
      %p176 = pneg %p36
      %p177 = pneg %p33
      %p178 = pneg %p57
      %p179 = pneg %p54
      %p180 = pneg %p78
      %p181 = pneg %p75
      %p182 = pneg %p99
      %p183 = pneg %p96
      %p184 = pneg %p125
      %p185 = pneg %p122
      %s186 = smul.u32 32, %s15
      %p187 = scmp.lt.s32.totalorder %s186, 63
      %s188 = scalar_select %p187, %s186, 63
      %s189 = smul.addr %s188, 8
      %s190 = scalar_lea.vmem %s4, %s189
      %s191 = smul.u32 32, %s15
      %p192 = scmp.lt.s32.totalorder %s191, 63
      %s193 = scalar_select %p192, %s191, 63
      %s194 = smul.addr %s193, 2
      %s195 = smul.addr %s194, 8
      %s196 = scalar_lea.vmem %s0, %s195
      %s197 = smul.u32 32, %s15
      %s198 = smul.u32 32, %s15
      %p199 = scmp.lt.s32.totalorder %s198, 63
      %s200 = scalar_select %p199, %s198, 63
      %s201 = smul.addr %s200, 8
      %s202 = scalar_lea.vmem %s4, %s201
      %s203 = smul.u32 32, %s15
      %v204 = vld [vmem:[%s196] sm:$0xff]
      %v205 = vld [vmem:[%s196 + $0x8] sm:$0xff]
      %v206 = vld [vmem:[%s196 + $0x10] sm:$0xff]
      %v207 = vld [vmem:[%s196 + $0x18] sm:$0xff]
      %v208 = vld [vmem:[%s196 + $0x20] sm:$0xff]
      %v209 = vld [vmem:[%s196 + $0x28] sm:$0xff]
      %v210 = vld [vmem:[%s196 + $0x30] sm:$0xff]
      %v211 = vld [vmem:[%s196 + $0x38] sm:$0xff]
      %v212 = vld [vmem:[%s196 + $0x40] sm:$0xff]
      %v213 = vld [vmem:[%s196 + $0x48] sm:$0xff]
      %v214 = vld [vmem:[%s196 + $0x50] sm:$0xff]
      %v215 = vld [vmem:[%s196 + $0x58] sm:$0xff]
      %v216 = vld [vmem:[%s196 + $0x60] sm:$0xff]
      %v217 = vld [vmem:[%s196 + $0x68] sm:$0xff]
      %v218 = vld [vmem:[%s196 + $0x70] sm:$0xff]
      %v219 = vld [vmem:[%s196 + $0x78] sm:$0xff]
      %v220 = vld [vmem:[%s196 + $0x80] sm:$0xff]
      %v221 = vld [vmem:[%s196 + $0x88] sm:$0xff]
      %v222 = vld [vmem:[%s196 + $0x90] sm:$0xff]
      %v223 = vld [vmem:[%s196 + $0x98] sm:$0xff]
      %v224 = vld [vmem:[%s196 + $0xa0] sm:$0xff]
      %v225 = vld [vmem:[%s196 + $0xa8] sm:$0xff]
      %v226 = vld [vmem:[%s196 + $0xb0] sm:$0xff]
      %v227 = vld [vmem:[%s196 + $0xb8] sm:$0xff]
      %v228 = vld [vmem:[%s196 + $0xc0] sm:$0xff]
      %v229 = vld [vmem:[%s196 + $0xc8] sm:$0xff]
      %v230 = vld [vmem:[%s196 + $0xd0] sm:$0xff]
      %v231 = vld [vmem:[%s196 + $0xd8] sm:$0xff]
      %v232 = vld [vmem:[%s196 + $0xe0] sm:$0xff]
      %v233 = vld [vmem:[%s196 + $0xe8] sm:$0xff]
      %v234 = vld [vmem:[%s196 + $0xf0] sm:$0xff]
      %v235 = vld [vmem:[%s196 + $0xf8] sm:$0xff]
      %v236 = vld [vmem:[%s196 + $0x100] sm:$0xff]
      %v237 = vld [vmem:[%s196 + $0x108] sm:$0xff]
      %v238 = vld [vmem:[%s196 + $0x110] sm:$0xff]
      %v239 = vld [vmem:[%s196 + $0x118] sm:$0xff]
      %v240 = vld [vmem:[%s196 + $0x120] sm:$0xff]
      %v241 = vld [vmem:[%s196 + $0x128] sm:$0xff]
      %v242 = vld [vmem:[%s196 + $0x130] sm:$0xff]
      %v243 = vld [vmem:[%s196 + $0x138] sm:$0xff]
      %v244 = vld [vmem:[%s196 + $0x140] sm:$0xff]
      %v245 = vld [vmem:[%s196 + $0x148] sm:$0xff]
      %v246 = vld [vmem:[%s196 + $0x150] sm:$0xff]
      %v247 = vld [vmem:[%s196 + $0x158] sm:$0xff]
      %v248 = vld [vmem:[%s196 + $0x160] sm:$0xff]
      %v249 = vld [vmem:[%s196 + $0x168] sm:$0xff]
      %v250 = vld [vmem:[%s196 + $0x170] sm:$0xff]
      %v251 = vld [vmem:[%s196 + $0x178] sm:$0xff]
      %v252 = vld [vmem:[%s196 + $0x180] sm:$0xff]
      %v253 = vld [vmem:[%s196 + $0x188] sm:$0xff]
      %v254 = vld [vmem:[%s196 + $0x190] sm:$0xff]
      %v255 = vld [vmem:[%s196 + $0x198] sm:$0xff]
      %v256 = vld [vmem:[%s196 + $0x1a0] sm:$0xff]
      %v257 = vld [vmem:[%s196 + $0x1a8] sm:$0xff]
      %v258 = vld [vmem:[%s196 + $0x1b0] sm:$0xff]
      %v259 = vld [vmem:[%s196 + $0x1b8] sm:$0xff]
      %v260 = vld [vmem:[%s196 + $0x1c0] sm:$0xff]
      %v261 = vld [vmem:[%s196 + $0x1c8] sm:$0xff]
      %v262 = vld [vmem:[%s196 + $0x1d0] sm:$0xff]
      %v263 = vld [vmem:[%s196 + $0x1d8] sm:$0xff]
      %v264 = vld [vmem:[%s196 + $0x1e0] sm:$0xff]
      %v265 = vld [vmem:[%s196 + $0x1e8] sm:$0xff]
      %v266 = vld [vmem:[%s196 + $0x1f0] sm:$0xff]
      %v267 = vld [vmem:[%s196 + $0x1f8] sm:$0xff]
      %v268 = vld [vmem:[%s1] sm:$0xff]
      %v269 = vld [vmem:[%s1 + $0x8] sm:$0xff]
      %v270 = vld [vmem:[%s1 + $0x10] sm:$0xff]
      %v271 = vld [vmem:[%s1 + $0x18] sm:$0xff]
      %v272 = vld [vmem:[%s1 + $0x20] sm:$0xff]
      %v273 = vld [vmem:[%s1 + $0x28] sm:$0xff]
      %v274 = vld [vmem:[%s1 + $0x30] sm:$0xff]
      %v275 = vld [vmem:[%s1 + $0x38] sm:$0xff]
      %v276 = vld [vmem:[%s1 + $0x40] sm:$0xff]
      %v277 = vld [vmem:[%s1 + $0x48] sm:$0xff]
      %v278 = vld [vmem:[%s1 + $0x50] sm:$0xff]
      %v279 = vld [vmem:[%s1 + $0x58] sm:$0xff]
      %v280 = vld [vmem:[%s1 + $0x60] sm:$0xff]
      %v281 = vld [vmem:[%s1 + $0x68] sm:$0xff]
      %v282 = vld [vmem:[%s1 + $0x70] sm:$0xff]
      %v283 = vld [vmem:[%s1 + $0x78] sm:$0xff]
      %v284 = vld [vmem:[%s1 + $0x80] sm:$0xff]
      %v285 = vld [vmem:[%s1 + $0x88] sm:$0xff]
      %vm286 = vcmask 130048
      %v288 = vsel %vm286, %v205, 0
      %v291 = vsel %vm286, %v207, 0
      %v294 = vsel %vm286, %v209, 0
      %v297 = vsel %vm286, %v211, 0
      %v300 = vsel %vm286, %v213, 0
      %v303 = vsel %vm286, %v215, 0
      %v306 = vsel %vm286, %v217, 0
      %v309 = vsel %vm286, %v219, 0
      %v312 = vsel %vm286, %v221, 0
      %v315 = vsel %vm286, %v223, 0
      %v318 = vsel %vm286, %v225, 0
      %v321 = vsel %vm286, %v227, 0
      %v324 = vsel %vm286, %v229, 0
      %v327 = vsel %vm286, %v231, 0
      %v330 = vsel %vm286, %v233, 0
      %v333 = vsel %vm286, %v235, 0
      %v336 = vsel %vm286, %v237, 0
      %v339 = vsel %vm286, %v239, 0
      %v342 = vsel %vm286, %v241, 0
      %v345 = vsel %vm286, %v243, 0
      %v348 = vsel %vm286, %v245, 0
      %v351 = vsel %vm286, %v247, 0
      %v354 = vsel %vm286, %v249, 0
      %v357 = vsel %vm286, %v251, 0
      %v360 = vsel %vm286, %v253, 0
      %v363 = vsel %vm286, %v255, 0
      %v366 = vsel %vm286, %v257, 0
      %v369 = vsel %vm286, %v259, 0
      %v372 = vsel %vm286, %v261, 0
      %v375 = vsel %vm286, %v263, 0
      %v378 = vsel %vm286, %v265, 0
      %v381 = vsel %vm286, %v267, 0
      %383 = vmatprep.subr.mxu0 0.0
      %384 = vmatpush1.msra.mxu0 %v268
      %385 = vmatprep.subr.mxu0 0.0
      %386 = vmatpush1.msra.mxu0 %v269
      %387 = vmatprep.subr.mxu0 0.0
      %388 = vmatpush1.msra.mxu0 %v270
      %389 = vmatprep.subr.mxu0 0.0
      %390 = vmatpush1.msra.mxu0 %v271
      %391 = vmatprep.subr.mxu0 0.0
      %392 = vmatpush1.msra.mxu0 %v272
      %393 = vmatprep.subr.mxu0 0.0
      %394 = vmatpush1.msra.mxu0 %v273
      %395 = vmatprep.subr.mxu0 0.0
      %396 = vmatpush1.msra.mxu0 %v274
      %397 = vmatprep.subr.mxu0 0.0
      %398 = vmatpush1.msra.mxu0 %v275
      %399 = vmatprep.subr.mxu0 0.0
      %400 = vmatpush1.msra.mxu0 %v276
      %401 = vmatprep.subr.mxu0 0.0
      %402 = vmatpush1.msra.mxu0 %v277
      %403 = vmatprep.subr.mxu0 0.0
      %404 = vmatpush1.msra.mxu0 %v278
      %405 = vmatprep.subr.mxu0 0.0
      %406 = vmatpush1.msra.mxu0 %v279
      %407 = vmatprep.subr.mxu0 0.0
      %408 = vmatpush1.msra.mxu0 %v280
      %409 = vmatprep.subr.mxu0 0.0
      %410 = vmatpush1.msra.mxu0 %v281
      %411 = vmatprep.subr.mxu0 0.0
      %412 = vmatpush1.msra.mxu0 %v282
      %413 = vmatprep.subr.mxu0 0.0
      %414 = vmatpush1.msra.mxu0 %v283
      %415 = vmatprep.subr.mxu0 0.0
      %416 = vmatpush1.msra.mxu0 %v284
      %417 = vmatprep.subr.mxu0 0.0
      %418 = vmatpush1.msra.mxu0 %v285
      %419 = vmatprep.subr.mxu0 0.0
      %420 = vmatpush1.msra.mxu0 0.0
      %421 = vmatprep.subr.mxu0 0.0
      %422 = vmatpush1.msra.mxu0 0.0
      %423 = vmatprep.subr.mxu0 0.0
      %424 = vmatpush1.msra.mxu0 0.0
      %425 = vmatprep.subr.mxu0 0.0
      %426 = vmatpush1.msra.mxu0 0.0
      %427 = vmatprep.subr.mxu0 0.0
      %428 = vmatpush1.msra.mxu0 0.0
      %429 = vmatprep.subr.mxu0 0.0
      %430 = vmatpush1.msra.mxu0 0.0
      %431 = vmatprep.subr.mxu0 0.0
      %432 = vmatpush1.msra.mxu0 0.0
      %433 = vmatprep.subr.mxu0 0.0
      %434 = vmatpush1.msra.mxu0 0.0
      %435 = vmatprep.subr.mxu0 0.0
      %436 = vmatpush1.msra.mxu0 0.0
      %437 = vmatprep.subr.mxu0 0.0
      %438 = vmatpush1.msra.mxu0 0.0
      %439 = vmatprep.subr.mxu0 0.0
      %440 = vmatpush1.msra.mxu0 0.0
      %441 = vmatprep.subr.mxu0 0.0
      %442 = vmatpush1.msra.mxu0 0.0
      %443 = vmatprep.subr.mxu0 0.0
      %444 = vmatpush1.msra.mxu0 0.0
      %445 = vmatprep.subr.mxu0 0.0
      %446 = vmatpush1.msra.mxu0 0.0
      %447 = vmatprep.mubr.f32.mxu0 %v288
      %448 = vmatmul.mubr.f32.gmra.mrb[0].mxu0 %v204
      %v449 = vpop.f32.mrb[0].mxu0
      %v450 = vadd.f32 0.0, %v449
      %v451 = vpop.f32.mrb[0].mxu0
      %452 = vmatprep.mubr.f32.mxu0 %v291
      %453 = vmatmul.mubr.f32.gmra.mrb[0].mxu0 %v206
      %v454 = vpop.f32.mrb[0].mxu0
      %v455 = vadd.f32 0.0, %v454
      %v456 = vpop.f32.mrb[0].mxu0
      %457 = vmatprep.mubr.f32.mxu0 %v294
      %458 = vmatmul.mubr.f32.gmra.mrb[0].mxu0 %v208
      %v459 = vpop.f32.mrb[0].mxu0
      %v460 = vadd.f32 0.0, %v459
      %v461 = vpop.f32.mrb[0].mxu0
      %462 = vmatprep.mubr.f32.mxu0 %v297
      %463 = vmatmul.mubr.f32.gmra.mrb[0].mxu0 %v210
      %v464 = vpop.f32.mrb[0].mxu0
      %v465 = vadd.f32 0.0, %v464
      %v466 = vpop.f32.mrb[0].mxu0
      %467 = vmatprep.mubr.f32.mxu0 %v300
      %468 = vmatmul.mubr.f32.gmra.mrb[0].mxu0 %v212
      %v469 = vpop.f32.mrb[0].mxu0
      %v470 = vadd.f32 0.0, %v469
      %v471 = vpop.f32.mrb[0].mxu0
      %472 = vmatprep.mubr.f32.mxu0 %v303
      %473 = vmatmul.mubr.f32.gmra.mrb[0].mxu0 %v214
      %v474 = vpop.f32.mrb[0].mxu0
      %v475 = vadd.f32 0.0, %v474
      %v476 = vpop.f32.mrb[0].mxu0
      %477 = vmatprep.mubr.f32.mxu0 %v306
      %478 = vmatmul.mubr.f32.gmra.mrb[0].mxu0 %v216
      %v479 = vpop.f32.mrb[0].mxu0
      %v480 = vadd.f32 0.0, %v479
      %v481 = vpop.f32.mrb[0].mxu0
      %482 = vmatprep.mubr.f32.mxu0 %v309
      %483 = vmatmul.mubr.f32.gmra.mrb[0].mxu0 %v218
      %v484 = vpop.f32.mrb[0].mxu0
      %v485 = vadd.f32 0.0, %v484
      %v486 = vpop.f32.mrb[0].mxu0
      %487 = vmatprep.mubr.f32.mxu0 %v312
      %488 = vmatmul.mubr.f32.gmra.mrb[0].mxu0 %v220
      %v489 = vpop.f32.mrb[0].mxu0
      %v490 = vadd.f32 0.0, %v489
      %v491 = vpop.f32.mrb[0].mxu0
      %492 = vmatprep.mubr.f32.mxu0 %v315
      %493 = vmatmul.mubr.f32.gmra.mrb[0].mxu0 %v222
      %v494 = vpop.f32.mrb[0].mxu0
      %v495 = vadd.f32 0.0, %v494
      %v496 = vpop.f32.mrb[0].mxu0
      %497 = vmatprep.mubr.f32.mxu0 %v318
      %498 = vmatmul.mubr.f32.gmra.mrb[0].mxu0 %v224
      %v499 = vpop.f32.mrb[0].mxu0
      %v500 = vadd.f32 0.0, %v499
      %v501 = vpop.f32.mrb[0].mxu0
      %502 = vmatprep.mubr.f32.mxu0 %v321
      %503 = vmatmul.mubr.f32.gmra.mrb[0].mxu0 %v226
      %v504 = vpop.f32.mrb[0].mxu0
      %v505 = vadd.f32 0.0, %v504
      %v506 = vpop.f32.mrb[0].mxu0
      %507 = vmatprep.mubr.f32.mxu0 %v324
      %508 = vmatmul.mubr.f32.gmra.mrb[0].mxu0 %v228
      %v509 = vpop.f32.mrb[0].mxu0
      %v510 = vadd.f32 0.0, %v509
      %v511 = vpop.f32.mrb[0].mxu0
      %512 = vmatprep.mubr.f32.mxu0 %v327
      %513 = vmatmul.mubr.f32.gmra.mrb[0].mxu0 %v230
      %v514 = vpop.f32.mrb[0].mxu0
      %v515 = vadd.f32 0.0, %v514
      %v516 = vpop.f32.mrb[0].mxu0
      %517 = vmatprep.mubr.f32.mxu0 %v330
      %518 = vmatmul.mubr.f32.gmra.mrb[0].mxu0 %v232
      %v519 = vpop.f32.mrb[0].mxu0
      %v520 = vadd.f32 0.0, %v519
      %v521 = vpop.f32.mrb[0].mxu0
      %522 = vmatprep.mubr.f32.mxu0 %v333
      %523 = vmatmul.mubr.f32.gmra.mrb[0].mxu0 %v234
      %v524 = vpop.f32.mrb[0].mxu0
      %v525 = vadd.f32 0.0, %v524
      %v526 = vpop.f32.mrb[0].mxu0
      %527 = vmatprep.mubr.f32.mxu0 %v336
      %528 = vmatmul.mubr.f32.gmra.mrb[0].mxu0 %v236
      %v529 = vpop.f32.mrb[0].mxu0
      %v530 = vadd.f32 0.0, %v529
      %v531 = vpop.f32.mrb[0].mxu0
      %532 = vmatprep.mubr.f32.mxu0 %v339
      %533 = vmatmul.mubr.f32.gmra.mrb[0].mxu0 %v238
      %v534 = vpop.f32.mrb[0].mxu0
      %v535 = vadd.f32 0.0, %v534
      %v536 = vpop.f32.mrb[0].mxu0
      %537 = vmatprep.mubr.f32.mxu0 %v342
      %538 = vmatmul.mubr.f32.gmra.mrb[0].mxu0 %v240
      %v539 = vpop.f32.mrb[0].mxu0
      %v540 = vadd.f32 0.0, %v539
      %v541 = vpop.f32.mrb[0].mxu0
      %542 = vmatprep.mubr.f32.mxu0 %v345
      %543 = vmatmul.mubr.f32.gmra.mrb[0].mxu0 %v242
      %v544 = vpop.f32.mrb[0].mxu0
      %v545 = vadd.f32 0.0, %v544
      %v546 = vpop.f32.mrb[0].mxu0
      %547 = vmatprep.mubr.f32.mxu0 %v348
      %548 = vmatmul.mubr.f32.gmra.mrb[0].mxu0 %v244
      %v549 = vpop.f32.mrb[0].mxu0
      %v550 = vadd.f32 0.0, %v549
      %v551 = vpop.f32.mrb[0].mxu0
      %552 = vmatprep.mubr.f32.mxu0 %v351
      %553 = vmatmul.mubr.f32.gmra.mrb[0].mxu0 %v246
      %v554 = vpop.f32.mrb[0].mxu0
      %v555 = vadd.f32 0.0, %v554
      %v556 = vpop.f32.mrb[0].mxu0
      %557 = vmatprep.mubr.f32.mxu0 %v354
      %558 = vmatmul.mubr.f32.gmra.mrb[0].mxu0 %v248
      %v559 = vpop.f32.mrb[0].mxu0
      %v560 = vadd.f32 0.0, %v559
      %v561 = vpop.f32.mrb[0].mxu0
      %562 = vmatprep.mubr.f32.mxu0 %v357
      %563 = vmatmul.mubr.f32.gmra.mrb[0].mxu0 %v250
      %v564 = vpop.f32.mrb[0].mxu0
      %v565 = vadd.f32 0.0, %v564
      %v566 = vpop.f32.mrb[0].mxu0
      %567 = vmatprep.mubr.f32.mxu0 %v360
      %568 = vmatmul.mubr.f32.gmra.mrb[0].mxu0 %v252
      %v569 = vpop.f32.mrb[0].mxu0
      %v570 = vadd.f32 0.0, %v569
      %v571 = vpop.f32.mrb[0].mxu0
      %572 = vmatprep.mubr.f32.mxu0 %v363
      %573 = vmatmul.mubr.f32.gmra.mrb[0].mxu0 %v254
      %v574 = vpop.f32.mrb[0].mxu0
      %v575 = vadd.f32 0.0, %v574
      %v576 = vpop.f32.mrb[0].mxu0
      %577 = vmatprep.mubr.f32.mxu0 %v366
      %578 = vmatmul.mubr.f32.gmra.mrb[0].mxu0 %v256
      %v579 = vpop.f32.mrb[0].mxu0
      %v580 = vadd.f32 0.0, %v579
      %v581 = vpop.f32.mrb[0].mxu0
      %582 = vmatprep.mubr.f32.mxu0 %v369
      %583 = vmatmul.mubr.f32.gmra.mrb[0].mxu0 %v258
      %v584 = vpop.f32.mrb[0].mxu0
      %v585 = vadd.f32 0.0, %v584
      %v586 = vpop.f32.mrb[0].mxu0
      %587 = vmatprep.mubr.f32.mxu0 %v372
      %588 = vmatmul.mubr.f32.gmra.mrb[0].mxu0 %v260
      %v589 = vpop.f32.mrb[0].mxu0
      %v590 = vadd.f32 0.0, %v589
      %v591 = vpop.f32.mrb[0].mxu0
      %592 = vmatprep.mubr.f32.mxu0 %v375
      %593 = vmatmul.mubr.f32.gmra.mrb[0].mxu0 %v262
      %v594 = vpop.f32.mrb[0].mxu0
      %v595 = vadd.f32 0.0, %v594
      %v596 = vpop.f32.mrb[0].mxu0
      %597 = vmatprep.mubr.f32.mxu0 %v378
      %598 = vmatmul.mubr.f32.gmra.mrb[0].mxu0 %v264
      %v599 = vpop.f32.mrb[0].mxu0
      %v600 = vadd.f32 0.0, %v599
      %v601 = vpop.f32.mrb[0].mxu0
      %602 = vmatprep.mubr.f32.mxu0 %v381
      %603 = vmatmul.mubr.f32.gmra.mrb[0].mxu0 %v266
      %v604 = vpop.f32.mrb[0].mxu0
      %v605 = vadd.f32 0.0, %v604
      %v606 = vpop.f32.mrb[0].mxu0
      %607 = vdwg.mxu0
      %v608 = vld [vmem:[%s2] sm:$0x1]
      %v610 = vlaneseq
      %v611 = vshrl.u32 %v610, 7
      %v612 = vsub.s32 0, %v611
      %v613 = vrot.slane %v608, %v612
      %v615 = vmul.f32 %v450, %v613
      %v616 = vmul.f32 %v455, %v613
      %v617 = vmul.f32 %v460, %v613
      %v618 = vmul.f32 %v465, %v613
      %v619 = vmul.f32 %v470, %v613
      %v620 = vmul.f32 %v475, %v613
      %v621 = vmul.f32 %v480, %v613
      %v622 = vmul.f32 %v485, %v613
      %v623 = vmul.f32 %v490, %v613
      %v624 = vmul.f32 %v495, %v613
      %v625 = vmul.f32 %v500, %v613
      %v626 = vmul.f32 %v505, %v613
      %v627 = vmul.f32 %v510, %v613
      %v628 = vmul.f32 %v515, %v613
      %v629 = vmul.f32 %v520, %v613
      %v630 = vmul.f32 %v525, %v613
      %v631 = vmul.f32 %v530, %v613
      %v632 = vmul.f32 %v535, %v613
      %v633 = vmul.f32 %v540, %v613
      %v634 = vmul.f32 %v545, %v613
      %v635 = vmul.f32 %v550, %v613
      %v636 = vmul.f32 %v555, %v613
      %v637 = vmul.f32 %v560, %v613
      %v638 = vmul.f32 %v565, %v613
      %v639 = vmul.f32 %v570, %v613
      %v640 = vmul.f32 %v575, %v613
      %v641 = vmul.f32 %v580, %v613
      %v642 = vmul.f32 %v585, %v613
      %v643 = vmul.f32 %v590, %v613
      %v644 = vmul.f32 %v595, %v613
      %v645 = vmul.f32 %v600, %v613
      %v646 = vmul.f32 %v605, %v613
      %v647 = vld [vmem:[%s3] sm:$0x1]
      %v649 = vlaneseq
      %v650 = vshrl.u32 %v649, 7
      %v651 = vsub.s32 0, %v650
      %v652 = vrot.slane %v647, %v651
      %v654 = vadd.f32 %v615, %v652
      %v655 = vadd.f32 %v616, %v652
      %v656 = vadd.f32 %v617, %v652
      %v657 = vadd.f32 %v618, %v652
      %v658 = vadd.f32 %v619, %v652
      %v659 = vadd.f32 %v620, %v652
      %v660 = vadd.f32 %v621, %v652
      %v661 = vadd.f32 %v622, %v652
      %v662 = vadd.f32 %v623, %v652
      %v663 = vadd.f32 %v624, %v652
      %v664 = vadd.f32 %v625, %v652
      %v665 = vadd.f32 %v626, %v652
      %v666 = vadd.f32 %v627, %v652
      %v667 = vadd.f32 %v628, %v652
      %v668 = vadd.f32 %v629, %v652
      %v669 = vadd.f32 %v630, %v652
      %v670 = vadd.f32 %v631, %v652
      %v671 = vadd.f32 %v632, %v652
      %v672 = vadd.f32 %v633, %v652
      %v673 = vadd.f32 %v634, %v652
      %v674 = vadd.f32 %v635, %v652
      %v675 = vadd.f32 %v636, %v652
      %v676 = vadd.f32 %v637, %v652
      %v677 = vadd.f32 %v638, %v652
      %v678 = vadd.f32 %v639, %v652
      %v679 = vadd.f32 %v640, %v652
      %v680 = vadd.f32 %v641, %v652
      %v681 = vadd.f32 %v642, %v652
      %v682 = vadd.f32 %v643, %v652
      %v683 = vadd.f32 %v644, %v652
      %v684 = vadd.f32 %v645, %v652
      %v685 = vadd.f32 %v646, %v652
      %v686 = vmax.f32 %v654, 0.0
      %v687 = vmax.f32 %v655, 0.0
      %v688 = vmax.f32 %v656, 0.0
      %v689 = vmax.f32 %v657, 0.0
      %v690 = vmax.f32 %v658, 0.0
      %v691 = vmax.f32 %v659, 0.0
      %v692 = vmax.f32 %v660, 0.0
      %v693 = vmax.f32 %v661, 0.0
      %v694 = vmax.f32 %v662, 0.0
      %v695 = vmax.f32 %v663, 0.0
      %v696 = vmax.f32 %v664, 0.0
      %v697 = vmax.f32 %v665, 0.0
      %v698 = vmax.f32 %v666, 0.0
      %v699 = vmax.f32 %v667, 0.0
      %v700 = vmax.f32 %v668, 0.0
      %v701 = vmax.f32 %v669, 0.0
      %v702 = vmax.f32 %v670, 0.0
      %v703 = vmax.f32 %v671, 0.0
      %v704 = vmax.f32 %v672, 0.0
      %v705 = vmax.f32 %v673, 0.0
      %v706 = vmax.f32 %v674, 0.0
      %v707 = vmax.f32 %v675, 0.0
      %v708 = vmax.f32 %v676, 0.0
      %v709 = vmax.f32 %v677, 0.0
      %v710 = vmax.f32 %v678, 0.0
      %v711 = vmax.f32 %v679, 0.0
      %v712 = vmax.f32 %v680, 0.0
      %v713 = vmax.f32 %v681, 0.0
      %v714 = vmax.f32 %v682, 0.0
      %v715 = vmax.f32 %v683, 0.0
      %v716 = vmax.f32 %v684, 0.0
      %v717 = vmax.f32 %v685, 0.0
      %vm718 = vcmask 64512
      %719 = vst.msk [vmem:[%s202] sm:$0xff] %vm718, %v686
      %720 = vst.msk [vmem:[%s202 + $0x8] sm:$0xff] %vm718, %v687
      %721 = vst.msk [vmem:[%s202 + $0x10] sm:$0xff] %vm718, %v688
      %722 = vst.msk [vmem:[%s202 + $0x18] sm:$0xff] %vm718, %v689
      %723 = vst.msk [vmem:[%s202 + $0x20] sm:$0xff] %vm718, %v690
      %724 = vst.msk [vmem:[%s202 + $0x28] sm:$0xff] %vm718, %v691
      %725 = vst.msk [vmem:[%s202 + $0x30] sm:$0xff] %vm718, %v692
      %726 = vst.msk [vmem:[%s202 + $0x38] sm:$0xff] %vm718, %v693
      %727 = vst.msk [vmem:[%s202 + $0x40] sm:$0xff] %vm718, %v694
      %728 = vst.msk [vmem:[%s202 + $0x48] sm:$0xff] %vm718, %v695
      %729 = vst.msk [vmem:[%s202 + $0x50] sm:$0xff] %vm718, %v696
      %730 = vst.msk [vmem:[%s202 + $0x58] sm:$0xff] %vm718, %v697
      %731 = vst.msk [vmem:[%s202 + $0x60] sm:$0xff] %vm718, %v698
      %732 = vst.msk [vmem:[%s202 + $0x68] sm:$0xff] %vm718, %v699
      %733 = vst.msk [vmem:[%s202 + $0x70] sm:$0xff] %vm718, %v700
      %734 = vst.msk [vmem:[%s202 + $0x78] sm:$0xff] %vm718, %v701
      %735 = vst.msk [vmem:[%s202 + $0x80] sm:$0xff] %vm718, %v702
      %736 = vst.msk [vmem:[%s202 + $0x88] sm:$0xff] %vm718, %v703
      %737 = vst.msk [vmem:[%s202 + $0x90] sm:$0xff] %vm718, %v704
      %738 = vst.msk [vmem:[%s202 + $0x98] sm:$0xff] %vm718, %v705
      %739 = vst.msk [vmem:[%s202 + $0xa0] sm:$0xff] %vm718, %v706
      %740 = vst.msk [vmem:[%s202 + $0xa8] sm:$0xff] %vm718, %v707
      %741 = vst.msk [vmem:[%s202 + $0xb0] sm:$0xff] %vm718, %v708
      %742 = vst.msk [vmem:[%s202 + $0xb8] sm:$0xff] %vm718, %v709
      %743 = vst.msk [vmem:[%s202 + $0xc0] sm:$0xff] %vm718, %v710
      %744 = vst.msk [vmem:[%s202 + $0xc8] sm:$0xff] %vm718, %v711
      %745 = vst.msk [vmem:[%s202 + $0xd0] sm:$0xff] %vm718, %v712
      %746 = vst.msk [vmem:[%s202 + $0xd8] sm:$0xff] %vm718, %v713
      %747 = vst.msk [vmem:[%s202 + $0xe0] sm:$0xff] %vm718, %v714
      %748 = vst.msk [vmem:[%s202 + $0xe8] sm:$0xff] %vm718, %v715
      %749 = vst.msk [vmem:[%s202 + $0xf0] sm:$0xff] %vm718, %v716
      %750 = vst.msk [vmem:[%s202 + $0xf8] sm:$0xff] %vm718, %v717
      %s751 = smul.u32 32, %s15
      %p752 = scmp.lt.s32.totalorder %s751, 63
      %s753 = scalar_select %p752, %s751, 63
      %s754 = smul.addr %s753, 8
      %s755 = scalar_lea.vmem %s4, %s754
      // Predicated region
      $region37: #{statistic_attention_forward.7} parent=35 // pred_check
        %p756 = pneg %p122
      $region38: #{statistic_attention_forward.7} parent=35 // pred_check_branch
        %758 = sbr.rel (%p756) target = $region40
      $region39: #{statistic_attention_forward.7} parent=35 // pred_region
        %s759 = smul.u32 32, %s15
      $region40: #{statistic_attention_forward.7} parent=35 // pred_fallthru
        _
    $region36: #{statistic_attention_forward.7} parent=5 // pred_fallthru
      _
    %p760 = scmp.le.s32.totalorder 2, %s10
    // Predicated region
    $region41: #{statistic_attention_forward.7} parent=5 // pred_check
      %p761 = pneg %p760
    $region42: #{statistic_attention_forward.7} parent=5 // pred_check_branch
      %763 = sbr.rel (%p761) target = $region44
    $region43: #{statistic_attention_forward.7} parent=5 // pred_region
      %s764 = ssub.s32 %s10, 2
      // Predicated region
      $region45: #{statistic_attention_forward.7} parent=43 // pred_check
        %p765 = pneg %p128
      $region46: #{statistic_attention_forward.7} parent=43 // pred_check_branch
        %767 = sbr.rel (%p765) target = $region48
      $region47: #{statistic_attention_forward.7} parent=43 // pred_region
        %s768 = smul.u32 32, %s16
        %p769 = scmp.lt.s32.totalorder %s768, 63
        %s770 = scalar_select %p769, %s768, 63
        %s771 = smul.addr %s770, 8
        %s772 = scalar_lea.vmem %s4, %s771
      $region48: #{statistic_attention_forward.7} parent=43 // pred_fallthru
        _
    $region44: #{statistic_attention_forward.7} parent=5 // pred_fallthru
      _
  $region6: #{statistic_attention_forward.7} parent=0 // loop_footer
    %s14 = sadd.s32 1, %s10
  $region7: #{statistic_attention_forward.7} parent=0 // loop_footer_branch
    %9 = sbr.rel target = $region3
  $region8: #{statistic_attention_forward.7} parent=0 // loop_exit
    _

</llo_original>
